<compile_context>
chip_gen: v6e
topology: v6e:2x2x1
jax: 0.10.0
libtpu: 0.0.40
codegen_flags: <defaults>
</compile_context>

<pallas_src>
import functools

import jax
import jax.numpy as jnp
from jax.experimental import pallas as pl
from jax.experimental.pallas import tpu as pltpu


# --------------------------------------------------------------------------- kernels

def _poison_mix_kernel(idx_ref, img_ref, delta_ref, out_ref):
    # mixed = clamp(img + clamp(poison_delta[index], -1, 1), 0, 1)
    # The gather poison_delta[index[i]] happens in the BlockSpec index_map (scalar
    # prefetch), so the gathered copy rides the input DMA instead of hitting HBM.
    del idx_ref
    d = jnp.clip(delta_ref[...], -1.0, 1.0)
    out_ref[...] = jnp.clip(img_ref[...] + d, 0.0, 1.0)


def _make_backbone_kernel(H, W, C, c_conv, tb):
    """Fused conv3x3 + ReLU + global-avg-pool + MLP head + L2 norm, per batch tile."""
    HW = H * W

    def kernel(x_ref, wc_ref, bc_ref, w1_ref, b1_ref, w2_ref, b2_ref, o_ref):
        # x_ref: (tb, H+2, W+2, C) zero-padded NHWC tile (SAME-conv halo included).
        # 3x3 conv as 9 shifted matmuls accumulated in f32 (bf16 MXU inputs).
        acc = jnp.zeros((tb * HW, c_conv), jnp.float32)
        k = 0
        for dy in range(3):
            for dx in range(3):
                xs = x_ref[:, dy:dy + H, dx:dx + W, :]             # (tb, H, W, C)
                xs = xs.reshape(tb * HW, C).astype(jnp.bfloat16)
                acc = acc + jnp.dot(xs, wc_ref[k],
                                    preferred_element_type=jnp.float32)
                k += 1
        conv = jnp.maximum(acc + bc_ref[...], 0.0)                 # (tb*HW, c_conv)

        # Global average pool over HW (stays in VMEM -- no conv_out HBM round trip).
        pooled = jnp.mean(conv.reshape(tb, HW, c_conv), axis=1)    # (tb, c_conv)

        # SimCLR projection head: Linear -> ReLU -> Linear -> L2 normalize.
        h = jnp.dot(pooled.astype(jnp.bfloat16), w1_ref[...],
                    preferred_element_type=jnp.float32) + b1_ref[...]
        h = jnp.maximum(h, 0.0)
        z = jnp.dot(h.astype(jnp.bfloat16), w2_ref[...],
                    preferred_element_type=jnp.float32) + b2_ref[...]
        z = z * jax.lax.rsqrt(jnp.sum(z * z, axis=-1, keepdims=True) + 1e-12)
        o_ref[...] = z[:, None, :].astype(o_ref.dtype)             # (tb, 1, feat)

    return kernel


# ------------------------------------------------------------------------------ glue

def init_params(key, c_in=3, c_conv=64, hidden=128, feat_dim=128):
    k1, k2, k3 = jax.random.split(key, 3)
    return {
        # conv_w laid out as (9, C_in, C_out) so each (dy, dx) tap is one MXU matmul.
        "conv_w": (jax.random.normal(k1, (9, c_in, c_conv), jnp.float32) * 0.05
                   ).astype(jnp.bfloat16),
        "conv_b": jnp.zeros((1, c_conv), jnp.float32),
        "w1": (jax.random.normal(k2, (c_conv, hidden), jnp.float32) * 0.05
               ).astype(jnp.bfloat16),
        "b1": jnp.zeros((1, hidden), jnp.float32),
        "w2": (jax.random.normal(k3, (hidden, feat_dim), jnp.float32) * 0.05
               ).astype(jnp.bfloat16),
        "b2": jnp.zeros((1, feat_dim), jnp.float32),
    }


def attack_model_forward(params, img, index, poison_delta, *, samples_per_block=1):
    """img: (B, C, H, W) f32, index: (B,) int32, poison_delta: (P, C, H, W) f32."""
    bsz, c, h, w = img.shape
    n_poison = poison_delta.shape[0]
    c_conv = params["conv_w"].shape[2]
    hidden = params["w1"].shape[1]
    feat_dim = params["w2"].shape[1]

    tb = samples_per_block
    assert bsz % tb == 0, "samples_per_block must divide batch size"

    # Single NCHW -> NHWC transpose up front; the rest of the pipeline is NHWC.
    img_nhwc = jnp.transpose(img, (0, 2, 3, 1))                    # (B, H, W, C)
    poison_nhwc = jnp.transpose(poison_delta, (0, 2, 3, 1))        # (P, H, W, C)

    # PyTorch indexing would raise on out-of-range; clamp so the scalar-prefetch
    # block index can never DMA out of bounds.
    index = jnp.clip(index.astype(jnp.int32), 0, n_poison - 1)

    # --- poison mixing: gather fused via scalar prefetch -------------------------
    mix_spec = pltpu.PrefetchScalarGridSpec(
        num_scalar_prefetch=1,
        grid=(bsz,),
        in_specs=[
            pl.BlockSpec((1, h, w, c), lambda i, idx: (i, 0, 0, 0)),
            pl.BlockSpec((1, h, w, c), lambda i, idx: (idx[i], 0, 0, 0)),
        ],
        out_specs=pl.BlockSpec((1, h, w, c), lambda i, idx: (i, 0, 0, 0)),
    )
    mixed = pl.pallas_call(
        _poison_mix_kernel,
        grid_spec=mix_spec,
        out_shape=jax.ShapeDtypeStruct((bsz, h, w, c), jnp.float32),
        compiler_params=pltpu.CompilerParams(
            dimension_semantics=("arbitrary",)),
    )(index, img_nhwc, poison_nhwc)

    # transform() is the identity (see TODO at top) => aug1 == aug2, so the backbone
    # runs once over B samples instead of 2B and features are duplicated at the end.

    # Cheap zero halo for the SAME 3x3 conv; the 3x3 patch gather itself happens
    # in-kernel from the padded VMEM tile (no 9x im2col expansion in HBM).
    xpad = jnp.pad(mixed, ((0, 0), (1, 1), (1, 1), (0, 0)))        # (B, H+2, W+2, C)

    backbone_kernel = _make_backbone_kernel(h, w, c, c_conv, tb)
    feats = pl.pallas_call(
        backbone_kernel,
        grid=(bsz // tb,),
        in_specs=[
            pl.BlockSpec((tb, h + 2, w + 2, c), lambda i: (i, 0, 0, 0)),
            pl.BlockSpec((9, c, c_conv), lambda i: (0, 0, 0)),   # grid-invariant weights
            pl.BlockSpec((1, c_conv), lambda i: (0, 0)),         # stay resident in VMEM
            pl.BlockSpec((c_conv, hidden), lambda i: (0, 0)),
            pl.BlockSpec((1, hidden), lambda i: (0, 0)),
            pl.BlockSpec((hidden, feat_dim), lambda i: (0, 0)),
            pl.BlockSpec((1, feat_dim), lambda i: (0, 0)),
        ],
        out_specs=pl.BlockSpec((tb, 1, feat_dim), lambda i: (i, 0, 0)),
        out_shape=jax.ShapeDtypeStruct((bsz, 1, feat_dim), jnp.float32),
        compiler_params=pltpu.CompilerParams(
            dimension_semantics=("parallel",),          # shard batch tiles across TCs
            vmem_limit_bytes=32 * 1024 * 1024),         # safe on v5e/v6e/v7x budgets
    )(xpad, params["conv_w"], params["conv_b"],
      params["w1"], params["b1"], params["w2"], params["b2"])

    # --- SimCLR feature packing: (B, 2, D); both views identical under identity aug
    f = feats.reshape(bsz, feat_dim)
    features = jnp.concatenate([f[:, None, :], f[:, None, :]], axis=1)
    return {"features": features}


if __name__ == "__main__":
    key = jax.random.PRNGKey(0)
    k_img, k_delta, k_param = jax.random.split(key, 3)

    bsz, c, h, w = 2, 3, 16, 16
    num_poison = 8
    feat_dim = 128

    img = jax.random.uniform(k_img, (bsz, c, h, w), jnp.float32)
    poison_delta = jax.random.uniform(
        k_delta, (num_poison, c, h, w), jnp.float32, minval=-2.0, maxval=2.0)
    index = jnp.array([1, 5], dtype=jnp.int32)

    params = init_params(k_param, c_in=c, c_conv=64, hidden=128, feat_dim=feat_dim)

    fwd = jax.jit(functools.partial(attack_model_forward, samples_per_block=1))
    out = fwd(params, img, index, poison_delta)
    jax.block_until_ready(out["features"])

    assert out["features"].shape == (bsz, 2, feat_dim)
    norms = jnp.linalg.norm(out["features"], axis=-1)
    assert bool(jnp.all(jnp.abs(norms - 1.0) < 1e-2))   # L2-normalized features
    print("KERNEL_OK")
</pallas_src>

<mosaic_0001>
module attributes {stable_mosaic.version = 11 : i64} {
  func.func @_poison_mix_kernel(%arg0: i32, %arg1: memref<2xi32, #tpu.memory_space<smem>>, %arg2: memref<1x16x16x3xf32, #tpu.memory_space<vmem>>, %arg3: memref<1x16x16x3xf32, #tpu.memory_space<vmem>>, %arg4: memref<1x16x16x3xf32, #tpu.memory_space<vmem>>) attributes {dimension_semantics = [#tpu.dimension_semantics<arbitrary>], iteration_bounds = array<i64: 2>, scalar_prefetch = 1 : i64, scratch_operands = 0 : i64, tpu.core_type = #tpu.core_type<tc>, window_params = [{transform_indices = @transform_0, window_bounds = array<i64: 1, 16, 16, 3>}, {transform_indices = @transform_1, window_bounds = array<i64: 1, 16, 16, 3>}, {transform_indices = @transform_2, window_bounds = array<i64: 1, 16, 16, 3>}]} {
    %c0 = arith.constant 0 : index
    %c0_0 = arith.constant 0 : index
    %c0_1 = arith.constant 0 : index
    %c0_2 = arith.constant 0 : index
    %0 = vector.load %arg3[%c0, %c0_0, %c0_1, %c0_2] : memref<1x16x16x3xf32, #tpu.memory_space<vmem>>, vector<1x16x16x3xf32>
    %cst = arith.constant -1.000000e+00 : f32
    %cst_3 = arith.constant 1.000000e+00 : f32
    %1 = vector.broadcast %cst : f32 to vector<1x16x16x3xf32>
    %2 = arith.maximumf %1, %0 : vector<1x16x16x3xf32>
    %3 = vector.broadcast %cst_3 : f32 to vector<1x16x16x3xf32>
    %4 = arith.minimumf %3, %2 : vector<1x16x16x3xf32>
    %c0_4 = arith.constant 0 : index
    %c0_5 = arith.constant 0 : index
    %c0_6 = arith.constant 0 : index
    %c0_7 = arith.constant 0 : index
    %5 = vector.load %arg2[%c0_4, %c0_5, %c0_6, %c0_7] : memref<1x16x16x3xf32, #tpu.memory_space<vmem>>, vector<1x16x16x3xf32>
    %6 = arith.addf %5, %4 : vector<1x16x16x3xf32>
    %cst_8 = arith.constant 0.000000e+00 : f32
    %cst_9 = arith.constant 1.000000e+00 : f32
    %7 = vector.broadcast %cst_8 : f32 to vector<1x16x16x3xf32>
    %8 = arith.maximumf %7, %6 : vector<1x16x16x3xf32>
    %9 = vector.broadcast %cst_9 : f32 to vector<1x16x16x3xf32>
    %10 = arith.minimumf %9, %8 : vector<1x16x16x3xf32>
    %c0_10 = arith.constant 0 : index
    %c0_11 = arith.constant 0 : index
    %c0_12 = arith.constant 0 : index
    %c0_13 = arith.constant 0 : index
    %11 = vector.load %arg4[%c0_10, %c0_11, %c0_12, %c0_13] : memref<1x16x16x3xf32, #tpu.memory_space<vmem>>, vector<1x16x16x3xf32>
    tpu.vector_store %arg4[%c0_10, %c0_11, %c0_12, %c0_13], %10 {strides = array<i32>} : memref<1x16x16x3xf32, #tpu.memory_space<vmem>>, vector<1x16x16x3xf32>,
    return
  }
  func.func @transform_0(%arg0: i32, %arg1: memref<2xi32, #tpu.memory_space<smem>>) -> (i32, i32, i32, i32) {
    %c0_i32 = arith.constant 0 : i32
    %c0_i32_0 = arith.constant 0 : i32
    %c0_i32_1 = arith.constant 0 : i32
    %c0_i32_2 = arith.constant 0 : i32
    return %arg0, %c0_i32, %c0_i32_0, %c0_i32_1 : i32, i32, i32, i32
  }
  func.func @transform_1(%arg0: i32, %arg1: memref<2xi32, #tpu.memory_space<smem>>) -> (i32, i32, i32, i32) {
    %0 = arith.index_cast %arg0 : i32 to index
    %1 = memref.load %arg1[%0] : memref<2xi32, #tpu.memory_space<smem>>
    %c0_i32 = arith.constant 0 : i32
    %c0_i32_0 = arith.constant 0 : i32
    %c0_i32_1 = arith.constant 0 : i32
    %c0_i32_2 = arith.constant 0 : i32
    return %1, %c0_i32, %c0_i32_0, %c0_i32_1 : i32, i32, i32, i32
  }
  func.func @transform_2(%arg0: i32, %arg1: memref<2xi32, #tpu.memory_space<smem>>) -> (i32, i32, i32, i32) {
    %c0_i32 = arith.constant 0 : i32
    %c0_i32_0 = arith.constant 0 : i32
    %c0_i32_1 = arith.constant 0 : i32
    %c0_i32_2 = arith.constant 0 : i32
    return %arg0, %c0_i32, %c0_i32_0, %c0_i32_1 : i32, i32, i32, i32
  }
}

module attributes {stable_mosaic.version = 11 : i64} {
  func.func @kernel(%arg0: i32, %arg1: memref<1x18x18x3xf32, #tpu.memory_space<vmem>>, %arg2: memref<9x3x64xbf16, #tpu.memory_space<vmem>>, %arg3: memref<1x64xf32, #tpu.memory_space<vmem>>, %arg4: memref<64x128xbf16, #tpu.memory_space<vmem>>, %arg5: memref<1x128xf32, #tpu.memory_space<vmem>>, %arg6: memref<128x128xbf16, #tpu.memory_space<vmem>>, %arg7: memref<1x128xf32, #tpu.memory_space<vmem>>, %arg8: memref<1x1x128xf32, #tpu.memory_space<vmem>>) attributes {dimension_semantics = [#tpu.dimension_semantics<parallel>], iteration_bounds = array<i64: 2>, scalar_prefetch = 0 : i64, scratch_operands = 0 : i64, tpu.core_type = #tpu.core_type<tc>, window_params = [{transform_indices = @transform_0, window_bounds = array<i64: 1, 18, 18, 3>}, {pipeline_mode = #tpu.pipeline_mode<synchronous>, transform_indices = @transform_1, window_bounds = array<i64: 9, 3, 64>}, {pipeline_mode = #tpu.pipeline_mode<synchronous>, transform_indices = @transform_2, window_bounds = array<i64: 1, 64>}, {pipeline_mode = #tpu.pipeline_mode<synchronous>, transform_indices = @transform_3, window_bounds = array<i64: 64, 128>}, {pipeline_mode = #tpu.pipeline_mode<synchronous>, transform_indices = @transform_4, window_bounds = array<i64: 1, 128>}, {pipeline_mode = #tpu.pipeline_mode<synchronous>, transform_indices = @transform_5, window_bounds = array<i64: 128, 128>}, {pipeline_mode = #tpu.pipeline_mode<synchronous>, transform_indices = @transform_6, window_bounds = array<i64: 1, 128>}, {transform_indices = @transform_7, window_bounds = array<i64: 1, 1, 128>}]} {
    %cst = arith.constant 0.000000e+00 : f32
    %0 = vector.broadcast %cst : f32 to vector<256x64xf32>
    %c0 = arith.constant 0 : index
    %c0_0 = arith.constant 0 : index
    %c0_1 = arith.constant 0 : index
    %c0_2 = arith.constant 0 : index
    %1 = vector.load %arg1[%c0, %c0_0, %c0_1, %c0_2] : memref<1x18x18x3xf32, #tpu.memory_space<vmem>>, vector<1x16x16x3xf32>
    %2 = vector.shape_cast %1 : vector<1x16x16x3xf32> to vector<256x3xf32>
    %3 = arith.truncf %2 : vector<256x3xf32> to vector<256x3xbf16>
    %c0_3 = arith.constant 0 : index
    %c0_4 = arith.constant 0 : index
    %c0_5 = arith.constant 0 : index
    %4 = vector.load %arg2[%c0_3, %c0_4, %c0_5] : memref<9x3x64xbf16, #tpu.memory_space<vmem>>, vector<1x3x64xbf16>
    %5 = vector.shape_cast %4 : vector<1x3x64xbf16> to vector<3x64xbf16>
    %cst_6 = arith.constant dense<0.000000e+00> : vector<256x64xf32>
    %6 = tpu.matmul %3, %5, %cst_6 {dimension_numbers = #tpu.dot_dimension_numbers<[1], [0], [0], [1], [0, 0, 1, 1], [], []>} : vector<256x3xbf16>, vector<3x64xbf16>, vector<256x64xf32> -> vector<256x64xf32>
    %7 = arith.addf %0, %6 : vector<256x64xf32>
    %c0_7 = arith.constant 0 : index
    %c0_8 = arith.constant 0 : index
    %c1 = arith.constant 1 : index
    %c0_9 = arith.constant 0 : index
    %8 = vector.load %arg1[%c0_7, %c0_8, %c1, %c0_9] : memref<1x18x18x3xf32, #tpu.memory_space<vmem>>, vector<1x16x16x3xf32>
    %9 = vector.shape_cast %8 : vector<1x16x16x3xf32> to vector<256x3xf32>
    %10 = arith.truncf %9 : vector<256x3xf32> to vector<256x3xbf16>
    %c1_10 = arith.constant 1 : index
    %c0_11 = arith.constant 0 : index
    %c0_12 = arith.constant 0 : index
    %11 = vector.load %arg2[%c1_10, %c0_11, %c0_12] : memref<9x3x64xbf16, #tpu.memory_space<vmem>>, vector<1x3x64xbf16>
    %12 = vector.shape_cast %11 : vector<1x3x64xbf16> to vector<3x64xbf16>
    %cst_13 = arith.constant dense<0.000000e+00> : vector<256x64xf32>
    %13 = tpu.matmul %10, %12, %cst_13 {dimension_numbers = #tpu.dot_dimension_numbers<[1], [0], [0], [1], [0, 0, 1, 1], [], []>} : vector<256x3xbf16>, vector<3x64xbf16>, vector<256x64xf32> -> vector<256x64xf32>
    %14 = arith.addf %7, %13 : vector<256x64xf32>
    %c0_14 = arith.constant 0 : index
    %c0_15 = arith.constant 0 : index
    %c2 = arith.constant 2 : index
    %c0_16 = arith.constant 0 : index
    %15 = vector.load %arg1[%c0_14, %c0_15, %c2, %c0_16] : memref<1x18x18x3xf32, #tpu.memory_space<vmem>>, vector<1x16x16x3xf32>
    %16 = vector.shape_cast %15 : vector<1x16x16x3xf32> to vector<256x3xf32>
    %17 = arith.truncf %16 : vector<256x3xf32> to vector<256x3xbf16>
    %c2_17 = arith.constant 2 : index
    %c0_18 = arith.constant 0 : index
    %c0_19 = arith.constant 0 : index
    %18 = vector.load %arg2[%c2_17, %c0_18, %c0_19] : memref<9x3x64xbf16, #tpu.memory_space<vmem>>, vector<1x3x64xbf16>
    %19 = vector.shape_cast %18 : vector<1x3x64xbf16> to vector<3x64xbf16>
    %cst_20 = arith.constant dense<0.000000e+00> : vector<256x64xf32>
    %20 = tpu.matmul %17, %19, %cst_20 {dimension_numbers = #tpu.dot_dimension_numbers<[1], [0], [0], [1], [0, 0, 1, 1], [], []>} : vector<256x3xbf16>, vector<3x64xbf16>, vector<256x64xf32> -> vector<256x64xf32>
    %21 = arith.addf %14, %20 : vector<256x64xf32>
    %c0_21 = arith.constant 0 : index
    %c1_22 = arith.constant 1 : index
    %c0_23 = arith.constant 0 : index
    %c0_24 = arith.constant 0 : index
    %22 = vector.load %arg1[%c0_21, %c1_22, %c0_23, %c0_24] : memref<1x18x18x3xf32, #tpu.memory_space<vmem>>, vector<1x16x16x3xf32>
    %23 = vector.shape_cast %22 : vector<1x16x16x3xf32> to vector<256x3xf32>
    %24 = arith.truncf %23 : vector<256x3xf32> to vector<256x3xbf16>
    %c3 = arith.constant 3 : index
    %c0_25 = arith.constant 0 : index
    %c0_26 = arith.constant 0 : index
    %25 = vector.load %arg2[%c3, %c0_25, %c0_26] : memref<9x3x64xbf16, #tpu.memory_space<vmem>>, vector<1x3x64xbf16>
    %26 = vector.shape_cast %25 : vector<1x3x64xbf16> to vector<3x64xbf16>
    %cst_27 = arith.constant dense<0.000000e+00> : vector<256x64xf32>
    %27 = tpu.matmul %24, %26, %cst_27 {dimension_numbers = #tpu.dot_dimension_numbers<[1], [0], [0], [1], [0, 0, 1, 1], [], []>} : vector<256x3xbf16>, vector<3x64xbf16>, vector<256x64xf32> -> vector<256x64xf32>
    %28 = arith.addf %21, %27 : vector<256x64xf32>
    %c0_28 = arith.constant 0 : index
    %c1_29 = arith.constant 1 : index
    %c1_30 = arith.constant 1 : index
    %c0_31 = arith.constant 0 : index
    %29 = vector.load %arg1[%c0_28, %c1_29, %c1_30, %c0_31] : memref<1x18x18x3xf32, #tpu.memory_space<vmem>>, vector<1x16x16x3xf32>
    %30 = vector.shape_cast %29 : vector<1x16x16x3xf32> to vector<256x3xf32>
    %31 = arith.truncf %30 : vector<256x3xf32> to vector<256x3xbf16>
    %c4 = arith.constant 4 : index
    %c0_32 = arith.constant 0 : index
    %c0_33 = arith.constant 0 : index
    %32 = vector.load %arg2[%c4, %c0_32, %c0_33] : memref<9x3x64xbf16, #tpu.memory_space<vmem>>, vector<1x3x64xbf16>
    %33 = vector.shape_cast %32 : vector<1x3x64xbf16> to vector<3x64xbf16>
    %cst_34 = arith.constant dense<0.000000e+00> : vector<256x64xf32>
    %34 = tpu.matmul %31, %33, %cst_34 {dimension_numbers = #tpu.dot_dimension_numbers<[1], [0], [0], [1], [0, 0, 1, 1], [], []>} : vector<256x3xbf16>, vector<3x64xbf16>, vector<256x64xf32> -> vector<256x64xf32>
    %35 = arith.addf %28, %34 : vector<256x64xf32>
    %c0_35 = arith.constant 0 : index
    %c1_36 = arith.constant 1 : index
    %c2_37 = arith.constant 2 : index
    %c0_38 = arith.constant 0 : index
    %36 = vector.load %arg1[%c0_35, %c1_36, %c2_37, %c0_38] : memref<1x18x18x3xf32, #tpu.memory_space<vmem>>, vector<1x16x16x3xf32>
    %37 = vector.shape_cast %36 : vector<1x16x16x3xf32> to vector<256x3xf32>
    %38 = arith.truncf %37 : vector<256x3xf32> to vector<256x3xbf16>
    %c5 = arith.constant 5 : index
    %c0_39 = arith.constant 0 : index
    %c0_40 = arith.constant 0 : index
    %39 = vector.load %arg2[%c5, %c0_39, %c0_40] : memref<9x3x64xbf16, #tpu.memory_space<vmem>>, vector<1x3x64xbf16>
    %40 = vector.shape_cast %39 : vector<1x3x64xbf16> to vector<3x64xbf16>
    %cst_41 = arith.constant dense<0.000000e+00> : vector<256x64xf32>
    %41 = tpu.matmul %38, %40, %cst_41 {dimension_numbers = #tpu.dot_dimension_numbers<[1], [0], [0], [1], [0, 0, 1, 1], [], []>} : vector<256x3xbf16>, vector<3x64xbf16>, vector<256x64xf32> -> vector<256x64xf32>
    %42 = arith.addf %35, %41 : vector<256x64xf32>
    %c0_42 = arith.constant 0 : index
    %c2_43 = arith.constant 2 : index
    %c0_44 = arith.constant 0 : index
    %c0_45 = arith.constant 0 : index
    %43 = vector.load %arg1[%c0_42, %c2_43, %c0_44, %c0_45] : memref<1x18x18x3xf32, #tpu.memory_space<vmem>>, vector<1x16x16x3xf32>
    %44 = vector.shape_cast %43 : vector<1x16x16x3xf32> to vector<256x3xf32>
    %45 = arith.truncf %44 : vector<256x3xf32> to vector<256x3xbf16>
    %c6 = arith.constant 6 : index
    %c0_46 = arith.constant 0 : index
    %c0_47 = arith.constant 0 : index
    %46 = vector.load %arg2[%c6, %c0_46, %c0_47] : memref<9x3x64xbf16, #tpu.memory_space<vmem>>, vector<1x3x64xbf16>
    %47 = vector.shape_cast %46 : vector<1x3x64xbf16> to vector<3x64xbf16>
    %cst_48 = arith.constant dense<0.000000e+00> : vector<256x64xf32>
    %48 = tpu.matmul %45, %47, %cst_48 {dimension_numbers = #tpu.dot_dimension_numbers<[1], [0], [0], [1], [0, 0, 1, 1], [], []>} : vector<256x3xbf16>, vector<3x64xbf16>, vector<256x64xf32> -> vector<256x64xf32>
    %49 = arith.addf %42, %48 : vector<256x64xf32>
    %c0_49 = arith.constant 0 : index
    %c2_50 = arith.constant 2 : index
    %c1_51 = arith.constant 1 : index
    %c0_52 = arith.constant 0 : index
    %50 = vector.load %arg1[%c0_49, %c2_50, %c1_51, %c0_52] : memref<1x18x18x3xf32, #tpu.memory_space<vmem>>, vector<1x16x16x3xf32>
    %51 = vector.shape_cast %50 : vector<1x16x16x3xf32> to vector<256x3xf32>
    %52 = arith.truncf %51 : vector<256x3xf32> to vector<256x3xbf16>
    %c7 = arith.constant 7 : index
    %c0_53 = arith.constant 0 : index
    %c0_54 = arith.constant 0 : index
    %53 = vector.load %arg2[%c7, %c0_53, %c0_54] : memref<9x3x64xbf16, #tpu.memory_space<vmem>>, vector<1x3x64xbf16>
    %54 = vector.shape_cast %53 : vector<1x3x64xbf16> to vector<3x64xbf16>
    %cst_55 = arith.constant dense<0.000000e+00> : vector<256x64xf32>
    %55 = tpu.matmul %52, %54, %cst_55 {dimension_numbers = #tpu.dot_dimension_numbers<[1], [0], [0], [1], [0, 0, 1, 1], [], []>} : vector<256x3xbf16>, vector<3x64xbf16>, vector<256x64xf32> -> vector<256x64xf32>
    %56 = arith.addf %49, %55 : vector<256x64xf32>
    %c0_56 = arith.constant 0 : index
    %c2_57 = arith.constant 2 : index
    %c2_58 = arith.constant 2 : index
    %c0_59 = arith.constant 0 : index
    %57 = vector.load %arg1[%c0_56, %c2_57, %c2_58, %c0_59] : memref<1x18x18x3xf32, #tpu.memory_space<vmem>>, vector<1x16x16x3xf32>
    %58 = vector.shape_cast %57 : vector<1x16x16x3xf32> to vector<256x3xf32>
    %59 = arith.truncf %58 : vector<256x3xf32> to vector<256x3xbf16>
    %c8 = arith.constant 8 : index
    %c0_60 = arith.constant 0 : index
    %c0_61 = arith.constant 0 : index
    %60 = vector.load %arg2[%c8, %c0_60, %c0_61] : memref<9x3x64xbf16, #tpu.memory_space<vmem>>, vector<1x3x64xbf16>
    %61 = vector.shape_cast %60 : vector<1x3x64xbf16> to vector<3x64xbf16>
    %cst_62 = arith.constant dense<0.000000e+00> : vector<256x64xf32>
    %62 = tpu.matmul %59, %61, %cst_62 {dimension_numbers = #tpu.dot_dimension_numbers<[1], [0], [0], [1], [0, 0, 1, 1], [], []>} : vector<256x3xbf16>, vector<3x64xbf16>, vector<256x64xf32> -> vector<256x64xf32>
    %63 = arith.addf %56, %62 : vector<256x64xf32>
    %c0_63 = arith.constant 0 : index
    %c0_64 = arith.constant 0 : index
    %64 = vector.load %arg3[%c0_63, %c0_64] : memref<1x64xf32, #tpu.memory_space<vmem>>, vector<1x64xf32>
    %65 = vector.broadcast %64 : vector<1x64xf32> to vector<256x64xf32>
    %66 = arith.addf %63, %65 : vector<256x64xf32>
    %cst_65 = arith.constant 0.000000e+00 : f32
    %67 = vector.broadcast %cst_65 : f32 to vector<256x64xf32>
    %68 = arith.maximumf %66, %67 : vector<256x64xf32>
    %69 = vector.shape_cast %68 : vector<256x64xf32> to vector<1x256x64xf32>
    %cst_66 = arith.constant dense<0.000000e+00> : vector<1x64xf32>
    %70 = vector.multi_reduction <add>, %69, %cst_66 [1] : vector<1x256x64xf32> to vector<1x64xf32>
    %cst_67 = arith.constant 2.560000e+02 : f32
    %71 = vector.broadcast %cst_67 : f32 to vector<1x64xf32>
    %72 = arith.divf %70, %71 : vector<1x64xf32>
    %73 = arith.truncf %72 : vector<1x64xf32> to vector<1x64xbf16>
    %c0_68 = arith.constant 0 : index
    %c0_69 = arith.constant 0 : index
    %74 = vector.load %arg4[%c0_68, %c0_69] : memref<64x128xbf16, #tpu.memory_space<vmem>>, vector<64x128xbf16>
    %cst_70 = arith.constant dense<0.000000e+00> : vector<1x128xf32>
    %75 = tpu.matmul %73, %74, %cst_70 {dimension_numbers = #tpu.dot_dimension_numbers<[1], [0], [0], [1], [0, 0, 1, 1], [], []>} : vector<1x64xbf16>, vector<64x128xbf16>, vector<1x128xf32> -> vector<1x128xf32>
    %c0_71 = arith.constant 0 : index
    %c0_72 = arith.constant 0 : index
    %76 = vector.load %arg5[%c0_71, %c0_72] : memref<1x128xf32, #tpu.memory_space<vmem>>, vector<1x128xf32>
    %77 = arith.addf %75, %76 : vector<1x128xf32>
    %cst_73 = arith.constant 0.000000e+00 : f32
    %78 = vector.broadcast %cst_73 : f32 to vector<1x128xf32>
    %79 = arith.maximumf %77, %78 : vector<1x128xf32>
    %80 = arith.truncf %79 : vector<1x128xf32> to vector<1x128xbf16>
    %c0_74 = arith.constant 0 : index
    %c0_75 = arith.constant 0 : index
    %81 = vector.load %arg6[%c0_74, %c0_75] : memref<128x128xbf16, #tpu.memory_space<vmem>>, vector<128x128xbf16>
    %cst_76 = arith.constant dense<0.000000e+00> : vector<1x128xf32>
    %82 = tpu.matmul %80, %81, %cst_76 {dimension_numbers = #tpu.dot_dimension_numbers<[1], [0], [0], [1], [0, 0, 1, 1], [], []>} : vector<1x128xbf16>, vector<128x128xbf16>, vector<1x128xf32> -> vector<1x128xf32>
    %c0_77 = arith.constant 0 : index
    %c0_78 = arith.constant 0 : index
    %83 = vector.load %arg7[%c0_77, %c0_78] : memref<1x128xf32, #tpu.memory_space<vmem>>, vector<1x128xf32>
    %84 = arith.addf %82, %83 : vector<1x128xf32>
    %85 = arith.mulf %84, %84 : vector<1x128xf32>
    %cst_79 = arith.constant dense<0.000000e+00> : vector<1xf32>
    %86 = vector.multi_reduction <add>, %85, %cst_79 [1] : vector<1x128xf32> to vector<1xf32>
    %87 = vector.shape_cast %86 : vector<1xf32> to vector<1x1xf32>
    %cst_80 = arith.constant 9.99999996E-13 : f32
    %88 = vector.broadcast %cst_80 : f32 to vector<1x1xf32>
    %89 = arith.addf %87, %88 : vector<1x1xf32>
    %90 = math.rsqrt %89 : vector<1x1xf32>
    %91 = vector.broadcast %90 : vector<1x1xf32> to vector<1x128xf32>
    %92 = arith.mulf %84, %91 : vector<1x128xf32>
    %93 = vector.shape_cast %92 : vector<1x128xf32> to vector<1x1x128xf32>
    %c0_81 = arith.constant 0 : index
    %c0_82 = arith.constant 0 : index
    %c0_83 = arith.constant 0 : index
    %94 = vector.load %arg8[%c0_81, %c0_82, %c0_83] : memref<1x1x128xf32, #tpu.memory_space<vmem>>, vector<1x1x128xf32>
    tpu.vector_store %arg8[%c0_81, %c0_82, %c0_83], %93 {strides = array<i32>} : memref<1x1x128xf32, #tpu.memory_space<vmem>>, vector<1x1x128xf32>,
    return
  }
  func.func @transform_0(%arg0: i32) -> (i32, i32, i32, i32) {
    %c0_i32 = arith.constant 0 : i32
    %c0_i32_0 = arith.constant 0 : i32
    %c0_i32_1 = arith.constant 0 : i32
    %c0_i32_2 = arith.constant 0 : i32
    return %arg0, %c0_i32, %c0_i32_0, %c0_i32_1 : i32, i32, i32, i32
  }
  func.func @transform_1(%arg0: i32) -> (i32, i32, i32) {
    %c0_i32 = arith.constant 0 : i32
    %c0_i32_0 = arith.constant 0 : i32
    %c0_i32_1 = arith.constant 0 : i32
    %c0_i32_2 = arith.constant 0 : i32
    return %c0_i32, %c0_i32_0, %c0_i32_1 : i32, i32, i32
  }
  func.func @transform_2(%arg0: i32) -> (i32, i32) {
    %c0_i32 = arith.constant 0 : i32
    %c0_i32_0 = arith.constant 0 : i32
    %c0_i32_1 = arith.constant 0 : i32
    return %c0_i32, %c0_i32_0 : i32, i32
  }
  func.func @transform_3(%arg0: i32) -> (i32, i32) {
    %c0_i32 = arith.constant 0 : i32
    %c0_i32_0 = arith.constant 0 : i32
    %c0_i32_1 = arith.constant 0 : i32
    return %c0_i32, %c0_i32_0 : i32, i32
  }
  func.func @transform_4(%arg0: i32) -> (i32, i32) {
    %c0_i32 = arith.constant 0 : i32
    %c0_i32_0 = arith.constant 0 : i32
    %c0_i32_1 = arith.constant 0 : i32
    return %c0_i32, %c0_i32_0 : i32, i32
  }
  func.func @transform_5(%arg0: i32) -> (i32, i32) {
    %c0_i32 = arith.constant 0 : i32
    %c0_i32_0 = arith.constant 0 : i32
    %c0_i32_1 = arith.constant 0 : i32
    return %c0_i32, %c0_i32_0 : i32, i32
  }
  func.func @transform_6(%arg0: i32) -> (i32, i32) {
    %c0_i32 = arith.constant 0 : i32
    %c0_i32_0 = arith.constant 0 : i32
    %c0_i32_1 = arith.constant 0 : i32
    return %c0_i32, %c0_i32_0 : i32, i32
  }
  func.func @transform_7(%arg0: i32) -> (i32, i32, i32) {
    %c0_i32 = arith.constant 0 : i32
    %c0_i32_0 = arith.constant 0 : i32
    %c0_i32_1 = arith.constant 0 : i32
    return %arg0, %c0_i32, %c0_i32_0 : i32, i32, i32
  }
}

</mosaic_0001>

<llo_original>
// kernel: attack_model_forward.2
$region0: #{attack_model_forward.2}
  #allocation0 [shape = 'u32[]', space=smem, size = 0x4, offset = 0x4, fixed_abs, tag = 'smem constant byte address 0x4 - core index']
  #allocation1 [shape = 'u32[144,128]{1,0:T(1,128)}', space=vmem, size = 0x12000, scoped, tag = 'internal scratch']
  #allocation2 [shape = 's32[1]{0}', space=sflag, size = 0x4, scoped, tag = 'scoped memory for attack_model_forward.2']
  #allocation3 [shape = 'u8[512]{0}', space=smem, size = 0x200, scoped, tag = 'prefetched SMEM operand 0']
  %s0 = inlined_call_operand.vmem [shape: s32[2], index: 0, kind: input, shape index: {}]
  %s1 = inlined_call_operand.vmem [shape: f32[2,16,16,3], index: 1, kind: input, shape index: {}]
  %s2 = inlined_call_operand.vmem [shape: f32[8,16,16,3], index: 2, kind: input, shape index: {}]
  %s3 = inlined_call_operand.vmem [shape: f32[2,16,16,3], index: 3, kind: output, shape index: {}]
  %s4 = sld [smem:[#allocation0]]
  $region41: #{attack_model_forward.2} parent=0
    _
  %s6 = ssub.s32 1, %s4
  %s7 = scalar_select 0, %s6, %s4
  %s8 = sshll.u32 %s0, 4
  %s9 = int_to_ptr.vmem [resolvable:$true] %s8
  %11 = dma.vmem_to_smem %s9, 16, [#allocation3], [#allocation2]
  %12 = dma.done [#allocation2], 16
  %13 = sfence
  loop: start=0, step=1, limit=4
  $region2: #{attack_model_forward.2} parent=0 // loop_pre_header
    _
  $region3: #{attack_model_forward.2} parent=0 // loop_header
    %s15 = sphi 0, %s19
    %p16 = scmp.ge.s32.totalorder %s15, 4
    %s25 = sphi 0, %s27
    %s28 = sphi 0, %s25
    %s29 = sphi 0, %s28
    %s45 = sphi 0, %s29
    %s53 = sphi 0, %s55
    %s56 = sphi 0, %s53
    %s57 = sphi 0, %s56
    %s73 = sphi 0, %s57
    %s79 = sphi 0, %s81
    %s82 = sphi 0, %s79
    %s83 = sphi 0, %s82
    %s99 = sphi 0, %s83
  $region4: #{attack_model_forward.2} parent=0 // loop_header_branch
    %18 = sbr.rel (%p16) target = $region8
  $region5: #{attack_model_forward.2} parent=0 // loop_body
    %s20 = ssub.s32 %s15, 1
    %s21 = ssub.s32 %s15, 2
    %s22 = sadd.s32 %s15, 1
    %s23 = ssub.s32 %s15, %s22
    %p24 = scmp.eq.s32.totalorder %s23, 0
    %s26 = sadd.s32 %s25, 1
    %s27 = scalar_select %p24, %s25, %s26
    %p30 = pneg %p24
    %p31 = scmp.eq.s32.totalorder %s15, 1
    %p32 = por %p30, %p31
    %p33 = scmp.ne.s32.totalorder %s25, %s28
    %p34 = scmp.eq.s32.totalorder %s15, 0
    %p35 = por %p33, %p34
    %p36 = scmp.ne.s32.totalorder %s25, %s28
    %p37 = scmp.eq.s32.totalorder %s20, 1
    %p38 = por %p36, %p37
    %p39 = scmp.ne.s32.totalorder %s28, %s29
    %p40 = scmp.eq.s32.totalorder %s20, 0
    %p41 = por %p39, %p40
    %p42 = scmp.ne.s32.totalorder %s28, %s29
    %p43 = scmp.eq.s32.totalorder %s21, 1
    %p44 = por %p42, %p43
    %p46 = scmp.ne.s32.totalorder %s29, %s45
    %p47 = scmp.eq.s32.totalorder %s21, 0
    %p48 = por %p46, %p47
    %s49 = sld [smem:[#allocation3 + %s15]]
    %s50 = sld [smem:[#allocation3 + %s22]]
    %s51 = ssub.s32 %s49, %s50
    %p52 = scmp.eq.s32.totalorder %s51, 0
    %s54 = sadd.s32 %s53, 1
    %s55 = scalar_select %p52, %s53, %s54
    %p58 = pneg %p52
    %p59 = scmp.eq.s32.totalorder %s15, 1
    %p60 = por %p58, %p59
    %p61 = scmp.ne.s32.totalorder %s53, %s56
    %p62 = scmp.eq.s32.totalorder %s15, 0
    %p63 = por %p61, %p62
    %p64 = scmp.ne.s32.totalorder %s53, %s56
    %p65 = scmp.eq.s32.totalorder %s20, 1
    %p66 = por %p64, %p65
    %p67 = scmp.ne.s32.totalorder %s56, %s57
    %p68 = scmp.eq.s32.totalorder %s20, 0
    %p69 = por %p67, %p68
    %p70 = scmp.ne.s32.totalorder %s56, %s57
    %p71 = scmp.eq.s32.totalorder %s21, 1
    %p72 = por %p70, %p71
    %p74 = scmp.ne.s32.totalorder %s57, %s73
    %p75 = scmp.eq.s32.totalorder %s21, 0
    %p76 = por %p74, %p75
    %s77 = ssub.s32 %s15, %s22
    %p78 = scmp.eq.s32.totalorder %s77, 0
    %s80 = sadd.s32 %s79, 1
    %s81 = scalar_select %p78, %s79, %s80
    %p84 = pneg %p78
    %p85 = scmp.eq.s32.totalorder %s15, 1
    %p86 = por %p84, %p85
    %p87 = scmp.ne.s32.totalorder %s79, %s82
    %p88 = scmp.eq.s32.totalorder %s15, 0
    %p89 = por %p87, %p88
    %p90 = scmp.ne.s32.totalorder %s79, %s82
    %p91 = scmp.eq.s32.totalorder %s20, 1
    %p92 = por %p90, %p91
    %p93 = scmp.ne.s32.totalorder %s82, %s83
    %p94 = scmp.eq.s32.totalorder %s20, 0
    %p95 = por %p93, %p94
    %p96 = scmp.ne.s32.totalorder %s82, %s83
    %p97 = scmp.eq.s32.totalorder %s21, 1
    %p98 = por %p96, %p97
    %p100 = scmp.ne.s32.totalorder %s83, %s99
    %p101 = scmp.eq.s32.totalorder %s21, 0
    %p102 = por %p100, %p101
    %p103 = scmp.le.s32.totalorder 1, %s15
    %p104 = scmp.lt.s32.totalorder %s15, 3
    %p105 = pnand %p103, %p104
    %p106 = pneg %p105
    // Predicated region
    $region9: #{attack_model_forward.2} parent=5 // pred_check
      _
    $region10: #{attack_model_forward.2} parent=5 // pred_check_branch
      %108 = sbr.rel (%p105) target = $region12
    $region11: #{attack_model_forward.2} parent=5 // pred_region
      %s109 = ssub.s32 %s15, 1
    $region12: #{attack_model_forward.2} parent=5 // pred_fallthru
      _
    %p110 = scmp.lt.s32.totalorder %s15, 2
    // Predicated region
    $region13: #{attack_model_forward.2} parent=5 // pred_check
      %p111 = pneg %p110
    $region14: #{attack_model_forward.2} parent=5 // pred_check_branch
      %113 = sbr.rel (%p111) target = $region16
    $region15: #{attack_model_forward.2} parent=5 // pred_region
      // Predicated region
      $region17: #{attack_model_forward.2} parent=15 // pred_check
        %p114 = pneg %p35
      $region18: #{attack_model_forward.2} parent=15 // pred_check_branch
        %116 = sbr.rel (%p114) target = $region20
      $region19: #{attack_model_forward.2} parent=15 // pred_region
        %p117 = scmp.lt.s32.totalorder %s15, 1
        %s118 = scalar_select %p117, %s15, 1
        %s119 = smul.addr %s118, 32
        %s120 = smul.addr %s119, 8
        %s121 = scalar_lea.vmem %s1, %s120
      $region20: #{attack_model_forward.2} parent=15 // pred_fallthru
        _
      // Predicated region
      $region21: #{attack_model_forward.2} parent=15 // pred_check
        %p122 = pneg %p63
      $region22: #{attack_model_forward.2} parent=15 // pred_check_branch
        %124 = sbr.rel (%p122) target = $region24
      $region23: #{attack_model_forward.2} parent=15 // pred_region
        %s125 = sld [smem:[#allocation3 + %s15]]
        %p126 = scmp.lt.s32.totalorder %s125, 7
        %s127 = scalar_select %p126, %s125, 7
        %s128 = smul.addr %s127, 32
        %s129 = smul.addr %s128, 8
        %s130 = scalar_lea.vmem %s2, %s129
        %s131 = sld [smem:[#allocation3 + %s15]]
      $region24: #{attack_model_forward.2} parent=15 // pred_fallthru
        _
    $region16: #{attack_model_forward.2} parent=5 // pred_fallthru
      _
    %p132 = scmp.le.s32.totalorder 1, %s15
    %p133 = scmp.lt.s32.totalorder %s15, 3
    %p134 = pnand %p132, %p133
    %p135 = pneg %p134
    // Predicated region
    $region25: #{attack_model_forward.2} parent=5 // pred_check
      _
    $region26: #{attack_model_forward.2} parent=5 // pred_check_branch
      %137 = sbr.rel (%p134) target = $region28
    $region27: #{attack_model_forward.2} parent=5 // pred_region
      %s138 = ssub.s32 %s15, 1
      %p139 = scmp.lt.s32.totalorder %s20, 1
      %s140 = scalar_select %p139, %s20, 1
      %s141 = smul.addr %s140, 32
      %s142 = smul.addr %s141, 8
      %s143 = scalar_lea.vmem %s1, %s142
      %p144 = pneg %p41
      %p145 = pneg %p38
      %s146 = sld [smem:[#allocation3 + %s20]]
      %p147 = scmp.lt.s32.totalorder %s146, 7
      %s148 = scalar_select %p147, %s146, 7
      %s149 = smul.addr %s148, 32
      %s150 = smul.addr %s149, 8
      %s151 = scalar_lea.vmem %s2, %s150
      %p152 = pneg %p69
      %p153 = pneg %p66
      %p154 = pneg %p95
      %p155 = pneg %p92
      %p156 = scmp.lt.s32.totalorder %s20, 1
      %s157 = scalar_select %p156, %s20, 1
      %s158 = smul.addr %s157, 32
      %s159 = smul.addr %s158, 8
      %s160 = scalar_lea.vmem %s3, %s159
      %p161 = scmp.lt.s32.totalorder %s20, 1
      %s162 = scalar_select %p161, %s20, 1
      %s163 = smul.addr %s162, 32
      %s164 = smul.addr %s163, 8
      %s165 = scalar_lea.vmem %s1, %s164
      %s166 = sld [smem:[#allocation3 + %s20]]
      %p167 = scmp.lt.s32.totalorder %s166, 7
      %s168 = scalar_select %p167, %s166, 7
      %s169 = smul.addr %s168, 32
      %s170 = smul.addr %s169, 8
      %s171 = scalar_lea.vmem %s2, %s170
      %s172 = sld [smem:[#allocation3 + %s20]]
      %p173 = scmp.lt.s32.totalorder %s20, 1
      %s174 = scalar_select %p173, %s20, 1
      %s175 = smul.addr %s174, 32
      %s176 = smul.addr %s175, 8
      %s177 = scalar_lea.vmem %s3, %s176
      %v178 = vld [vmem:[%s171] sm:$0xff]
      %v179 = vld [vmem:[%s171 + $0x8] sm:$0xff]
      %v180 = vld [vmem:[%s171 + $0x10] sm:$0xff]
      %v181 = vld [vmem:[%s171 + $0x18] sm:$0xff]
      %v182 = vld [vmem:[%s171 + $0x20] sm:$0xff]
      %v183 = vld [vmem:[%s171 + $0x28] sm:$0xff]
      %v184 = vld [vmem:[%s171 + $0x30] sm:$0xff]
      %v185 = vld [vmem:[%s171 + $0x38] sm:$0xff]
      %v186 = vld [vmem:[%s171 + $0x40] sm:$0xff]
      %v187 = vld [vmem:[%s171 + $0x48] sm:$0xff]
      %v188 = vld [vmem:[%s171 + $0x50] sm:$0xff]
      %v189 = vld [vmem:[%s171 + $0x58] sm:$0xff]
      %v190 = vld [vmem:[%s171 + $0x60] sm:$0xff]
      %v191 = vld [vmem:[%s171 + $0x68] sm:$0xff]
      %v192 = vld [vmem:[%s171 + $0x70] sm:$0xff]
      %v193 = vld [vmem:[%s171 + $0x78] sm:$0xff]
      %v194 = vld [vmem:[%s171 + $0x80] sm:$0xff]
      %v195 = vld [vmem:[%s171 + $0x88] sm:$0xff]
      %v196 = vld [vmem:[%s171 + $0x90] sm:$0xff]
      %v197 = vld [vmem:[%s171 + $0x98] sm:$0xff]
      %v198 = vld [vmem:[%s171 + $0xa0] sm:$0xff]
      %v199 = vld [vmem:[%s171 + $0xa8] sm:$0xff]
      %v200 = vld [vmem:[%s171 + $0xb0] sm:$0xff]
      %v201 = vld [vmem:[%s171 + $0xb8] sm:$0xff]
      %v202 = vld [vmem:[%s171 + $0xc0] sm:$0xff]
      %v203 = vld [vmem:[%s171 + $0xc8] sm:$0xff]
      %v204 = vld [vmem:[%s171 + $0xd0] sm:$0xff]
      %v205 = vld [vmem:[%s171 + $0xd8] sm:$0xff]
      %v206 = vld [vmem:[%s171 + $0xe0] sm:$0xff]
      %v207 = vld [vmem:[%s171 + $0xe8] sm:$0xff]
      %v208 = vld [vmem:[%s171 + $0xf0] sm:$0xff]
      %v209 = vld [vmem:[%s171 + $0xf8] sm:$0xff]
      %v210 = vmax.f32 %v178, -1.0
      %v211 = vmax.f32 %v179, -1.0
      %v212 = vmax.f32 %v180, -1.0
      %v213 = vmax.f32 %v181, -1.0
      %v214 = vmax.f32 %v182, -1.0
      %v215 = vmax.f32 %v183, -1.0
      %v216 = vmax.f32 %v184, -1.0
      %v217 = vmax.f32 %v185, -1.0
      %v218 = vmax.f32 %v186, -1.0
      %v219 = vmax.f32 %v187, -1.0
      %v220 = vmax.f32 %v188, -1.0
      %v221 = vmax.f32 %v189, -1.0
      %v222 = vmax.f32 %v190, -1.0
      %v223 = vmax.f32 %v191, -1.0
      %v224 = vmax.f32 %v192, -1.0
      %v225 = vmax.f32 %v193, -1.0
      %v226 = vmax.f32 %v194, -1.0
      %v227 = vmax.f32 %v195, -1.0
      %v228 = vmax.f32 %v196, -1.0
      %v229 = vmax.f32 %v197, -1.0
      %v230 = vmax.f32 %v198, -1.0
      %v231 = vmax.f32 %v199, -1.0
      %v232 = vmax.f32 %v200, -1.0
      %v233 = vmax.f32 %v201, -1.0
      %v234 = vmax.f32 %v202, -1.0
      %v235 = vmax.f32 %v203, -1.0
      %v236 = vmax.f32 %v204, -1.0
      %v237 = vmax.f32 %v205, -1.0
      %v238 = vmax.f32 %v206, -1.0
      %v239 = vmax.f32 %v207, -1.0
      %v240 = vmax.f32 %v208, -1.0
      %v241 = vmax.f32 %v209, -1.0
      %v242 = vmin.f32 %v210, 1.0
      %v243 = vmin.f32 %v211, 1.0
      %v244 = vmin.f32 %v212, 1.0
      %v245 = vmin.f32 %v213, 1.0
      %v246 = vmin.f32 %v214, 1.0
      %v247 = vmin.f32 %v215, 1.0
      %v248 = vmin.f32 %v216, 1.0
      %v249 = vmin.f32 %v217, 1.0
      %v250 = vmin.f32 %v218, 1.0
      %v251 = vmin.f32 %v219, 1.0
      %v252 = vmin.f32 %v220, 1.0
      %v253 = vmin.f32 %v221, 1.0
      %v254 = vmin.f32 %v222, 1.0
      %v255 = vmin.f32 %v223, 1.0
      %v256 = vmin.f32 %v224, 1.0
      %v257 = vmin.f32 %v225, 1.0
      %v258 = vmin.f32 %v226, 1.0
      %v259 = vmin.f32 %v227, 1.0
      %v260 = vmin.f32 %v228, 1.0
      %v261 = vmin.f32 %v229, 1.0
      %v262 = vmin.f32 %v230, 1.0
      %v263 = vmin.f32 %v231, 1.0
      %v264 = vmin.f32 %v232, 1.0
      %v265 = vmin.f32 %v233, 1.0
      %v266 = vmin.f32 %v234, 1.0
      %v267 = vmin.f32 %v235, 1.0
      %v268 = vmin.f32 %v236, 1.0
      %v269 = vmin.f32 %v237, 1.0
      %v270 = vmin.f32 %v238, 1.0
      %v271 = vmin.f32 %v239, 1.0
      %v272 = vmin.f32 %v240, 1.0
      %v273 = vmin.f32 %v241, 1.0
      %v274 = vld [vmem:[%s165] sm:$0xff]
      %v275 = vld [vmem:[%s165 + $0x8] sm:$0xff]
      %v276 = vld [vmem:[%s165 + $0x10] sm:$0xff]
      %v277 = vld [vmem:[%s165 + $0x18] sm:$0xff]
      %v278 = vld [vmem:[%s165 + $0x20] sm:$0xff]
      %v279 = vld [vmem:[%s165 + $0x28] sm:$0xff]
      %v280 = vld [vmem:[%s165 + $0x30] sm:$0xff]
      %v281 = vld [vmem:[%s165 + $0x38] sm:$0xff]
      %v282 = vld [vmem:[%s165 + $0x40] sm:$0xff]
      %v283 = vld [vmem:[%s165 + $0x48] sm:$0xff]
      %v284 = vld [vmem:[%s165 + $0x50] sm:$0xff]
      %v285 = vld [vmem:[%s165 + $0x58] sm:$0xff]
      %v286 = vld [vmem:[%s165 + $0x60] sm:$0xff]
      %v287 = vld [vmem:[%s165 + $0x68] sm:$0xff]
      %v288 = vld [vmem:[%s165 + $0x70] sm:$0xff]
      %v289 = vld [vmem:[%s165 + $0x78] sm:$0xff]
      %v290 = vld [vmem:[%s165 + $0x80] sm:$0xff]
      %v291 = vld [vmem:[%s165 + $0x88] sm:$0xff]
      %v292 = vld [vmem:[%s165 + $0x90] sm:$0xff]
      %v293 = vld [vmem:[%s165 + $0x98] sm:$0xff]
      %v294 = vld [vmem:[%s165 + $0xa0] sm:$0xff]
      %v295 = vld [vmem:[%s165 + $0xa8] sm:$0xff]
      %v296 = vld [vmem:[%s165 + $0xb0] sm:$0xff]
      %v297 = vld [vmem:[%s165 + $0xb8] sm:$0xff]
      %v298 = vld [vmem:[%s165 + $0xc0] sm:$0xff]
      %v299 = vld [vmem:[%s165 + $0xc8] sm:$0xff]
      %v300 = vld [vmem:[%s165 + $0xd0] sm:$0xff]
      %v301 = vld [vmem:[%s165 + $0xd8] sm:$0xff]
      %v302 = vld [vmem:[%s165 + $0xe0] sm:$0xff]
      %v303 = vld [vmem:[%s165 + $0xe8] sm:$0xff]
      %v304 = vld [vmem:[%s165 + $0xf0] sm:$0xff]
      %v305 = vld [vmem:[%s165 + $0xf8] sm:$0xff]
      %v306 = vadd.f32 %v274, %v242
      %v307 = vadd.f32 %v275, %v243
      %v308 = vadd.f32 %v276, %v244
      %v309 = vadd.f32 %v277, %v245
      %v310 = vadd.f32 %v278, %v246
      %v311 = vadd.f32 %v279, %v247
      %v312 = vadd.f32 %v280, %v248
      %v313 = vadd.f32 %v281, %v249
      %v314 = vadd.f32 %v282, %v250
      %v315 = vadd.f32 %v283, %v251
      %v316 = vadd.f32 %v284, %v252
      %v317 = vadd.f32 %v285, %v253
      %v318 = vadd.f32 %v286, %v254
      %v319 = vadd.f32 %v287, %v255
      %v320 = vadd.f32 %v288, %v256
      %v321 = vadd.f32 %v289, %v257
      %v322 = vadd.f32 %v290, %v258
      %v323 = vadd.f32 %v291, %v259
      %v324 = vadd.f32 %v292, %v260
      %v325 = vadd.f32 %v293, %v261
      %v326 = vadd.f32 %v294, %v262
      %v327 = vadd.f32 %v295, %v263
      %v328 = vadd.f32 %v296, %v264
      %v329 = vadd.f32 %v297, %v265
      %v330 = vadd.f32 %v298, %v266
      %v331 = vadd.f32 %v299, %v267
      %v332 = vadd.f32 %v300, %v268
      %v333 = vadd.f32 %v301, %v269
      %v334 = vadd.f32 %v302, %v270
      %v335 = vadd.f32 %v303, %v271
      %v336 = vadd.f32 %v304, %v272
      %v337 = vadd.f32 %v305, %v273
      %v338 = vmax.f32 %v306, 0.0
      %v339 = vmax.f32 %v307, 0.0
      %v340 = vmax.f32 %v308, 0.0
      %v341 = vmax.f32 %v309, 0.0
      %v342 = vmax.f32 %v310, 0.0
      %v343 = vmax.f32 %v311, 0.0
      %v344 = vmax.f32 %v312, 0.0
      %v345 = vmax.f32 %v313, 0.0
      %v346 = vmax.f32 %v314, 0.0
      %v347 = vmax.f32 %v315, 0.0
      %v348 = vmax.f32 %v316, 0.0
      %v349 = vmax.f32 %v317, 0.0
      %v350 = vmax.f32 %v318, 0.0
      %v351 = vmax.f32 %v319, 0.0
      %v352 = vmax.f32 %v320, 0.0
      %v353 = vmax.f32 %v321, 0.0
      %v354 = vmax.f32 %v322, 0.0
      %v355 = vmax.f32 %v323, 0.0
      %v356 = vmax.f32 %v324, 0.0
      %v357 = vmax.f32 %v325, 0.0
      %v358 = vmax.f32 %v326, 0.0
      %v359 = vmax.f32 %v327, 0.0
      %v360 = vmax.f32 %v328, 0.0
      %v361 = vmax.f32 %v329, 0.0
      %v362 = vmax.f32 %v330, 0.0
      %v363 = vmax.f32 %v331, 0.0
      %v364 = vmax.f32 %v332, 0.0
      %v365 = vmax.f32 %v333, 0.0
      %v366 = vmax.f32 %v334, 0.0
      %v367 = vmax.f32 %v335, 0.0
      %v368 = vmax.f32 %v336, 0.0
      %v369 = vmax.f32 %v337, 0.0
      %v370 = vmin.f32 %v338, 1.0
      %v371 = vmin.f32 %v339, 1.0
      %v372 = vmin.f32 %v340, 1.0
      %v373 = vmin.f32 %v341, 1.0
      %v374 = vmin.f32 %v342, 1.0
      %v375 = vmin.f32 %v343, 1.0
      %v376 = vmin.f32 %v344, 1.0
      %v377 = vmin.f32 %v345, 1.0
      %v378 = vmin.f32 %v346, 1.0
      %v379 = vmin.f32 %v347, 1.0
      %v380 = vmin.f32 %v348, 1.0
      %v381 = vmin.f32 %v349, 1.0
      %v382 = vmin.f32 %v350, 1.0
      %v383 = vmin.f32 %v351, 1.0
      %v384 = vmin.f32 %v352, 1.0
      %v385 = vmin.f32 %v353, 1.0
      %v386 = vmin.f32 %v354, 1.0
      %v387 = vmin.f32 %v355, 1.0
      %v388 = vmin.f32 %v356, 1.0
      %v389 = vmin.f32 %v357, 1.0
      %v390 = vmin.f32 %v358, 1.0
      %v391 = vmin.f32 %v359, 1.0
      %v392 = vmin.f32 %v360, 1.0
      %v393 = vmin.f32 %v361, 1.0
      %v394 = vmin.f32 %v362, 1.0
      %v395 = vmin.f32 %v363, 1.0
      %v396 = vmin.f32 %v364, 1.0
      %v397 = vmin.f32 %v365, 1.0
      %v398 = vmin.f32 %v366, 1.0
      %v399 = vmin.f32 %v367, 1.0
      %v400 = vmin.f32 %v368, 1.0
      %v401 = vmin.f32 %v369, 1.0
      %vm402 = vcmask 23552
      %403 = vst.msk [vmem:[%s177] sm:$0xff] %vm402, %v370
      %404 = vst.msk [vmem:[%s177 + $0x8] sm:$0xff] %vm402, %v371
      %405 = vst.msk [vmem:[%s177 + $0x10] sm:$0xff] %vm402, %v372
      %406 = vst.msk [vmem:[%s177 + $0x18] sm:$0xff] %vm402, %v373
      %407 = vst.msk [vmem:[%s177 + $0x20] sm:$0xff] %vm402, %v374
      %408 = vst.msk [vmem:[%s177 + $0x28] sm:$0xff] %vm402, %v375
      %409 = vst.msk [vmem:[%s177 + $0x30] sm:$0xff] %vm402, %v376
      %410 = vst.msk [vmem:[%s177 + $0x38] sm:$0xff] %vm402, %v377
      %411 = vst.msk [vmem:[%s177 + $0x40] sm:$0xff] %vm402, %v378
      %412 = vst.msk [vmem:[%s177 + $0x48] sm:$0xff] %vm402, %v379
      %413 = vst.msk [vmem:[%s177 + $0x50] sm:$0xff] %vm402, %v380
      %414 = vst.msk [vmem:[%s177 + $0x58] sm:$0xff] %vm402, %v381
      %415 = vst.msk [vmem:[%s177 + $0x60] sm:$0xff] %vm402, %v382
      %416 = vst.msk [vmem:[%s177 + $0x68] sm:$0xff] %vm402, %v383
      %417 = vst.msk [vmem:[%s177 + $0x70] sm:$0xff] %vm402, %v384
      %418 = vst.msk [vmem:[%s177 + $0x78] sm:$0xff] %vm402, %v385
      %419 = vst.msk [vmem:[%s177 + $0x80] sm:$0xff] %vm402, %v386
      %420 = vst.msk [vmem:[%s177 + $0x88] sm:$0xff] %vm402, %v387
      %421 = vst.msk [vmem:[%s177 + $0x90] sm:$0xff] %vm402, %v388
      %422 = vst.msk [vmem:[%s177 + $0x98] sm:$0xff] %vm402, %v389
      %423 = vst.msk [vmem:[%s177 + $0xa0] sm:$0xff] %vm402, %v390
      %424 = vst.msk [vmem:[%s177 + $0xa8] sm:$0xff] %vm402, %v391
      %425 = vst.msk [vmem:[%s177 + $0xb0] sm:$0xff] %vm402, %v392
      %426 = vst.msk [vmem:[%s177 + $0xb8] sm:$0xff] %vm402, %v393
      %427 = vst.msk [vmem:[%s177 + $0xc0] sm:$0xff] %vm402, %v394
      %428 = vst.msk [vmem:[%s177 + $0xc8] sm:$0xff] %vm402, %v395
      %429 = vst.msk [vmem:[%s177 + $0xd0] sm:$0xff] %vm402, %v396
      %430 = vst.msk [vmem:[%s177 + $0xd8] sm:$0xff] %vm402, %v397
      %431 = vst.msk [vmem:[%s177 + $0xe0] sm:$0xff] %vm402, %v398
      %432 = vst.msk [vmem:[%s177 + $0xe8] sm:$0xff] %vm402, %v399
      %433 = vst.msk [vmem:[%s177 + $0xf0] sm:$0xff] %vm402, %v400
      %434 = vst.msk [vmem:[%s177 + $0xf8] sm:$0xff] %vm402, %v401
      %p435 = scmp.lt.s32.totalorder %s20, 1
      %s436 = scalar_select %p435, %s20, 1
      %s437 = smul.addr %s436, 32
      %s438 = smul.addr %s437, 8
      %s439 = scalar_lea.vmem %s3, %s438
      // Predicated region
      $region29: #{attack_model_forward.2} parent=27 // pred_check
        %p440 = pneg %p92
      $region30: #{attack_model_forward.2} parent=27 // pred_check_branch
        %442 = sbr.rel (%p440) target = $region32
      $region31: #{attack_model_forward.2} parent=27 // pred_region
        _
      $region32: #{attack_model_forward.2} parent=27 // pred_fallthru
        _
    $region28: #{attack_model_forward.2} parent=5 // pred_fallthru
      _
    %p443 = scmp.le.s32.totalorder 2, %s15
    // Predicated region
    $region33: #{attack_model_forward.2} parent=5 // pred_check
      %p444 = pneg %p443
    $region34: #{attack_model_forward.2} parent=5 // pred_check_branch
      %446 = sbr.rel (%p444) target = $region36
    $region35: #{attack_model_forward.2} parent=5 // pred_region
      %s447 = ssub.s32 %s15, 2
      // Predicated region
      $region37: #{attack_model_forward.2} parent=35 // pred_check
        %p448 = pneg %p98
      $region38: #{attack_model_forward.2} parent=35 // pred_check_branch
        %450 = sbr.rel (%p448) target = $region40
      $region39: #{attack_model_forward.2} parent=35 // pred_region
        %p451 = scmp.lt.s32.totalorder %s21, 1
        %s452 = scalar_select %p451, %s21, 1
        %s453 = smul.addr %s452, 32
        %s454 = smul.addr %s453, 8
        %s455 = scalar_lea.vmem %s3, %s454
      $region40: #{attack_model_forward.2} parent=35 // pred_fallthru
        _
    $region36: #{attack_model_forward.2} parent=5 // pred_fallthru
      _
  $region6: #{attack_model_forward.2} parent=0 // loop_footer
    %s19 = sadd.s32 1, %s15
  $region7: #{attack_model_forward.2} parent=0 // loop_footer_branch
    %14 = sbr.rel target = $region3
  $region8: #{attack_model_forward.2} parent=0 // loop_exit
    _

// kernel: attack_model_forward.3
$region0: #{attack_model_forward.3}
  #allocation0 [shape = 'u32[]', space=smem, size = 0x4, offset = 0x4, fixed_abs, tag = 'smem constant byte address 0x4 - core index']
  #allocation1 [shape = 'u32[144,128]{1,0:T(1,128)}', space=vmem, size = 0x12000, scoped, tag = 'internal scratch']
  %s0 = inlined_call_operand.vmem [shape: f32[2,18,18,3], index: 0, kind: input, shape index: {}]
  %s1 = inlined_call_operand.vmem [shape: bf16[9,3,64], index: 1, kind: input, shape index: {}]
  %s2 = inlined_call_operand.vmem [shape: f32[1,64], index: 2, kind: input, shape index: {}]
  %s3 = inlined_call_operand.vmem [shape: bf16[64,128], index: 3, kind: input, shape index: {}]
  %s4 = inlined_call_operand.vmem [shape: f32[1,128], index: 4, kind: input, shape index: {}]
  %s5 = inlined_call_operand.vmem [shape: bf16[128,128], index: 5, kind: input, shape index: {}]
  %s6 = inlined_call_operand.vmem [shape: f32[1,128], index: 6, kind: input, shape index: {}]
  %s7 = inlined_call_operand.vmem [shape: f32[2,1,128], index: 7, kind: output, shape index: {}]
  %s8 = sld [smem:[#allocation0]]
  $region61: #{attack_model_forward.3} parent=0
    _
  %s10 = ssub.s32 1, %s8
  %s11 = scalar_select 0, %s10, %s8
  loop: start=0, step=1, limit=4
  $region2: #{attack_model_forward.3} parent=0 // loop_pre_header
    _
  $region3: #{attack_model_forward.3} parent=0 // loop_header
    %s13 = sphi 0, %s17
    %p14 = scmp.ge.s32.totalorder %s13, 4
    %s23 = sphi 0, %s25
    %s26 = sphi 0, %s23
    %s27 = sphi 0, %s26
    %s43 = sphi 0, %s27
    %s47 = sphi 0, %s47
    %s49 = sphi 0, %s47
    %s50 = sphi 0, %s49
    %s64 = sphi 0, %s50
    %s68 = sphi 0, %s68
    %s70 = sphi 0, %s68
    %s71 = sphi 0, %s70
    %s85 = sphi 0, %s71
    %s89 = sphi 0, %s89
    %s91 = sphi 0, %s89
    %s92 = sphi 0, %s91
    %s106 = sphi 0, %s92
    %s110 = sphi 0, %s110
    %s112 = sphi 0, %s110
    %s113 = sphi 0, %s112
    %s127 = sphi 0, %s113
    %s131 = sphi 0, %s131
    %s133 = sphi 0, %s131
    %s134 = sphi 0, %s133
    %s148 = sphi 0, %s134
    %s152 = sphi 0, %s152
    %s154 = sphi 0, %s152
    %s155 = sphi 0, %s154
    %s169 = sphi 0, %s155
    %s175 = sphi 0, %s177
    %s178 = sphi 0, %s175
    %s179 = sphi 0, %s178
    %s195 = sphi 0, %s179
  $region4: #{attack_model_forward.3} parent=0 // loop_header_branch
    %16 = sbr.rel (%p14) target = $region8
  $region5: #{attack_model_forward.3} parent=0 // loop_body
    %s18 = ssub.s32 %s13, 1
    %s19 = ssub.s32 %s13, 2
    %s20 = sadd.s32 %s13, 1
    %s21 = ssub.s32 %s13, %s20
    %p22 = scmp.eq.s32.totalorder %s21, 0
    %s24 = sadd.s32 %s23, 1
    %s25 = scalar_select %p22, %s23, %s24
    %p28 = pneg %p22
    %p29 = scmp.eq.s32.totalorder %s13, 1
    %p30 = por %p28, %p29
    %p31 = scmp.ne.s32.totalorder %s23, %s26
    %p32 = scmp.eq.s32.totalorder %s13, 0
    %p33 = por %p31, %p32
    %p34 = scmp.ne.s32.totalorder %s23, %s26
    %p35 = scmp.eq.s32.totalorder %s18, 1
    %p36 = por %p34, %p35
    %p37 = scmp.ne.s32.totalorder %s26, %s27
    %p38 = scmp.eq.s32.totalorder %s18, 0
    %p39 = por %p37, %p38
    %p40 = scmp.ne.s32.totalorder %s26, %s27
    %p41 = scmp.eq.s32.totalorder %s19, 1
    %p42 = por %p40, %p41
    %p44 = scmp.ne.s32.totalorder %s27, %s43
    %p45 = scmp.eq.s32.totalorder %s19, 0
    %p46 = por %p44, %p45
    %s48 = sadd.s32 %s47, 1
    %p51 = scmp.eq.s32.totalorder %s13, 1
    %p52 = scmp.ne.s32.totalorder %s47, %s49
    %p53 = scmp.eq.s32.totalorder %s13, 0
    %p54 = por %p52, %p53
    %p55 = scmp.ne.s32.totalorder %s47, %s49
    %p56 = scmp.eq.s32.totalorder %s18, 1
    %p57 = por %p55, %p56
    %p58 = scmp.ne.s32.totalorder %s49, %s50
    %p59 = scmp.eq.s32.totalorder %s18, 0
    %p60 = por %p58, %p59
    %p61 = scmp.ne.s32.totalorder %s49, %s50
    %p62 = scmp.eq.s32.totalorder %s19, 1
    %p63 = por %p61, %p62
    %p65 = scmp.ne.s32.totalorder %s50, %s64
    %p66 = scmp.eq.s32.totalorder %s19, 0
    %p67 = por %p65, %p66
    %s69 = sadd.s32 %s68, 1
    %p72 = scmp.eq.s32.totalorder %s13, 1
    %p73 = scmp.ne.s32.totalorder %s68, %s70
    %p74 = scmp.eq.s32.totalorder %s13, 0
    %p75 = por %p73, %p74
    %p76 = scmp.ne.s32.totalorder %s68, %s70
    %p77 = scmp.eq.s32.totalorder %s18, 1
    %p78 = por %p76, %p77
    %p79 = scmp.ne.s32.totalorder %s70, %s71
    %p80 = scmp.eq.s32.totalorder %s18, 0
    %p81 = por %p79, %p80
    %p82 = scmp.ne.s32.totalorder %s70, %s71
    %p83 = scmp.eq.s32.totalorder %s19, 1
    %p84 = por %p82, %p83
    %p86 = scmp.ne.s32.totalorder %s71, %s85
    %p87 = scmp.eq.s32.totalorder %s19, 0
    %p88 = por %p86, %p87
    %s90 = sadd.s32 %s89, 1
    %p93 = scmp.eq.s32.totalorder %s13, 1
    %p94 = scmp.ne.s32.totalorder %s89, %s91
    %p95 = scmp.eq.s32.totalorder %s13, 0
    %p96 = por %p94, %p95
    %p97 = scmp.ne.s32.totalorder %s89, %s91
    %p98 = scmp.eq.s32.totalorder %s18, 1
    %p99 = por %p97, %p98
    %p100 = scmp.ne.s32.totalorder %s91, %s92
    %p101 = scmp.eq.s32.totalorder %s18, 0
    %p102 = por %p100, %p101
    %p103 = scmp.ne.s32.totalorder %s91, %s92
    %p104 = scmp.eq.s32.totalorder %s19, 1
    %p105 = por %p103, %p104
    %p107 = scmp.ne.s32.totalorder %s92, %s106
    %p108 = scmp.eq.s32.totalorder %s19, 0
    %p109 = por %p107, %p108
    %s111 = sadd.s32 %s110, 1
    %p114 = scmp.eq.s32.totalorder %s13, 1
    %p115 = scmp.ne.s32.totalorder %s110, %s112
    %p116 = scmp.eq.s32.totalorder %s13, 0
    %p117 = por %p115, %p116
    %p118 = scmp.ne.s32.totalorder %s110, %s112
    %p119 = scmp.eq.s32.totalorder %s18, 1
    %p120 = por %p118, %p119
    %p121 = scmp.ne.s32.totalorder %s112, %s113
    %p122 = scmp.eq.s32.totalorder %s18, 0
    %p123 = por %p121, %p122
    %p124 = scmp.ne.s32.totalorder %s112, %s113
    %p125 = scmp.eq.s32.totalorder %s19, 1
    %p126 = por %p124, %p125
    %p128 = scmp.ne.s32.totalorder %s113, %s127
    %p129 = scmp.eq.s32.totalorder %s19, 0
    %p130 = por %p128, %p129
    %s132 = sadd.s32 %s131, 1
    %p135 = scmp.eq.s32.totalorder %s13, 1
    %p136 = scmp.ne.s32.totalorder %s131, %s133
    %p137 = scmp.eq.s32.totalorder %s13, 0
    %p138 = por %p136, %p137
    %p139 = scmp.ne.s32.totalorder %s131, %s133
    %p140 = scmp.eq.s32.totalorder %s18, 1
    %p141 = por %p139, %p140
    %p142 = scmp.ne.s32.totalorder %s133, %s134
    %p143 = scmp.eq.s32.totalorder %s18, 0
    %p144 = por %p142, %p143
    %p145 = scmp.ne.s32.totalorder %s133, %s134
    %p146 = scmp.eq.s32.totalorder %s19, 1
    %p147 = por %p145, %p146
    %p149 = scmp.ne.s32.totalorder %s134, %s148
    %p150 = scmp.eq.s32.totalorder %s19, 0
    %p151 = por %p149, %p150
    %s153 = sadd.s32 %s152, 1
    %p156 = scmp.eq.s32.totalorder %s13, 1
    %p157 = scmp.ne.s32.totalorder %s152, %s154
    %p158 = scmp.eq.s32.totalorder %s13, 0
    %p159 = por %p157, %p158
    %p160 = scmp.ne.s32.totalorder %s152, %s154
    %p161 = scmp.eq.s32.totalorder %s18, 1
    %p162 = por %p160, %p161
    %p163 = scmp.ne.s32.totalorder %s154, %s155
    %p164 = scmp.eq.s32.totalorder %s18, 0
    %p165 = por %p163, %p164
    %p166 = scmp.ne.s32.totalorder %s154, %s155
    %p167 = scmp.eq.s32.totalorder %s19, 1
    %p168 = por %p166, %p167
    %p170 = scmp.ne.s32.totalorder %s155, %s169
    %p171 = scmp.eq.s32.totalorder %s19, 0
    %p172 = por %p170, %p171
    %s173 = ssub.s32 %s13, %s20
    %p174 = scmp.eq.s32.totalorder %s173, 0
    %s176 = sadd.s32 %s175, 1
    %s177 = scalar_select %p174, %s175, %s176
    %p180 = pneg %p174
    %p181 = scmp.eq.s32.totalorder %s13, 1
    %p182 = por %p180, %p181
    %p183 = scmp.ne.s32.totalorder %s175, %s178
    %p184 = scmp.eq.s32.totalorder %s13, 0
    %p185 = por %p183, %p184
    %p186 = scmp.ne.s32.totalorder %s175, %s178
    %p187 = scmp.eq.s32.totalorder %s18, 1
    %p188 = por %p186, %p187
    %p189 = scmp.ne.s32.totalorder %s178, %s179
    %p190 = scmp.eq.s32.totalorder %s18, 0
    %p191 = por %p189, %p190
    %p192 = scmp.ne.s32.totalorder %s178, %s179
    %p193 = scmp.eq.s32.totalorder %s19, 1
    %p194 = por %p192, %p193
    %p196 = scmp.ne.s32.totalorder %s179, %s195
    %p197 = scmp.eq.s32.totalorder %s19, 0
    %p198 = por %p196, %p197
    %p199 = scmp.le.s32.totalorder 1, %s13
    %p200 = scmp.lt.s32.totalorder %s13, 3
    %p201 = pnand %p199, %p200
    %p202 = pneg %p201
    // Predicated region
    $region9: #{attack_model_forward.3} parent=5 // pred_check
      _
    $region10: #{attack_model_forward.3} parent=5 // pred_check_branch
      %204 = sbr.rel (%p201) target = $region12
    $region11: #{attack_model_forward.3} parent=5 // pred_region
      %s205 = ssub.s32 %s13, 1
      // Predicated region
      $region13: #{attack_model_forward.3} parent=11 // pred_check
        %p206 = pneg %p60
      $region14: #{attack_model_forward.3} parent=11 // pred_check_branch
        %208 = sbr.rel (%p206) target = $region16
      $region15: #{attack_model_forward.3} parent=11 // pred_region
        _
      $region16: #{attack_model_forward.3} parent=11 // pred_fallthru
        _
      // Predicated region
      $region17: #{attack_model_forward.3} parent=11 // pred_check
        %p209 = pneg %p81
      $region18: #{attack_model_forward.3} parent=11 // pred_check_branch
        %211 = sbr.rel (%p209) target = $region20
      $region19: #{attack_model_forward.3} parent=11 // pred_region
        _
      $region20: #{attack_model_forward.3} parent=11 // pred_fallthru
        _
      // Predicated region
      $region21: #{attack_model_forward.3} parent=11 // pred_check
        %p212 = pneg %p102
      $region22: #{attack_model_forward.3} parent=11 // pred_check_branch
        %214 = sbr.rel (%p212) target = $region24
      $region23: #{attack_model_forward.3} parent=11 // pred_region
        _
      $region24: #{attack_model_forward.3} parent=11 // pred_fallthru
        _
      // Predicated region
      $region25: #{attack_model_forward.3} parent=11 // pred_check
        %p215 = pneg %p123
      $region26: #{attack_model_forward.3} parent=11 // pred_check_branch
        %217 = sbr.rel (%p215) target = $region28
      $region27: #{attack_model_forward.3} parent=11 // pred_region
        _
      $region28: #{attack_model_forward.3} parent=11 // pred_fallthru
        _
      // Predicated region
      $region29: #{attack_model_forward.3} parent=11 // pred_check
        %p218 = pneg %p144
      $region30: #{attack_model_forward.3} parent=11 // pred_check_branch
        %220 = sbr.rel (%p218) target = $region32
      $region31: #{attack_model_forward.3} parent=11 // pred_region
        _
      $region32: #{attack_model_forward.3} parent=11 // pred_fallthru
        _
      // Predicated region
      $region33: #{attack_model_forward.3} parent=11 // pred_check
        %p221 = pneg %p165
      $region34: #{attack_model_forward.3} parent=11 // pred_check_branch
        %223 = sbr.rel (%p221) target = $region36
      $region35: #{attack_model_forward.3} parent=11 // pred_region
        _
      $region36: #{attack_model_forward.3} parent=11 // pred_fallthru
        _
    $region12: #{attack_model_forward.3} parent=5 // pred_fallthru
      _
    %p224 = scmp.lt.s32.totalorder %s13, 2
    // Predicated region
    $region37: #{attack_model_forward.3} parent=5 // pred_check
      %p225 = pneg %p224
    $region38: #{attack_model_forward.3} parent=5 // pred_check_branch
      %227 = sbr.rel (%p225) target = $region40
    $region39: #{attack_model_forward.3} parent=5 // pred_region
      // Predicated region
      $region41: #{attack_model_forward.3} parent=39 // pred_check
        %p228 = pneg %p33
      $region42: #{attack_model_forward.3} parent=39 // pred_check_branch
        %230 = sbr.rel (%p228) target = $region44
      $region43: #{attack_model_forward.3} parent=39 // pred_region
        %p231 = scmp.lt.s32.totalorder %s13, 1
        %s232 = scalar_select %p231, %s13, 1
        %s233 = smul.addr %s232, 54
        %s234 = smul.addr %s233, 8
        %s235 = scalar_lea.vmem %s0, %s234
      $region44: #{attack_model_forward.3} parent=39 // pred_fallthru
        _
    $region40: #{attack_model_forward.3} parent=5 // pred_fallthru
      _
    %p236 = scmp.le.s32.totalorder 1, %s13
    %p237 = scmp.lt.s32.totalorder %s13, 3
    %p238 = pnand %p236, %p237
    %p239 = pneg %p238
    // Predicated region
    $region45: #{attack_model_forward.3} parent=5 // pred_check
      _
    $region46: #{attack_model_forward.3} parent=5 // pred_check_branch
      %241 = sbr.rel (%p238) target = $region48
    $region47: #{attack_model_forward.3} parent=5 // pred_region
      %s242 = ssub.s32 %s13, 1
      %p243 = scmp.lt.s32.totalorder %s18, 1
      %s244 = scalar_select %p243, %s18, 1
      %s245 = smul.addr %s244, 54
      %s246 = smul.addr %s245, 8
      %s247 = scalar_lea.vmem %s0, %s246
      %p248 = pneg %p39
      %p249 = pneg %p36
      %p250 = pneg %p60
      %p251 = pneg %p57
      %p252 = pneg %p81
      %p253 = pneg %p78
      %p254 = pneg %p102
      %p255 = pneg %p99
      %p256 = pneg %p123
      %p257 = pneg %p120
      %p258 = pneg %p144
      %p259 = pneg %p141
      %p260 = pneg %p165
      %p261 = pneg %p162
      %p262 = pneg %p191
      %p263 = pneg %p188
      %p264 = scmp.lt.s32.totalorder %s18, 1
      %s265 = scalar_select %p264, %s18, 1
      %s266 = scalar_lea.vmem %s7, %s265
      %p267 = scmp.lt.s32.totalorder %s18, 1
      %s268 = scalar_select %p267, %s18, 1
      %s269 = smul.addr %s268, 54
      %s270 = smul.addr %s269, 8
      %s271 = scalar_lea.vmem %s0, %s270
      %p272 = scmp.lt.s32.totalorder %s18, 1
      %s273 = scalar_select %p272, %s18, 1
      %s274 = scalar_lea.vmem %s7, %s273
      %v276 = vld [vmem:[%s271] sm:$0xff]
      %v277 = vld [vmem:[%s271 + $0x8] sm:$0xff]
      %v278 = vld [vmem:[%s271 + $0x18] sm:$0xff]
      %v279 = vld [vmem:[%s271 + $0x20] sm:$0xff]
      %v280 = vld [vmem:[%s271 + $0x30] sm:$0xff]
      %v281 = vld [vmem:[%s271 + $0x38] sm:$0xff]
      %v282 = vld [vmem:[%s271 + $0x48] sm:$0xff]
      %v283 = vld [vmem:[%s271 + $0x50] sm:$0xff]
      %v284 = vld [vmem:[%s271 + $0x60] sm:$0xff]
      %v285 = vld [vmem:[%s271 + $0x68] sm:$0xff]
      %v286 = vld [vmem:[%s271 + $0x78] sm:$0xff]
      %v287 = vld [vmem:[%s271 + $0x80] sm:$0xff]
      %v288 = vld [vmem:[%s271 + $0x90] sm:$0xff]
      %v289 = vld [vmem:[%s271 + $0x98] sm:$0xff]
      %v290 = vld [vmem:[%s271 + $0xa8] sm:$0xff]
      %v291 = vld [vmem:[%s271 + $0xb0] sm:$0xff]
      %v292 = vld [vmem:[%s271 + $0xc0] sm:$0xff]
      %v293 = vld [vmem:[%s271 + $0xc8] sm:$0xff]
      %v294 = vld [vmem:[%s271 + $0xd8] sm:$0xff]
      %v295 = vld [vmem:[%s271 + $0xe0] sm:$0xff]
      %v296 = vld [vmem:[%s271 + $0xf0] sm:$0xff]
      %v297 = vld [vmem:[%s271 + $0xf8] sm:$0xff]
      %v298 = vld [vmem:[%s271 + $0x108] sm:$0xff]
      %v299 = vld [vmem:[%s271 + $0x110] sm:$0xff]
      %v300 = vld [vmem:[%s271 + $0x120] sm:$0xff]
      %v301 = vld [vmem:[%s271 + $0x128] sm:$0xff]
      %v302 = vld [vmem:[%s271 + $0x138] sm:$0xff]
      %v303 = vld [vmem:[%s271 + $0x140] sm:$0xff]
      %v304 = vld [vmem:[%s271 + $0x150] sm:$0xff]
      %v305 = vld [vmem:[%s271 + $0x158] sm:$0xff]
      %v306 = vld [vmem:[%s271 + $0x168] sm:$0xff]
      %v307 = vld [vmem:[%s271 + $0x170] sm:$0xff]
      %v308 = vpack.c.bf16 %v277, %v276
      %v309 = vpack.c.bf16 %v279, %v278
      %v310 = vpack.c.bf16 %v281, %v280
      %v311 = vpack.c.bf16 %v283, %v282
      %v312 = vpack.c.bf16 %v285, %v284
      %v313 = vpack.c.bf16 %v287, %v286
      %v314 = vpack.c.bf16 %v289, %v288
      %v315 = vpack.c.bf16 %v291, %v290
      %v316 = vpack.c.bf16 %v293, %v292
      %v317 = vpack.c.bf16 %v295, %v294
      %v318 = vpack.c.bf16 %v297, %v296
      %v319 = vpack.c.bf16 %v299, %v298
      %v320 = vpack.c.bf16 %v301, %v300
      %v321 = vpack.c.bf16 %v303, %v302
      %v322 = vpack.c.bf16 %v305, %v304
      %v323 = vpack.c.bf16 %v307, %v306
      %v324 = vld [vmem:[%s1] sm:$0x3]
      %v325 = vld [vmem:[%s271 + $0x1] sm:$0xff]
      %v326 = vld [vmem:[%s271 + $0x9] sm:$0xff]
      %v327 = vld [vmem:[%s271 + $0x19] sm:$0xff]
      %v328 = vld [vmem:[%s271 + $0x21] sm:$0xff]
      %v329 = vld [vmem:[%s271 + $0x31] sm:$0xff]
      %v330 = vld [vmem:[%s271 + $0x39] sm:$0xff]
      %v331 = vld [vmem:[%s271 + $0x49] sm:$0xff]
      %v332 = vld [vmem:[%s271 + $0x51] sm:$0xff]
      %v333 = vld [vmem:[%s271 + $0x61] sm:$0xff]
      %v334 = vld [vmem:[%s271 + $0x69] sm:$0xff]
      %v335 = vld [vmem:[%s271 + $0x79] sm:$0xff]
      %v336 = vld [vmem:[%s271 + $0x81] sm:$0xff]
      %v337 = vld [vmem:[%s271 + $0x91] sm:$0xff]
      %v338 = vld [vmem:[%s271 + $0x99] sm:$0xff]
      %v339 = vld [vmem:[%s271 + $0xa9] sm:$0xff]
      %v340 = vld [vmem:[%s271 + $0xb1] sm:$0xff]
      %v341 = vld [vmem:[%s271 + $0xc1] sm:$0xff]
      %v342 = vld [vmem:[%s271 + $0xc9] sm:$0xff]
      %v343 = vld [vmem:[%s271 + $0xd9] sm:$0xff]
      %v344 = vld [vmem:[%s271 + $0xe1] sm:$0xff]
      %v345 = vld [vmem:[%s271 + $0xf1] sm:$0xff]
      %v346 = vld [vmem:[%s271 + $0xf9] sm:$0xff]
      %v347 = vld [vmem:[%s271 + $0x109] sm:$0xff]
      %v348 = vld [vmem:[%s271 + $0x111] sm:$0xff]
      %v349 = vld [vmem:[%s271 + $0x121] sm:$0xff]
      %v350 = vld [vmem:[%s271 + $0x129] sm:$0xff]
      %v351 = vld [vmem:[%s271 + $0x139] sm:$0xff]
      %v352 = vld [vmem:[%s271 + $0x141] sm:$0xff]
      %v353 = vld [vmem:[%s271 + $0x151] sm:$0xff]
      %v354 = vld [vmem:[%s271 + $0x159] sm:$0xff]
      %v355 = vld [vmem:[%s271 + $0x169] sm:$0xff]
      %v356 = vld [vmem:[%s271 + $0x171] sm:$0xff]
      %v357 = vpack.c.bf16 %v326, %v325
      %v358 = vpack.c.bf16 %v328, %v327
      %v359 = vpack.c.bf16 %v330, %v329
      %v360 = vpack.c.bf16 %v332, %v331
      %v361 = vpack.c.bf16 %v334, %v333
      %v362 = vpack.c.bf16 %v336, %v335
      %v363 = vpack.c.bf16 %v338, %v337
      %v364 = vpack.c.bf16 %v340, %v339
      %v365 = vpack.c.bf16 %v342, %v341
      %v366 = vpack.c.bf16 %v344, %v343
      %v367 = vpack.c.bf16 %v346, %v345
      %v368 = vpack.c.bf16 %v348, %v347
      %v369 = vpack.c.bf16 %v350, %v349
      %v370 = vpack.c.bf16 %v352, %v351
      %v371 = vpack.c.bf16 %v354, %v353
      %v372 = vpack.c.bf16 %v356, %v355
      %s373 = scalar_lea.vmem %s1, 2
      %v374 = vld [vmem:[%s373] sm:$0x3]
      %vm375 = vcmask 23552
      %v377 = vsel %vm375, %v357, 0
      %v380 = vsel %vm375, %v358, 0
      %v383 = vsel %vm375, %v359, 0
      %v386 = vsel %vm375, %v360, 0
      %v389 = vsel %vm375, %v361, 0
      %v392 = vsel %vm375, %v362, 0
      %v395 = vsel %vm375, %v363, 0
      %v398 = vsel %vm375, %v364, 0
      %v401 = vsel %vm375, %v365, 0
      %v404 = vsel %vm375, %v366, 0
      %v407 = vsel %vm375, %v367, 0
      %v410 = vsel %vm375, %v368, 0
      %v413 = vsel %vm375, %v369, 0
      %v416 = vsel %vm375, %v370, 0
      %v419 = vsel %vm375, %v371, 0
      %v422 = vsel %vm375, %v372, 0
      %vm424 = vcmask 1040384
      %vm425 = vcmask 1041408
      %v426 = vsel %vm424, 4294967295, 65535
      %v427 = vsel %vm425, %v426, 0
      %v429 = vand.u32 %v374, %v427
      %431 = vmatprep.subr.bf16.mxu0 0
      %432 = vmatpush1.bf16.msra.mxu0 0
      %433 = vmatprep.subr.bf16.mxu0 0
      %434 = vmatpush1.bf16.msra.mxu0 0
      %435 = vmatprep.subr.bf16.mxu0 0
      %436 = vmatpush1.bf16.msra.mxu0 0
      %437 = vmatprep.subr.bf16.mxu0 0
      %438 = vmatpush1.bf16.msra.mxu0 0
      %439 = vmatprep.subr.bf16.mxu0 0
      %440 = vmatpush1.bf16.msra.mxu0 0
      %441 = vmatprep.subr.bf16.mxu0 0
      %442 = vmatpush1.bf16.msra.mxu0 0
      %443 = vmatprep.subr.bf16.mxu0 0
      %444 = vmatpush1.bf16.msra.mxu0 0
      %445 = vmatprep.subr.bf16.mxu0 0
      %446 = vmatpush1.bf16.msra.mxu0 %v429
      %447 = vmatprep.subr.bf16.mxu0 0
      %448 = vmatpush2.bf16.msra.mxu0 0
      %449 = vmatprep.subr.bf16.mxu0 0
      %450 = vmatpush2.bf16.msra.mxu0 0
      %451 = vmatprep.subr.bf16.mxu0 0
      %452 = vmatpush2.bf16.msra.mxu0 0
      %453 = vmatprep.subr.bf16.mxu0 0
      %454 = vmatpush2.bf16.msra.mxu0 0
      %455 = vmatprep.subr.bf16.mxu0 0
      %456 = vmatpush2.bf16.msra.mxu0 0
      %457 = vmatprep.subr.bf16.mxu0 0
      %458 = vmatpush2.bf16.msra.mxu0 0
      %459 = vmatprep.subr.bf16.mxu0 0
      %460 = vmatpush2.bf16.msra.mxu0 0
      %461 = vmatprep.subr.bf16.mxu0 0
      %462 = vmatpush2.bf16.msra.mxu0 0
      %463 = vmatprep.mubr.bf16.mxu0 0
      %464 = vmatmul.mubr.bf16.gmra.mxu0 %v377
      %v465 = vpop.f32.mrf.mxu0
      %v466 = vadd.f32 0.0, %v465
      %v467 = vpop.f32.mrf.mxu0
      %v468 = vpop.f32.mrf.mxu0
      %v469 = vadd.f32 0.0, %v468
      %v470 = vpop.f32.mrf.mxu0
      %471 = vmatprep.mubr.bf16.mxu0 0
      %472 = vmatmul.mubr.bf16.gmra.mxu0 %v380
      %v473 = vpop.f32.mrf.mxu0
      %v474 = vadd.f32 0.0, %v473
      %v475 = vpop.f32.mrf.mxu0
      %v476 = vpop.f32.mrf.mxu0
      %v477 = vadd.f32 0.0, %v476
      %v478 = vpop.f32.mrf.mxu0
      %479 = vmatprep.mubr.bf16.mxu0 0
      %480 = vmatmul.mubr.bf16.gmra.mxu0 %v383
      %v481 = vpop.f32.mrf.mxu0
      %v482 = vadd.f32 0.0, %v481
      %v483 = vpop.f32.mrf.mxu0
      %v484 = vpop.f32.mrf.mxu0
      %v485 = vadd.f32 0.0, %v484
      %v486 = vpop.f32.mrf.mxu0
      %487 = vmatprep.mubr.bf16.mxu0 0
      %488 = vmatmul.mubr.bf16.gmra.mxu0 %v386
      %v489 = vpop.f32.mrf.mxu0
      %v490 = vadd.f32 0.0, %v489
      %v491 = vpop.f32.mrf.mxu0
      %v492 = vpop.f32.mrf.mxu0
      %v493 = vadd.f32 0.0, %v492
      %v494 = vpop.f32.mrf.mxu0
      %495 = vmatprep.mubr.bf16.mxu0 0
      %496 = vmatmul.mubr.bf16.gmra.mxu0 %v389
      %v497 = vpop.f32.mrf.mxu0
      %v498 = vadd.f32 0.0, %v497
      %v499 = vpop.f32.mrf.mxu0
      %v500 = vpop.f32.mrf.mxu0
      %v501 = vadd.f32 0.0, %v500
      %v502 = vpop.f32.mrf.mxu0
      %503 = vmatprep.mubr.bf16.mxu0 0
      %504 = vmatmul.mubr.bf16.gmra.mxu0 %v392
      %v505 = vpop.f32.mrf.mxu0
      %v506 = vadd.f32 0.0, %v505
      %v507 = vpop.f32.mrf.mxu0
      %v508 = vpop.f32.mrf.mxu0
      %v509 = vadd.f32 0.0, %v508
      %v510 = vpop.f32.mrf.mxu0
      %511 = vmatprep.mubr.bf16.mxu0 0
      %512 = vmatmul.mubr.bf16.gmra.mxu0 %v395
      %v513 = vpop.f32.mrf.mxu0
      %v514 = vadd.f32 0.0, %v513
      %v515 = vpop.f32.mrf.mxu0
      %v516 = vpop.f32.mrf.mxu0
      %v517 = vadd.f32 0.0, %v516
      %v518 = vpop.f32.mrf.mxu0
      %519 = vmatprep.mubr.bf16.mxu0 0
      %520 = vmatmul.mubr.bf16.gmra.mxu0 %v398
      %v521 = vpop.f32.mrf.mxu0
      %v522 = vadd.f32 0.0, %v521
      %v523 = vpop.f32.mrf.mxu0
      %v524 = vpop.f32.mrf.mxu0
      %v525 = vadd.f32 0.0, %v524
      %v526 = vpop.f32.mrf.mxu0
      %527 = vmatprep.mubr.bf16.mxu0 0
      %528 = vmatmul.mubr.bf16.gmra.mxu0 %v401
      %v529 = vpop.f32.mrf.mxu0
      %v530 = vadd.f32 0.0, %v529
      %v531 = vpop.f32.mrf.mxu0
      %v532 = vpop.f32.mrf.mxu0
      %v533 = vadd.f32 0.0, %v532
      %v534 = vpop.f32.mrf.mxu0
      %535 = vmatprep.mubr.bf16.mxu0 0
      %536 = vmatmul.mubr.bf16.gmra.mxu0 %v404
      %v537 = vpop.f32.mrf.mxu0
      %v538 = vadd.f32 0.0, %v537
      %v539 = vpop.f32.mrf.mxu0
      %v540 = vpop.f32.mrf.mxu0
      %v541 = vadd.f32 0.0, %v540
      %v542 = vpop.f32.mrf.mxu0
      %543 = vmatprep.mubr.bf16.mxu0 0
      %544 = vmatmul.mubr.bf16.gmra.mxu0 %v407
      %v545 = vpop.f32.mrf.mxu0
      %v546 = vadd.f32 0.0, %v545
      %v547 = vpop.f32.mrf.mxu0
      %v548 = vpop.f32.mrf.mxu0
      %v549 = vadd.f32 0.0, %v548
      %v550 = vpop.f32.mrf.mxu0
      %551 = vmatprep.mubr.bf16.mxu0 0
      %552 = vmatmul.mubr.bf16.gmra.mxu0 %v410
      %v553 = vpop.f32.mrf.mxu0
      %v554 = vadd.f32 0.0, %v553
      %v555 = vpop.f32.mrf.mxu0
      %v556 = vpop.f32.mrf.mxu0
      %v557 = vadd.f32 0.0, %v556
      %v558 = vpop.f32.mrf.mxu0
      %559 = vmatprep.mubr.bf16.mxu0 0
      %560 = vmatmul.mubr.bf16.gmra.mxu0 %v413
      %v561 = vpop.f32.mrf.mxu0
      %v562 = vadd.f32 0.0, %v561
      %v563 = vpop.f32.mrf.mxu0
      %v564 = vpop.f32.mrf.mxu0
      %v565 = vadd.f32 0.0, %v564
      %v566 = vpop.f32.mrf.mxu0
      %567 = vmatprep.mubr.bf16.mxu0 0
      %568 = vmatmul.mubr.bf16.gmra.mxu0 %v416
      %v569 = vpop.f32.mrf.mxu0
      %v570 = vadd.f32 0.0, %v569
      %v571 = vpop.f32.mrf.mxu0
      %v572 = vpop.f32.mrf.mxu0
      %v573 = vadd.f32 0.0, %v572
      %v574 = vpop.f32.mrf.mxu0
      %575 = vmatprep.mubr.bf16.mxu0 0
      %576 = vmatmul.mubr.bf16.gmra.mxu0 %v419
      %v577 = vpop.f32.mrf.mxu0
      %v578 = vadd.f32 0.0, %v577
      %v579 = vpop.f32.mrf.mxu0
      %v580 = vpop.f32.mrf.mxu0
      %v581 = vadd.f32 0.0, %v580
      %v582 = vpop.f32.mrf.mxu0
      %583 = vmatprep.mubr.bf16.mxu0 0
      %584 = vmatmul.mubr.bf16.gmra.mxu0 %v422
      %v585 = vpop.f32.mrf.mxu0
      %v586 = vadd.f32 0.0, %v585
      %v587 = vpop.f32.mrf.mxu0
      %v588 = vpop.f32.mrf.mxu0
      %v589 = vadd.f32 0.0, %v588
      %v590 = vpop.f32.mrf.mxu0
      %591 = vdwg.mxu0
      %v593 = vsel %vm375, %v308, 0
      %v596 = vsel %vm375, %v309, 0
      %v599 = vsel %vm375, %v310, 0
      %v602 = vsel %vm375, %v311, 0
      %v605 = vsel %vm375, %v312, 0
      %v608 = vsel %vm375, %v313, 0
      %v611 = vsel %vm375, %v314, 0
      %v614 = vsel %vm375, %v315, 0
      %v617 = vsel %vm375, %v316, 0
      %v620 = vsel %vm375, %v317, 0
      %v623 = vsel %vm375, %v318, 0
      %v626 = vsel %vm375, %v319, 0
      %v629 = vsel %vm375, %v320, 0
      %v632 = vsel %vm375, %v321, 0
      %v635 = vsel %vm375, %v322, 0
      %v638 = vsel %vm375, %v323, 0
      %v641 = vand.u32 %v324, %v427
      %643 = vmatprep.subr.bf16.mxu0 0
      %644 = vmatpush1.bf16.msra.mxu0 0
      %645 = vmatprep.subr.bf16.mxu0 0
      %646 = vmatpush1.bf16.msra.mxu0 0
      %647 = vmatprep.subr.bf16.mxu0 0
      %648 = vmatpush1.bf16.msra.mxu0 0
      %649 = vmatprep.subr.bf16.mxu0 0
      %650 = vmatpush1.bf16.msra.mxu0 0
      %651 = vmatprep.subr.bf16.mxu0 0
      %652 = vmatpush1.bf16.msra.mxu0 0
      %653 = vmatprep.subr.bf16.mxu0 0
      %654 = vmatpush1.bf16.msra.mxu0 0
      %655 = vmatprep.subr.bf16.mxu0 0
      %656 = vmatpush1.bf16.msra.mxu0 0
      %657 = vmatprep.subr.bf16.mxu0 0
      %658 = vmatpush1.bf16.msra.mxu0 %v641
      %659 = vmatprep.subr.bf16.mxu0 0
      %660 = vmatpush2.bf16.msra.mxu0 0
      %661 = vmatprep.subr.bf16.mxu0 0
      %662 = vmatpush2.bf16.msra.mxu0 0
      %663 = vmatprep.subr.bf16.mxu0 0
      %664 = vmatpush2.bf16.msra.mxu0 0
      %665 = vmatprep.subr.bf16.mxu0 0
      %666 = vmatpush2.bf16.msra.mxu0 0
      %667 = vmatprep.subr.bf16.mxu0 0
      %668 = vmatpush2.bf16.msra.mxu0 0
      %669 = vmatprep.subr.bf16.mxu0 0
      %670 = vmatpush2.bf16.msra.mxu0 0
      %671 = vmatprep.subr.bf16.mxu0 0
      %672 = vmatpush2.bf16.msra.mxu0 0
      %673 = vmatprep.subr.bf16.mxu0 0
      %674 = vmatpush2.bf16.msra.mxu0 0
      %675 = vmatprep.mubr.bf16.mxu0 0
      %676 = vmatmul.mubr.bf16.gmra.mxu0 %v593
      %v677 = vpop.f32.mrf.mxu0
      %v678 = vadd.f32 %v466, %v677
      %v679 = vpop.f32.mrf.mxu0
      %v680 = vpop.f32.mrf.mxu0
      %v681 = vadd.f32 %v469, %v680
      %v682 = vpop.f32.mrf.mxu0
      %683 = vmatprep.mubr.bf16.mxu0 0
      %684 = vmatmul.mubr.bf16.gmra.mxu0 %v596
      %v685 = vpop.f32.mrf.mxu0
      %v686 = vadd.f32 %v474, %v685
      %v687 = vpop.f32.mrf.mxu0
      %v688 = vpop.f32.mrf.mxu0
      %v689 = vadd.f32 %v477, %v688
      %v690 = vpop.f32.mrf.mxu0
      %691 = vmatprep.mubr.bf16.mxu0 0
      %692 = vmatmul.mubr.bf16.gmra.mxu0 %v599
      %v693 = vpop.f32.mrf.mxu0
      %v694 = vadd.f32 %v482, %v693
      %v695 = vpop.f32.mrf.mxu0
      %v696 = vpop.f32.mrf.mxu0
      %v697 = vadd.f32 %v485, %v696
      %v698 = vpop.f32.mrf.mxu0
      %699 = vmatprep.mubr.bf16.mxu0 0
      %700 = vmatmul.mubr.bf16.gmra.mxu0 %v602
      %v701 = vpop.f32.mrf.mxu0
      %v702 = vadd.f32 %v490, %v701
      %v703 = vpop.f32.mrf.mxu0
      %v704 = vpop.f32.mrf.mxu0
      %v705 = vadd.f32 %v493, %v704
      %v706 = vpop.f32.mrf.mxu0
      %707 = vmatprep.mubr.bf16.mxu0 0
      %708 = vmatmul.mubr.bf16.gmra.mxu0 %v605
      %v709 = vpop.f32.mrf.mxu0
      %v710 = vadd.f32 %v498, %v709
      %v711 = vpop.f32.mrf.mxu0
      %v712 = vpop.f32.mrf.mxu0
      %v713 = vadd.f32 %v501, %v712
      %v714 = vpop.f32.mrf.mxu0
      %715 = vmatprep.mubr.bf16.mxu0 0
      %716 = vmatmul.mubr.bf16.gmra.mxu0 %v608
      %v717 = vpop.f32.mrf.mxu0
      %v718 = vadd.f32 %v506, %v717
      %v719 = vpop.f32.mrf.mxu0
      %v720 = vpop.f32.mrf.mxu0
      %v721 = vadd.f32 %v509, %v720
      %v722 = vpop.f32.mrf.mxu0
      %723 = vmatprep.mubr.bf16.mxu0 0
      %724 = vmatmul.mubr.bf16.gmra.mxu0 %v611
      %v725 = vpop.f32.mrf.mxu0
      %v726 = vadd.f32 %v514, %v725
      %v727 = vpop.f32.mrf.mxu0
      %v728 = vpop.f32.mrf.mxu0
      %v729 = vadd.f32 %v517, %v728
      %v730 = vpop.f32.mrf.mxu0
      %731 = vmatprep.mubr.bf16.mxu0 0
      %732 = vmatmul.mubr.bf16.gmra.mxu0 %v614
      %v733 = vpop.f32.mrf.mxu0
      %v734 = vadd.f32 %v522, %v733
      %v735 = vpop.f32.mrf.mxu0
      %v736 = vpop.f32.mrf.mxu0
      %v737 = vadd.f32 %v525, %v736
      %v738 = vpop.f32.mrf.mxu0
      %739 = vmatprep.mubr.bf16.mxu0 0
      %740 = vmatmul.mubr.bf16.gmra.mxu0 %v617
      %v741 = vpop.f32.mrf.mxu0
      %v742 = vadd.f32 %v530, %v741
      %v743 = vpop.f32.mrf.mxu0
      %v744 = vpop.f32.mrf.mxu0
      %v745 = vadd.f32 %v533, %v744
      %v746 = vpop.f32.mrf.mxu0
      %747 = vmatprep.mubr.bf16.mxu0 0
      %748 = vmatmul.mubr.bf16.gmra.mxu0 %v620
      %v749 = vpop.f32.mrf.mxu0
      %v750 = vadd.f32 %v538, %v749
      %v751 = vpop.f32.mrf.mxu0
      %v752 = vpop.f32.mrf.mxu0
      %v753 = vadd.f32 %v541, %v752
      %v754 = vpop.f32.mrf.mxu0
      %755 = vmatprep.mubr.bf16.mxu0 0
      %756 = vmatmul.mubr.bf16.gmra.mxu0 %v623
      %v757 = vpop.f32.mrf.mxu0
      %v758 = vadd.f32 %v546, %v757
      %v759 = vpop.f32.mrf.mxu0
      %v760 = vpop.f32.mrf.mxu0
      %v761 = vadd.f32 %v549, %v760
      %v762 = vpop.f32.mrf.mxu0
      %763 = vmatprep.mubr.bf16.mxu0 0
      %764 = vmatmul.mubr.bf16.gmra.mxu0 %v626
      %v765 = vpop.f32.mrf.mxu0
      %v766 = vadd.f32 %v554, %v765
      %v767 = vpop.f32.mrf.mxu0
      %v768 = vpop.f32.mrf.mxu0
      %v769 = vadd.f32 %v557, %v768
      %v770 = vpop.f32.mrf.mxu0
      %771 = vmatprep.mubr.bf16.mxu0 0
      %772 = vmatmul.mubr.bf16.gmra.mxu0 %v629
      %v773 = vpop.f32.mrf.mxu0
      %v774 = vadd.f32 %v562, %v773
      %v775 = vpop.f32.mrf.mxu0
      %v776 = vpop.f32.mrf.mxu0
      %v777 = vadd.f32 %v565, %v776
      %v778 = vpop.f32.mrf.mxu0
      %779 = vmatprep.mubr.bf16.mxu0 0
      %780 = vmatmul.mubr.bf16.gmra.mxu0 %v632
      %v781 = vpop.f32.mrf.mxu0
      %v782 = vadd.f32 %v570, %v781
      %v783 = vpop.f32.mrf.mxu0
      %v784 = vpop.f32.mrf.mxu0
      %v785 = vadd.f32 %v573, %v784
      %v786 = vpop.f32.mrf.mxu0
      %787 = vmatprep.mubr.bf16.mxu0 0
      %788 = vmatmul.mubr.bf16.gmra.mxu0 %v635
      %v789 = vpop.f32.mrf.mxu0
      %v790 = vadd.f32 %v578, %v789
      %v791 = vpop.f32.mrf.mxu0
      %v792 = vpop.f32.mrf.mxu0
      %v793 = vadd.f32 %v581, %v792
      %v794 = vpop.f32.mrf.mxu0
      %795 = vmatprep.mubr.bf16.mxu0 0
      %796 = vmatmul.mubr.bf16.gmra.mxu0 %v638
      %v797 = vpop.f32.mrf.mxu0
      %v798 = vadd.f32 %v586, %v797
      %v799 = vpop.f32.mrf.mxu0
      %v800 = vpop.f32.mrf.mxu0
      %v801 = vadd.f32 %v589, %v800
      %v802 = vpop.f32.mrf.mxu0
      %803 = vdwg.mxu0
      %v804 = vld [vmem:[%s271 + $0x2] sm:$0xff]
      %v805 = vld [vmem:[%s271 + $0xa] sm:$0xff]
      %v806 = vld [vmem:[%s271 + $0x1a] sm:$0xff]
      %v807 = vld [vmem:[%s271 + $0x22] sm:$0xff]
      %v808 = vld [vmem:[%s271 + $0x32] sm:$0xff]
      %v809 = vld [vmem:[%s271 + $0x3a] sm:$0xff]
      %v810 = vld [vmem:[%s271 + $0x4a] sm:$0xff]
      %v811 = vld [vmem:[%s271 + $0x52] sm:$0xff]
      %v812 = vld [vmem:[%s271 + $0x62] sm:$0xff]
      %v813 = vld [vmem:[%s271 + $0x6a] sm:$0xff]
      %v814 = vld [vmem:[%s271 + $0x7a] sm:$0xff]
      %v815 = vld [vmem:[%s271 + $0x82] sm:$0xff]
      %v816 = vld [vmem:[%s271 + $0x92] sm:$0xff]
      %v817 = vld [vmem:[%s271 + $0x9a] sm:$0xff]
      %v818 = vld [vmem:[%s271 + $0xaa] sm:$0xff]
      %v819 = vld [vmem:[%s271 + $0xb2] sm:$0xff]
      %v820 = vld [vmem:[%s271 + $0xc2] sm:$0xff]
      %v821 = vld [vmem:[%s271 + $0xca] sm:$0xff]
      %v822 = vld [vmem:[%s271 + $0xda] sm:$0xff]
      %v823 = vld [vmem:[%s271 + $0xe2] sm:$0xff]
      %v824 = vld [vmem:[%s271 + $0xf2] sm:$0xff]
      %v825 = vld [vmem:[%s271 + $0xfa] sm:$0xff]
      %v826 = vld [vmem:[%s271 + $0x10a] sm:$0xff]
      %v827 = vld [vmem:[%s271 + $0x112] sm:$0xff]
      %v828 = vld [vmem:[%s271 + $0x122] sm:$0xff]
      %v829 = vld [vmem:[%s271 + $0x12a] sm:$0xff]
      %v830 = vld [vmem:[%s271 + $0x13a] sm:$0xff]
      %v831 = vld [vmem:[%s271 + $0x142] sm:$0xff]
      %v832 = vld [vmem:[%s271 + $0x152] sm:$0xff]
      %v833 = vld [vmem:[%s271 + $0x15a] sm:$0xff]
      %v834 = vld [vmem:[%s271 + $0x16a] sm:$0xff]
      %v835 = vld [vmem:[%s271 + $0x172] sm:$0xff]
      %v836 = vpack.c.bf16 %v805, %v804
      %v837 = vpack.c.bf16 %v807, %v806
      %v838 = vpack.c.bf16 %v809, %v808
      %v839 = vpack.c.bf16 %v811, %v810
      %v840 = vpack.c.bf16 %v813, %v812
      %v841 = vpack.c.bf16 %v815, %v814
      %v842 = vpack.c.bf16 %v817, %v816
      %v843 = vpack.c.bf16 %v819, %v818
      %v844 = vpack.c.bf16 %v821, %v820
      %v845 = vpack.c.bf16 %v823, %v822
      %v846 = vpack.c.bf16 %v825, %v824
      %v847 = vpack.c.bf16 %v827, %v826
      %v848 = vpack.c.bf16 %v829, %v828
      %v849 = vpack.c.bf16 %v831, %v830
      %v850 = vpack.c.bf16 %v833, %v832
      %v851 = vpack.c.bf16 %v835, %v834
      %s852 = scalar_lea.vmem %s1, 4
      %v853 = vld [vmem:[%s852] sm:$0x3]
      %v855 = vsel %vm375, %v836, 0
      %v858 = vsel %vm375, %v837, 0
      %v861 = vsel %vm375, %v838, 0
      %v864 = vsel %vm375, %v839, 0
      %v867 = vsel %vm375, %v840, 0
      %v870 = vsel %vm375, %v841, 0
      %v873 = vsel %vm375, %v842, 0
      %v876 = vsel %vm375, %v843, 0
      %v879 = vsel %vm375, %v844, 0
      %v882 = vsel %vm375, %v845, 0
      %v885 = vsel %vm375, %v846, 0
      %v888 = vsel %vm375, %v847, 0
      %v891 = vsel %vm375, %v848, 0
      %v894 = vsel %vm375, %v849, 0
      %v897 = vsel %vm375, %v850, 0
      %v900 = vsel %vm375, %v851, 0
      %v903 = vand.u32 %v853, %v427
      %905 = vmatprep.subr.bf16.mxu0 0
      %906 = vmatpush1.bf16.msra.mxu0 0
      %907 = vmatprep.subr.bf16.mxu0 0
      %908 = vmatpush1.bf16.msra.mxu0 0
      %909 = vmatprep.subr.bf16.mxu0 0
      %910 = vmatpush1.bf16.msra.mxu0 0
      %911 = vmatprep.subr.bf16.mxu0 0
      %912 = vmatpush1.bf16.msra.mxu0 0
      %913 = vmatprep.subr.bf16.mxu0 0
      %914 = vmatpush1.bf16.msra.mxu0 0
      %915 = vmatprep.subr.bf16.mxu0 0
      %916 = vmatpush1.bf16.msra.mxu0 0
      %917 = vmatprep.subr.bf16.mxu0 0
      %918 = vmatpush1.bf16.msra.mxu0 0
      %919 = vmatprep.subr.bf16.mxu0 0
      %920 = vmatpush1.bf16.msra.mxu0 %v903
      %921 = vmatprep.subr.bf16.mxu0 0
      %922 = vmatpush2.bf16.msra.mxu0 0
      %923 = vmatprep.subr.bf16.mxu0 0
      %924 = vmatpush2.bf16.msra.mxu0 0
      %925 = vmatprep.subr.bf16.mxu0 0
      %926 = vmatpush2.bf16.msra.mxu0 0
      %927 = vmatprep.subr.bf16.mxu0 0
      %928 = vmatpush2.bf16.msra.mxu0 0
      %929 = vmatprep.subr.bf16.mxu0 0
      %930 = vmatpush2.bf16.msra.mxu0 0
      %931 = vmatprep.subr.bf16.mxu0 0
      %932 = vmatpush2.bf16.msra.mxu0 0
      %933 = vmatprep.subr.bf16.mxu0 0
      %934 = vmatpush2.bf16.msra.mxu0 0
      %935 = vmatprep.subr.bf16.mxu0 0
      %936 = vmatpush2.bf16.msra.mxu0 0
      %937 = vmatprep.mubr.bf16.mxu0 0
      %938 = vmatmul.mubr.bf16.gmra.mxu0 %v855
      %v939 = vpop.f32.mrf.mxu0
      %v940 = vadd.f32 0.0, %v939
      %v941 = vpop.f32.mrf.mxu0
      %v942 = vpop.f32.mrf.mxu0
      %v943 = vadd.f32 0.0, %v942
      %v944 = vpop.f32.mrf.mxu0
      %945 = vmatprep.mubr.bf16.mxu0 0
      %946 = vmatmul.mubr.bf16.gmra.mxu0 %v858
      %v947 = vpop.f32.mrf.mxu0
      %v948 = vadd.f32 0.0, %v947
      %v949 = vpop.f32.mrf.mxu0
      %v950 = vpop.f32.mrf.mxu0
      %v951 = vadd.f32 0.0, %v950
      %v952 = vpop.f32.mrf.mxu0
      %953 = vmatprep.mubr.bf16.mxu0 0
      %954 = vmatmul.mubr.bf16.gmra.mxu0 %v861
      %v955 = vpop.f32.mrf.mxu0
      %v956 = vadd.f32 0.0, %v955
      %v957 = vpop.f32.mrf.mxu0
      %v958 = vpop.f32.mrf.mxu0
      %v959 = vadd.f32 0.0, %v958
      %v960 = vpop.f32.mrf.mxu0
      %961 = vmatprep.mubr.bf16.mxu0 0
      %962 = vmatmul.mubr.bf16.gmra.mxu0 %v864
      %v963 = vpop.f32.mrf.mxu0
      %v964 = vadd.f32 0.0, %v963
      %v965 = vpop.f32.mrf.mxu0
      %v966 = vpop.f32.mrf.mxu0
      %v967 = vadd.f32 0.0, %v966
      %v968 = vpop.f32.mrf.mxu0
      %969 = vmatprep.mubr.bf16.mxu0 0
      %970 = vmatmul.mubr.bf16.gmra.mxu0 %v867
      %v971 = vpop.f32.mrf.mxu0
      %v972 = vadd.f32 0.0, %v971
      %v973 = vpop.f32.mrf.mxu0
      %v974 = vpop.f32.mrf.mxu0
      %v975 = vadd.f32 0.0, %v974
      %v976 = vpop.f32.mrf.mxu0
      %977 = vmatprep.mubr.bf16.mxu0 0
      %978 = vmatmul.mubr.bf16.gmra.mxu0 %v870
      %v979 = vpop.f32.mrf.mxu0
      %v980 = vadd.f32 0.0, %v979
      %v981 = vpop.f32.mrf.mxu0
      %v982 = vpop.f32.mrf.mxu0
      %v983 = vadd.f32 0.0, %v982
      %v984 = vpop.f32.mrf.mxu0
      %985 = vmatprep.mubr.bf16.mxu0 0
      %986 = vmatmul.mubr.bf16.gmra.mxu0 %v873
      %v987 = vpop.f32.mrf.mxu0
      %v988 = vadd.f32 0.0, %v987
      %v989 = vpop.f32.mrf.mxu0
      %v990 = vpop.f32.mrf.mxu0
      %v991 = vadd.f32 0.0, %v990
      %v992 = vpop.f32.mrf.mxu0
      %993 = vmatprep.mubr.bf16.mxu0 0
      %994 = vmatmul.mubr.bf16.gmra.mxu0 %v876
      %v995 = vpop.f32.mrf.mxu0
      %v996 = vadd.f32 0.0, %v995
      %v997 = vpop.f32.mrf.mxu0
      %v998 = vpop.f32.mrf.mxu0
      %v999 = vadd.f32 0.0, %v998
      %v1000 = vpop.f32.mrf.mxu0
      %1001 = vmatprep.mubr.bf16.mxu0 0
      %1002 = vmatmul.mubr.bf16.gmra.mxu0 %v879
      %v1003 = vpop.f32.mrf.mxu0
      %v1004 = vadd.f32 0.0, %v1003
      %v1005 = vpop.f32.mrf.mxu0
      %v1006 = vpop.f32.mrf.mxu0
      %v1007 = vadd.f32 0.0, %v1006
      %v1008 = vpop.f32.mrf.mxu0
      %1009 = vmatprep.mubr.bf16.mxu0 0
      %1010 = vmatmul.mubr.bf16.gmra.mxu0 %v882
      %v1011 = vpop.f32.mrf.mxu0
      %v1012 = vadd.f32 0.0, %v1011
      %v1013 = vpop.f32.mrf.mxu0
      %v1014 = vpop.f32.mrf.mxu0
      %v1015 = vadd.f32 0.0, %v1014
      %v1016 = vpop.f32.mrf.mxu0
      %1017 = vmatprep.mubr.bf16.mxu0 0
      %1018 = vmatmul.mubr.bf16.gmra.mxu0 %v885
      %v1019 = vpop.f32.mrf.mxu0
      %v1020 = vadd.f32 0.0, %v1019
      %v1021 = vpop.f32.mrf.mxu0
      %v1022 = vpop.f32.mrf.mxu0
      %v1023 = vadd.f32 0.0, %v1022
      %v1024 = vpop.f32.mrf.mxu0
      %1025 = vmatprep.mubr.bf16.mxu0 0
      %1026 = vmatmul.mubr.bf16.gmra.mxu0 %v888
      %v1027 = vpop.f32.mrf.mxu0
      %v1028 = vadd.f32 0.0, %v1027
      %v1029 = vpop.f32.mrf.mxu0
      %v1030 = vpop.f32.mrf.mxu0
      %v1031 = vadd.f32 0.0, %v1030
      %v1032 = vpop.f32.mrf.mxu0
      %1033 = vmatprep.mubr.bf16.mxu0 0
      %1034 = vmatmul.mubr.bf16.gmra.mxu0 %v891
      %v1035 = vpop.f32.mrf.mxu0
      %v1036 = vadd.f32 0.0, %v1035
      %v1037 = vpop.f32.mrf.mxu0
      %v1038 = vpop.f32.mrf.mxu0
      %v1039 = vadd.f32 0.0, %v1038
      %v1040 = vpop.f32.mrf.mxu0
      %1041 = vmatprep.mubr.bf16.mxu0 0
      %1042 = vmatmul.mubr.bf16.gmra.mxu0 %v894
      %v1043 = vpop.f32.mrf.mxu0
      %v1044 = vadd.f32 0.0, %v1043
      %v1045 = vpop.f32.mrf.mxu0
      %v1046 = vpop.f32.mrf.mxu0
      %v1047 = vadd.f32 0.0, %v1046
      %v1048 = vpop.f32.mrf.mxu0
      %1049 = vmatprep.mubr.bf16.mxu0 0
      %1050 = vmatmul.mubr.bf16.gmra.mxu0 %v897
      %v1051 = vpop.f32.mrf.mxu0
      %v1052 = vadd.f32 0.0, %v1051
      %v1053 = vpop.f32.mrf.mxu0
      %v1054 = vpop.f32.mrf.mxu0
      %v1055 = vadd.f32 0.0, %v1054
      %v1056 = vpop.f32.mrf.mxu0
      %1057 = vmatprep.mubr.bf16.mxu0 0
      %1058 = vmatmul.mubr.bf16.gmra.mxu0 %v900
      %v1059 = vpop.f32.mrf.mxu0
      %v1060 = vadd.f32 0.0, %v1059
      %v1061 = vpop.f32.mrf.mxu0
      %v1062 = vpop.f32.mrf.mxu0
      %v1063 = vadd.f32 0.0, %v1062
      %v1064 = vpop.f32.mrf.mxu0
      %1065 = vdwg.mxu0
      %v1066 = vadd.f32 %v678, %v940
      %v1067 = vadd.f32 %v681, %v943
      %v1068 = vadd.f32 %v686, %v948
      %v1069 = vadd.f32 %v689, %v951
      %v1070 = vadd.f32 %v694, %v956
      %v1071 = vadd.f32 %v697, %v959
      %v1072 = vadd.f32 %v702, %v964
      %v1073 = vadd.f32 %v705, %v967
      %v1074 = vadd.f32 %v710, %v972
      %v1075 = vadd.f32 %v713, %v975
      %v1076 = vadd.f32 %v718, %v980
      %v1077 = vadd.f32 %v721, %v983
      %v1078 = vadd.f32 %v726, %v988
      %v1079 = vadd.f32 %v729, %v991
      %v1080 = vadd.f32 %v734, %v996
      %v1081 = vadd.f32 %v737, %v999
      %v1082 = vadd.f32 %v742, %v1004
      %v1083 = vadd.f32 %v745, %v1007
      %v1084 = vadd.f32 %v750, %v1012
      %v1085 = vadd.f32 %v753, %v1015
      %v1086 = vadd.f32 %v758, %v1020
      %v1087 = vadd.f32 %v761, %v1023
      %v1088 = vadd.f32 %v766, %v1028
      %v1089 = vadd.f32 %v769, %v1031
      %v1090 = vadd.f32 %v774, %v1036
      %v1091 = vadd.f32 %v777, %v1039
      %v1092 = vadd.f32 %v782, %v1044
      %v1093 = vadd.f32 %v785, %v1047
      %v1094 = vadd.f32 %v790, %v1052
      %v1095 = vadd.f32 %v793, %v1055
      %v1096 = vadd.f32 %v798, %v1060
      %v1097 = vadd.f32 %v801, %v1063
      %s1098 = scalar_lea.vmem %s271, 24
      %v1099 = vld [vmem:[%s1098] sm:$0xff]
      %v1100 = vld [vmem:[%s1098 + $0x8] sm:$0xff]
      %v1101 = vld [vmem:[%s1098 + $0x18] sm:$0xff]
      %v1102 = vld [vmem:[%s1098 + $0x20] sm:$0xff]
      %v1103 = vld [vmem:[%s1098 + $0x30] sm:$0xff]
      %v1104 = vld [vmem:[%s1098 + $0x38] sm:$0xff]
      %v1105 = vld [vmem:[%s1098 + $0x48] sm:$0xff]
      %v1106 = vld [vmem:[%s1098 + $0x50] sm:$0xff]
      %v1107 = vld [vmem:[%s1098 + $0x60] sm:$0xff]
      %v1108 = vld [vmem:[%s1098 + $0x68] sm:$0xff]
      %v1109 = vld [vmem:[%s1098 + $0x78] sm:$0xff]
      %v1110 = vld [vmem:[%s1098 + $0x80] sm:$0xff]
      %v1111 = vld [vmem:[%s1098 + $0x90] sm:$0xff]
      %v1112 = vld [vmem:[%s1098 + $0x98] sm:$0xff]
      %v1113 = vld [vmem:[%s1098 + $0xa8] sm:$0xff]
      %v1114 = vld [vmem:[%s1098 + $0xb0] sm:$0xff]
      %v1115 = vld [vmem:[%s1098 + $0xc0] sm:$0xff]
      %v1116 = vld [vmem:[%s1098 + $0xc8] sm:$0xff]
      %v1117 = vld [vmem:[%s1098 + $0xd8] sm:$0xff]
      %v1118 = vld [vmem:[%s1098 + $0xe0] sm:$0xff]
      %v1119 = vld [vmem:[%s1098 + $0xf0] sm:$0xff]
      %v1120 = vld [vmem:[%s1098 + $0xf8] sm:$0xff]
      %v1121 = vld [vmem:[%s1098 + $0x108] sm:$0xff]
      %v1122 = vld [vmem:[%s1098 + $0x110] sm:$0xff]
      %v1123 = vld [vmem:[%s1098 + $0x120] sm:$0xff]
      %v1124 = vld [vmem:[%s1098 + $0x128] sm:$0xff]
      %v1125 = vld [vmem:[%s1098 + $0x138] sm:$0xff]
      %v1126 = vld [vmem:[%s1098 + $0x140] sm:$0xff]
      %v1127 = vld [vmem:[%s1098 + $0x150] sm:$0xff]
      %v1128 = vld [vmem:[%s1098 + $0x158] sm:$0xff]
      %v1129 = vld [vmem:[%s1098 + $0x168] sm:$0xff]
      %v1130 = vld [vmem:[%s1098 + $0x170] sm:$0xff]
      %v1131 = vpack.c.bf16 %v1100, %v1099
      %v1132 = vpack.c.bf16 %v1102, %v1101
      %v1133 = vpack.c.bf16 %v1104, %v1103
      %v1134 = vpack.c.bf16 %v1106, %v1105
      %v1135 = vpack.c.bf16 %v1108, %v1107
      %v1136 = vpack.c.bf16 %v1110, %v1109
      %v1137 = vpack.c.bf16 %v1112, %v1111
      %v1138 = vpack.c.bf16 %v1114, %v1113
      %v1139 = vpack.c.bf16 %v1116, %v1115
      %v1140 = vpack.c.bf16 %v1118, %v1117
      %v1141 = vpack.c.bf16 %v1120, %v1119
      %v1142 = vpack.c.bf16 %v1122, %v1121
      %v1143 = vpack.c.bf16 %v1124, %v1123
      %v1144 = vpack.c.bf16 %v1126, %v1125
      %v1145 = vpack.c.bf16 %v1128, %v1127
      %v1146 = vpack.c.bf16 %v1130, %v1129
      %s1147 = scalar_lea.vmem %s1, 6
      %v1148 = vld [vmem:[%s1147] sm:$0x3]
      %v1150 = vsel %vm375, %v1131, 0
      %v1153 = vsel %vm375, %v1132, 0
      %v1156 = vsel %vm375, %v1133, 0
      %v1159 = vsel %vm375, %v1134, 0
      %v1162 = vsel %vm375, %v1135, 0
      %v1165 = vsel %vm375, %v1136, 0
      %v1168 = vsel %vm375, %v1137, 0
      %v1171 = vsel %vm375, %v1138, 0
      %v1174 = vsel %vm375, %v1139, 0
      %v1177 = vsel %vm375, %v1140, 0
      %v1180 = vsel %vm375, %v1141, 0
      %v1183 = vsel %vm375, %v1142, 0
      %v1186 = vsel %vm375, %v1143, 0
      %v1189 = vsel %vm375, %v1144, 0
      %v1192 = vsel %vm375, %v1145, 0
      %v1195 = vsel %vm375, %v1146, 0
      %v1198 = vand.u32 %v1148, %v427
      %1200 = vmatprep.subr.bf16.mxu0 0
      %1201 = vmatpush1.bf16.msra.mxu0 0
      %1202 = vmatprep.subr.bf16.mxu0 0
      %1203 = vmatpush1.bf16.msra.mxu0 0
      %1204 = vmatprep.subr.bf16.mxu0 0
      %1205 = vmatpush1.bf16.msra.mxu0 0
      %1206 = vmatprep.subr.bf16.mxu0 0
      %1207 = vmatpush1.bf16.msra.mxu0 0
      %1208 = vmatprep.subr.bf16.mxu0 0
      %1209 = vmatpush1.bf16.msra.mxu0 0
      %1210 = vmatprep.subr.bf16.mxu0 0
      %1211 = vmatpush1.bf16.msra.mxu0 0
      %1212 = vmatprep.subr.bf16.mxu0 0
      %1213 = vmatpush1.bf16.msra.mxu0 0
      %1214 = vmatprep.subr.bf16.mxu0 0
      %1215 = vmatpush1.bf16.msra.mxu0 %v1198
      %1216 = vmatprep.subr.bf16.mxu0 0
      %1217 = vmatpush2.bf16.msra.mxu0 0
      %1218 = vmatprep.subr.bf16.mxu0 0
      %1219 = vmatpush2.bf16.msra.mxu0 0
      %1220 = vmatprep.subr.bf16.mxu0 0
      %1221 = vmatpush2.bf16.msra.mxu0 0
      %1222 = vmatprep.subr.bf16.mxu0 0
      %1223 = vmatpush2.bf16.msra.mxu0 0
      %1224 = vmatprep.subr.bf16.mxu0 0
      %1225 = vmatpush2.bf16.msra.mxu0 0
      %1226 = vmatprep.subr.bf16.mxu0 0
      %1227 = vmatpush2.bf16.msra.mxu0 0
      %1228 = vmatprep.subr.bf16.mxu0 0
      %1229 = vmatpush2.bf16.msra.mxu0 0
      %1230 = vmatprep.subr.bf16.mxu0 0
      %1231 = vmatpush2.bf16.msra.mxu0 0
      %1232 = vmatprep.mubr.bf16.mxu0 0
      %1233 = vmatmul.mubr.bf16.gmra.mxu0 %v1150
      %v1234 = vpop.f32.mrf.mxu0
      %v1235 = vadd.f32 0.0, %v1234
      %v1236 = vpop.f32.mrf.mxu0
      %v1237 = vpop.f32.mrf.mxu0
      %v1238 = vadd.f32 0.0, %v1237
      %v1239 = vpop.f32.mrf.mxu0
      %1240 = vmatprep.mubr.bf16.mxu0 0
      %1241 = vmatmul.mubr.bf16.gmra.mxu0 %v1153
      %v1242 = vpop.f32.mrf.mxu0
      %v1243 = vadd.f32 0.0, %v1242
      %v1244 = vpop.f32.mrf.mxu0
      %v1245 = vpop.f32.mrf.mxu0
      %v1246 = vadd.f32 0.0, %v1245
      %v1247 = vpop.f32.mrf.mxu0
      %1248 = vmatprep.mubr.bf16.mxu0 0
      %1249 = vmatmul.mubr.bf16.gmra.mxu0 %v1156
      %v1250 = vpop.f32.mrf.mxu0
      %v1251 = vadd.f32 0.0, %v1250
      %v1252 = vpop.f32.mrf.mxu0
      %v1253 = vpop.f32.mrf.mxu0
      %v1254 = vadd.f32 0.0, %v1253
      %v1255 = vpop.f32.mrf.mxu0
      %1256 = vmatprep.mubr.bf16.mxu0 0
      %1257 = vmatmul.mubr.bf16.gmra.mxu0 %v1159
      %v1258 = vpop.f32.mrf.mxu0
      %v1259 = vadd.f32 0.0, %v1258
      %v1260 = vpop.f32.mrf.mxu0
      %v1261 = vpop.f32.mrf.mxu0
      %v1262 = vadd.f32 0.0, %v1261
      %v1263 = vpop.f32.mrf.mxu0
      %1264 = vmatprep.mubr.bf16.mxu0 0
      %1265 = vmatmul.mubr.bf16.gmra.mxu0 %v1162
      %v1266 = vpop.f32.mrf.mxu0
      %v1267 = vadd.f32 0.0, %v1266
      %v1268 = vpop.f32.mrf.mxu0
      %v1269 = vpop.f32.mrf.mxu0
      %v1270 = vadd.f32 0.0, %v1269
      %v1271 = vpop.f32.mrf.mxu0
      %1272 = vmatprep.mubr.bf16.mxu0 0
      %1273 = vmatmul.mubr.bf16.gmra.mxu0 %v1165
      %v1274 = vpop.f32.mrf.mxu0
      %v1275 = vadd.f32 0.0, %v1274
      %v1276 = vpop.f32.mrf.mxu0
      %v1277 = vpop.f32.mrf.mxu0
      %v1278 = vadd.f32 0.0, %v1277
      %v1279 = vpop.f32.mrf.mxu0
      %1280 = vmatprep.mubr.bf16.mxu0 0
      %1281 = vmatmul.mubr.bf16.gmra.mxu0 %v1168
      %v1282 = vpop.f32.mrf.mxu0
      %v1283 = vadd.f32 0.0, %v1282
      %v1284 = vpop.f32.mrf.mxu0
      %v1285 = vpop.f32.mrf.mxu0
      %v1286 = vadd.f32 0.0, %v1285
      %v1287 = vpop.f32.mrf.mxu0
      %1288 = vmatprep.mubr.bf16.mxu0 0
      %1289 = vmatmul.mubr.bf16.gmra.mxu0 %v1171
      %v1290 = vpop.f32.mrf.mxu0
      %v1291 = vadd.f32 0.0, %v1290
      %v1292 = vpop.f32.mrf.mxu0
      %v1293 = vpop.f32.mrf.mxu0
      %v1294 = vadd.f32 0.0, %v1293
      %v1295 = vpop.f32.mrf.mxu0
      %1296 = vmatprep.mubr.bf16.mxu0 0
      %1297 = vmatmul.mubr.bf16.gmra.mxu0 %v1174
      %v1298 = vpop.f32.mrf.mxu0
      %v1299 = vadd.f32 0.0, %v1298
      %v1300 = vpop.f32.mrf.mxu0
      %v1301 = vpop.f32.mrf.mxu0
      %v1302 = vadd.f32 0.0, %v1301
      %v1303 = vpop.f32.mrf.mxu0
      %1304 = vmatprep.mubr.bf16.mxu0 0
      %1305 = vmatmul.mubr.bf16.gmra.mxu0 %v1177
      %v1306 = vpop.f32.mrf.mxu0
      %v1307 = vadd.f32 0.0, %v1306
      %v1308 = vpop.f32.mrf.mxu0
      %v1309 = vpop.f32.mrf.mxu0
      %v1310 = vadd.f32 0.0, %v1309
      %v1311 = vpop.f32.mrf.mxu0
      %1312 = vmatprep.mubr.bf16.mxu0 0
      %1313 = vmatmul.mubr.bf16.gmra.mxu0 %v1180
      %v1314 = vpop.f32.mrf.mxu0
      %v1315 = vadd.f32 0.0, %v1314
      %v1316 = vpop.f32.mrf.mxu0
      %v1317 = vpop.f32.mrf.mxu0
      %v1318 = vadd.f32 0.0, %v1317
      %v1319 = vpop.f32.mrf.mxu0
      %1320 = vmatprep.mubr.bf16.mxu0 0
      %1321 = vmatmul.mubr.bf16.gmra.mxu0 %v1183
      %v1322 = vpop.f32.mrf.mxu0
      %v1323 = vadd.f32 0.0, %v1322
      %v1324 = vpop.f32.mrf.mxu0
      %v1325 = vpop.f32.mrf.mxu0
      %v1326 = vadd.f32 0.0, %v1325
      %v1327 = vpop.f32.mrf.mxu0
      %1328 = vmatprep.mubr.bf16.mxu0 0
      %1329 = vmatmul.mubr.bf16.gmra.mxu0 %v1186
      %v1330 = vpop.f32.mrf.mxu0
      %v1331 = vadd.f32 0.0, %v1330
      %v1332 = vpop.f32.mrf.mxu0
      %v1333 = vpop.f32.mrf.mxu0
      %v1334 = vadd.f32 0.0, %v1333
      %v1335 = vpop.f32.mrf.mxu0
      %1336 = vmatprep.mubr.bf16.mxu0 0
      %1337 = vmatmul.mubr.bf16.gmra.mxu0 %v1189
      %v1338 = vpop.f32.mrf.mxu0
      %v1339 = vadd.f32 0.0, %v1338
      %v1340 = vpop.f32.mrf.mxu0
      %v1341 = vpop.f32.mrf.mxu0
      %v1342 = vadd.f32 0.0, %v1341
      %v1343 = vpop.f32.mrf.mxu0
      %1344 = vmatprep.mubr.bf16.mxu0 0
      %1345 = vmatmul.mubr.bf16.gmra.mxu0 %v1192
      %v1346 = vpop.f32.mrf.mxu0
      %v1347 = vadd.f32 0.0, %v1346
      %v1348 = vpop.f32.mrf.mxu0
      %v1349 = vpop.f32.mrf.mxu0
      %v1350 = vadd.f32 0.0, %v1349
      %v1351 = vpop.f32.mrf.mxu0
      %1352 = vmatprep.mubr.bf16.mxu0 0
      %1353 = vmatmul.mubr.bf16.gmra.mxu0 %v1195
      %v1354 = vpop.f32.mrf.mxu0
      %v1355 = vadd.f32 0.0, %v1354
      %v1356 = vpop.f32.mrf.mxu0
      %v1357 = vpop.f32.mrf.mxu0
      %v1358 = vadd.f32 0.0, %v1357
      %v1359 = vpop.f32.mrf.mxu0
      %1360 = vdwg.mxu0
      %v1361 = vadd.f32 %v1066, %v1235
      %v1362 = vadd.f32 %v1067, %v1238
      %v1363 = vadd.f32 %v1068, %v1243
      %v1364 = vadd.f32 %v1069, %v1246
      %v1365 = vadd.f32 %v1070, %v1251
      %v1366 = vadd.f32 %v1071, %v1254
      %v1367 = vadd.f32 %v1072, %v1259
      %v1368 = vadd.f32 %v1073, %v1262
      %v1369 = vadd.f32 %v1074, %v1267
      %v1370 = vadd.f32 %v1075, %v1270
      %v1371 = vadd.f32 %v1076, %v1275
      %v1372 = vadd.f32 %v1077, %v1278
      %v1373 = vadd.f32 %v1078, %v1283
      %v1374 = vadd.f32 %v1079, %v1286
      %v1375 = vadd.f32 %v1080, %v1291
      %v1376 = vadd.f32 %v1081, %v1294
      %v1377 = vadd.f32 %v1082, %v1299
      %v1378 = vadd.f32 %v1083, %v1302
      %v1379 = vadd.f32 %v1084, %v1307
      %v1380 = vadd.f32 %v1085, %v1310
      %v1381 = vadd.f32 %v1086, %v1315
      %v1382 = vadd.f32 %v1087, %v1318
      %v1383 = vadd.f32 %v1088, %v1323
      %v1384 = vadd.f32 %v1089, %v1326
      %v1385 = vadd.f32 %v1090, %v1331
      %v1386 = vadd.f32 %v1091, %v1334
      %v1387 = vadd.f32 %v1092, %v1339
      %v1388 = vadd.f32 %v1093, %v1342
      %v1389 = vadd.f32 %v1094, %v1347
      %v1390 = vadd.f32 %v1095, %v1350
      %v1391 = vadd.f32 %v1096, %v1355
      %v1392 = vadd.f32 %v1097, %v1358
      %v1393 = vld [vmem:[%s1098 + $0x1] sm:$0xff]
      %v1394 = vld [vmem:[%s1098 + $0x9] sm:$0xff]
      %v1395 = vld [vmem:[%s1098 + $0x19] sm:$0xff]
      %v1396 = vld [vmem:[%s1098 + $0x21] sm:$0xff]
      %v1397 = vld [vmem:[%s1098 + $0x31] sm:$0xff]
      %v1398 = vld [vmem:[%s1098 + $0x39] sm:$0xff]
      %v1399 = vld [vmem:[%s1098 + $0x49] sm:$0xff]
      %v1400 = vld [vmem:[%s1098 + $0x51] sm:$0xff]
      %v1401 = vld [vmem:[%s1098 + $0x61] sm:$0xff]
      %v1402 = vld [vmem:[%s1098 + $0x69] sm:$0xff]
      %v1403 = vld [vmem:[%s1098 + $0x79] sm:$0xff]
      %v1404 = vld [vmem:[%s1098 + $0x81] sm:$0xff]
      %v1405 = vld [vmem:[%s1098 + $0x91] sm:$0xff]
      %v1406 = vld [vmem:[%s1098 + $0x99] sm:$0xff]
      %v1407 = vld [vmem:[%s1098 + $0xa9] sm:$0xff]
      %v1408 = vld [vmem:[%s1098 + $0xb1] sm:$0xff]
      %v1409 = vld [vmem:[%s1098 + $0xc1] sm:$0xff]
      %v1410 = vld [vmem:[%s1098 + $0xc9] sm:$0xff]
      %v1411 = vld [vmem:[%s1098 + $0xd9] sm:$0xff]
      %v1412 = vld [vmem:[%s1098 + $0xe1] sm:$0xff]
      %v1413 = vld [vmem:[%s1098 + $0xf1] sm:$0xff]
      %v1414 = vld [vmem:[%s1098 + $0xf9] sm:$0xff]
      %v1415 = vld [vmem:[%s1098 + $0x109] sm:$0xff]
      %v1416 = vld [vmem:[%s1098 + $0x111] sm:$0xff]
      %v1417 = vld [vmem:[%s1098 + $0x121] sm:$0xff]
      %v1418 = vld [vmem:[%s1098 + $0x129] sm:$0xff]
      %v1419 = vld [vmem:[%s1098 + $0x139] sm:$0xff]
      %v1420 = vld [vmem:[%s1098 + $0x141] sm:$0xff]
      %v1421 = vld [vmem:[%s1098 + $0x151] sm:$0xff]
      %v1422 = vld [vmem:[%s1098 + $0x159] sm:$0xff]
      %v1423 = vld [vmem:[%s1098 + $0x169] sm:$0xff]
      %v1424 = vld [vmem:[%s1098 + $0x171] sm:$0xff]
      %v1425 = vpack.c.bf16 %v1394, %v1393
      %v1426 = vpack.c.bf16 %v1396, %v1395
      %v1427 = vpack.c.bf16 %v1398, %v1397
      %v1428 = vpack.c.bf16 %v1400, %v1399
      %v1429 = vpack.c.bf16 %v1402, %v1401
      %v1430 = vpack.c.bf16 %v1404, %v1403
      %v1431 = vpack.c.bf16 %v1406, %v1405
      %v1432 = vpack.c.bf16 %v1408, %v1407
      %v1433 = vpack.c.bf16 %v1410, %v1409
      %v1434 = vpack.c.bf16 %v1412, %v1411
      %v1435 = vpack.c.bf16 %v1414, %v1413
      %v1436 = vpack.c.bf16 %v1416, %v1415
      %v1437 = vpack.c.bf16 %v1418, %v1417
      %v1438 = vpack.c.bf16 %v1420, %v1419
      %v1439 = vpack.c.bf16 %v1422, %v1421
      %v1440 = vpack.c.bf16 %v1424, %v1423
      %s1441 = scalar_lea.vmem %s1, 8
      %v1442 = vld [vmem:[%s1441] sm:$0x3]
      %v1444 = vsel %vm375, %v1425, 0
      %v1447 = vsel %vm375, %v1426, 0
      %v1450 = vsel %vm375, %v1427, 0
      %v1453 = vsel %vm375, %v1428, 0
      %v1456 = vsel %vm375, %v1429, 0
      %v1459 = vsel %vm375, %v1430, 0
      %v1462 = vsel %vm375, %v1431, 0
      %v1465 = vsel %vm375, %v1432, 0
      %v1468 = vsel %vm375, %v1433, 0
      %v1471 = vsel %vm375, %v1434, 0
      %v1474 = vsel %vm375, %v1435, 0
      %v1477 = vsel %vm375, %v1436, 0
      %v1480 = vsel %vm375, %v1437, 0
      %v1483 = vsel %vm375, %v1438, 0
      %v1486 = vsel %vm375, %v1439, 0
      %v1489 = vsel %vm375, %v1440, 0
      %v1492 = vand.u32 %v1442, %v427
      %1494 = vmatprep.subr.bf16.mxu0 0
      %1495 = vmatpush1.bf16.msra.mxu0 0
      %1496 = vmatprep.subr.bf16.mxu0 0
      %1497 = vmatpush1.bf16.msra.mxu0 0
      %1498 = vmatprep.subr.bf16.mxu0 0
      %1499 = vmatpush1.bf16.msra.mxu0 0
      %1500 = vmatprep.subr.bf16.mxu0 0
      %1501 = vmatpush1.bf16.msra.mxu0 0
      %1502 = vmatprep.subr.bf16.mxu0 0
      %1503 = vmatpush1.bf16.msra.mxu0 0
      %1504 = vmatprep.subr.bf16.mxu0 0
      %1505 = vmatpush1.bf16.msra.mxu0 0
      %1506 = vmatprep.subr.bf16.mxu0 0
      %1507 = vmatpush1.bf16.msra.mxu0 0
      %1508 = vmatprep.subr.bf16.mxu0 0
      %1509 = vmatpush1.bf16.msra.mxu0 %v1492
      %1510 = vmatprep.subr.bf16.mxu0 0
      %1511 = vmatpush2.bf16.msra.mxu0 0
      %1512 = vmatprep.subr.bf16.mxu0 0
      %1513 = vmatpush2.bf16.msra.mxu0 0
      %1514 = vmatprep.subr.bf16.mxu0 0
      %1515 = vmatpush2.bf16.msra.mxu0 0
      %1516 = vmatprep.subr.bf16.mxu0 0
      %1517 = vmatpush2.bf16.msra.mxu0 0
      %1518 = vmatprep.subr.bf16.mxu0 0
      %1519 = vmatpush2.bf16.msra.mxu0 0
      %1520 = vmatprep.subr.bf16.mxu0 0
      %1521 = vmatpush2.bf16.msra.mxu0 0
      %1522 = vmatprep.subr.bf16.mxu0 0
      %1523 = vmatpush2.bf16.msra.mxu0 0
      %1524 = vmatprep.subr.bf16.mxu0 0
      %1525 = vmatpush2.bf16.msra.mxu0 0
      %1526 = vmatprep.mubr.bf16.mxu0 0
      %1527 = vmatmul.mubr.bf16.gmra.mxu0 %v1444
      %v1528 = vpop.f32.mrf.mxu0
      %v1529 = vadd.f32 0.0, %v1528
      %v1530 = vpop.f32.mrf.mxu0
      %v1531 = vpop.f32.mrf.mxu0
      %v1532 = vadd.f32 0.0, %v1531
      %v1533 = vpop.f32.mrf.mxu0
      %1534 = vmatprep.mubr.bf16.mxu0 0
      %1535 = vmatmul.mubr.bf16.gmra.mxu0 %v1447
      %v1536 = vpop.f32.mrf.mxu0
      %v1537 = vadd.f32 0.0, %v1536
      %v1538 = vpop.f32.mrf.mxu0
      %v1539 = vpop.f32.mrf.mxu0
      %v1540 = vadd.f32 0.0, %v1539
      %v1541 = vpop.f32.mrf.mxu0
      %1542 = vmatprep.mubr.bf16.mxu0 0
      %1543 = vmatmul.mubr.bf16.gmra.mxu0 %v1450
      %v1544 = vpop.f32.mrf.mxu0
      %v1545 = vadd.f32 0.0, %v1544
      %v1546 = vpop.f32.mrf.mxu0
      %v1547 = vpop.f32.mrf.mxu0
      %v1548 = vadd.f32 0.0, %v1547
      %v1549 = vpop.f32.mrf.mxu0
      %1550 = vmatprep.mubr.bf16.mxu0 0
      %1551 = vmatmul.mubr.bf16.gmra.mxu0 %v1453
      %v1552 = vpop.f32.mrf.mxu0
      %v1553 = vadd.f32 0.0, %v1552
      %v1554 = vpop.f32.mrf.mxu0
      %v1555 = vpop.f32.mrf.mxu0
      %v1556 = vadd.f32 0.0, %v1555
      %v1557 = vpop.f32.mrf.mxu0
      %1558 = vmatprep.mubr.bf16.mxu0 0
      %1559 = vmatmul.mubr.bf16.gmra.mxu0 %v1456
      %v1560 = vpop.f32.mrf.mxu0
      %v1561 = vadd.f32 0.0, %v1560
      %v1562 = vpop.f32.mrf.mxu0
      %v1563 = vpop.f32.mrf.mxu0
      %v1564 = vadd.f32 0.0, %v1563
      %v1565 = vpop.f32.mrf.mxu0
      %1566 = vmatprep.mubr.bf16.mxu0 0
      %1567 = vmatmul.mubr.bf16.gmra.mxu0 %v1459
      %v1568 = vpop.f32.mrf.mxu0
      %v1569 = vadd.f32 0.0, %v1568
      %v1570 = vpop.f32.mrf.mxu0
      %v1571 = vpop.f32.mrf.mxu0
      %v1572 = vadd.f32 0.0, %v1571
      %v1573 = vpop.f32.mrf.mxu0
      %1574 = vmatprep.mubr.bf16.mxu0 0
      %1575 = vmatmul.mubr.bf16.gmra.mxu0 %v1462
      %v1576 = vpop.f32.mrf.mxu0
      %v1577 = vadd.f32 0.0, %v1576
      %v1578 = vpop.f32.mrf.mxu0
      %v1579 = vpop.f32.mrf.mxu0
      %v1580 = vadd.f32 0.0, %v1579
      %v1581 = vpop.f32.mrf.mxu0
      %1582 = vmatprep.mubr.bf16.mxu0 0
      %1583 = vmatmul.mubr.bf16.gmra.mxu0 %v1465
      %v1584 = vpop.f32.mrf.mxu0
      %v1585 = vadd.f32 0.0, %v1584
      %v1586 = vpop.f32.mrf.mxu0
      %v1587 = vpop.f32.mrf.mxu0
      %v1588 = vadd.f32 0.0, %v1587
      %v1589 = vpop.f32.mrf.mxu0
      %1590 = vmatprep.mubr.bf16.mxu0 0
      %1591 = vmatmul.mubr.bf16.gmra.mxu0 %v1468
      %v1592 = vpop.f32.mrf.mxu0
      %v1593 = vadd.f32 0.0, %v1592
      %v1594 = vpop.f32.mrf.mxu0
      %v1595 = vpop.f32.mrf.mxu0
      %v1596 = vadd.f32 0.0, %v1595
      %v1597 = vpop.f32.mrf.mxu0
      %1598 = vmatprep.mubr.bf16.mxu0 0
      %1599 = vmatmul.mubr.bf16.gmra.mxu0 %v1471
      %v1600 = vpop.f32.mrf.mxu0
      %v1601 = vadd.f32 0.0, %v1600
      %v1602 = vpop.f32.mrf.mxu0
      %v1603 = vpop.f32.mrf.mxu0
      %v1604 = vadd.f32 0.0, %v1603
      %v1605 = vpop.f32.mrf.mxu0
      %1606 = vmatprep.mubr.bf16.mxu0 0
      %1607 = vmatmul.mubr.bf16.gmra.mxu0 %v1474
      %v1608 = vpop.f32.mrf.mxu0
      %v1609 = vadd.f32 0.0, %v1608
      %v1610 = vpop.f32.mrf.mxu0
      %v1611 = vpop.f32.mrf.mxu0
      %v1612 = vadd.f32 0.0, %v1611
      %v1613 = vpop.f32.mrf.mxu0
      %1614 = vmatprep.mubr.bf16.mxu0 0
      %1615 = vmatmul.mubr.bf16.gmra.mxu0 %v1477
      %v1616 = vpop.f32.mrf.mxu0
      %v1617 = vadd.f32 0.0, %v1616
      %v1618 = vpop.f32.mrf.mxu0
      %v1619 = vpop.f32.mrf.mxu0
      %v1620 = vadd.f32 0.0, %v1619
      %v1621 = vpop.f32.mrf.mxu0
      %1622 = vmatprep.mubr.bf16.mxu0 0
      %1623 = vmatmul.mubr.bf16.gmra.mxu0 %v1480
      %v1624 = vpop.f32.mrf.mxu0
      %v1625 = vadd.f32 0.0, %v1624
      %v1626 = vpop.f32.mrf.mxu0
      %v1627 = vpop.f32.mrf.mxu0
      %v1628 = vadd.f32 0.0, %v1627
      %v1629 = vpop.f32.mrf.mxu0
      %1630 = vmatprep.mubr.bf16.mxu0 0
      %1631 = vmatmul.mubr.bf16.gmra.mxu0 %v1483
      %v1632 = vpop.f32.mrf.mxu0
      %v1633 = vadd.f32 0.0, %v1632
      %v1634 = vpop.f32.mrf.mxu0
      %v1635 = vpop.f32.mrf.mxu0
      %v1636 = vadd.f32 0.0, %v1635
      %v1637 = vpop.f32.mrf.mxu0
      %1638 = vmatprep.mubr.bf16.mxu0 0
      %1639 = vmatmul.mubr.bf16.gmra.mxu0 %v1486
      %v1640 = vpop.f32.mrf.mxu0
      %v1641 = vadd.f32 0.0, %v1640
      %v1642 = vpop.f32.mrf.mxu0
      %v1643 = vpop.f32.mrf.mxu0
      %v1644 = vadd.f32 0.0, %v1643
      %v1645 = vpop.f32.mrf.mxu0
      %1646 = vmatprep.mubr.bf16.mxu0 0
      %1647 = vmatmul.mubr.bf16.gmra.mxu0 %v1489
      %v1648 = vpop.f32.mrf.mxu0
      %v1649 = vadd.f32 0.0, %v1648
      %v1650 = vpop.f32.mrf.mxu0
      %v1651 = vpop.f32.mrf.mxu0
      %v1652 = vadd.f32 0.0, %v1651
      %v1653 = vpop.f32.mrf.mxu0
      %1654 = vdwg.mxu0
      %v1655 = vadd.f32 %v1361, %v1529
      %v1656 = vadd.f32 %v1362, %v1532
      %v1657 = vadd.f32 %v1363, %v1537
      %v1658 = vadd.f32 %v1364, %v1540
      %v1659 = vadd.f32 %v1365, %v1545
      %v1660 = vadd.f32 %v1366, %v1548
      %v1661 = vadd.f32 %v1367, %v1553
      %v1662 = vadd.f32 %v1368, %v1556
      %v1663 = vadd.f32 %v1369, %v1561
      %v1664 = vadd.f32 %v1370, %v1564
      %v1665 = vadd.f32 %v1371, %v1569
      %v1666 = vadd.f32 %v1372, %v1572
      %v1667 = vadd.f32 %v1373, %v1577
      %v1668 = vadd.f32 %v1374, %v1580
      %v1669 = vadd.f32 %v1375, %v1585
      %v1670 = vadd.f32 %v1376, %v1588
      %v1671 = vadd.f32 %v1377, %v1593
      %v1672 = vadd.f32 %v1378, %v1596
      %v1673 = vadd.f32 %v1379, %v1601
      %v1674 = vadd.f32 %v1380, %v1604
      %v1675 = vadd.f32 %v1381, %v1609
      %v1676 = vadd.f32 %v1382, %v1612
      %v1677 = vadd.f32 %v1383, %v1617
      %v1678 = vadd.f32 %v1384, %v1620
      %v1679 = vadd.f32 %v1385, %v1625
      %v1680 = vadd.f32 %v1386, %v1628
      %v1681 = vadd.f32 %v1387, %v1633
      %v1682 = vadd.f32 %v1388, %v1636
      %v1683 = vadd.f32 %v1389, %v1641
      %v1684 = vadd.f32 %v1390, %v1644
      %v1685 = vadd.f32 %v1391, %v1649
      %v1686 = vadd.f32 %v1392, %v1652
      %v1687 = vld [vmem:[%s1098 + $0x2] sm:$0xff]
      %v1688 = vld [vmem:[%s1098 + $0xa] sm:$0xff]
      %v1689 = vld [vmem:[%s1098 + $0x1a] sm:$0xff]
      %v1690 = vld [vmem:[%s1098 + $0x22] sm:$0xff]
      %v1691 = vld [vmem:[%s1098 + $0x32] sm:$0xff]
      %v1692 = vld [vmem:[%s1098 + $0x3a] sm:$0xff]
      %v1693 = vld [vmem:[%s1098 + $0x4a] sm:$0xff]
      %v1694 = vld [vmem:[%s1098 + $0x52] sm:$0xff]
      %v1695 = vld [vmem:[%s1098 + $0x62] sm:$0xff]
      %v1696 = vld [vmem:[%s1098 + $0x6a] sm:$0xff]
      %v1697 = vld [vmem:[%s1098 + $0x7a] sm:$0xff]
      %v1698 = vld [vmem:[%s1098 + $0x82] sm:$0xff]
      %v1699 = vld [vmem:[%s1098 + $0x92] sm:$0xff]
      %v1700 = vld [vmem:[%s1098 + $0x9a] sm:$0xff]
      %v1701 = vld [vmem:[%s1098 + $0xaa] sm:$0xff]
      %v1702 = vld [vmem:[%s1098 + $0xb2] sm:$0xff]
      %v1703 = vld [vmem:[%s1098 + $0xc2] sm:$0xff]
      %v1704 = vld [vmem:[%s1098 + $0xca] sm:$0xff]
      %v1705 = vld [vmem:[%s1098 + $0xda] sm:$0xff]
      %v1706 = vld [vmem:[%s1098 + $0xe2] sm:$0xff]
      %v1707 = vld [vmem:[%s1098 + $0xf2] sm:$0xff]
      %v1708 = vld [vmem:[%s1098 + $0xfa] sm:$0xff]
      %v1709 = vld [vmem:[%s1098 + $0x10a] sm:$0xff]
      %v1710 = vld [vmem:[%s1098 + $0x112] sm:$0xff]
      %v1711 = vld [vmem:[%s1098 + $0x122] sm:$0xff]
      %v1712 = vld [vmem:[%s1098 + $0x12a] sm:$0xff]
      %v1713 = vld [vmem:[%s1098 + $0x13a] sm:$0xff]
      %v1714 = vld [vmem:[%s1098 + $0x142] sm:$0xff]
      %v1715 = vld [vmem:[%s1098 + $0x152] sm:$0xff]
      %v1716 = vld [vmem:[%s1098 + $0x15a] sm:$0xff]
      %v1717 = vld [vmem:[%s1098 + $0x16a] sm:$0xff]
      %v1718 = vld [vmem:[%s1098 + $0x172] sm:$0xff]
      %v1719 = vpack.c.bf16 %v1688, %v1687
      %v1720 = vpack.c.bf16 %v1690, %v1689
      %v1721 = vpack.c.bf16 %v1692, %v1691
      %v1722 = vpack.c.bf16 %v1694, %v1693
      %v1723 = vpack.c.bf16 %v1696, %v1695
      %v1724 = vpack.c.bf16 %v1698, %v1697
      %v1725 = vpack.c.bf16 %v1700, %v1699
      %v1726 = vpack.c.bf16 %v1702, %v1701
      %v1727 = vpack.c.bf16 %v1704, %v1703
      %v1728 = vpack.c.bf16 %v1706, %v1705
      %v1729 = vpack.c.bf16 %v1708, %v1707
      %v1730 = vpack.c.bf16 %v1710, %v1709
      %v1731 = vpack.c.bf16 %v1712, %v1711
      %v1732 = vpack.c.bf16 %v1714, %v1713
      %v1733 = vpack.c.bf16 %v1716, %v1715
      %v1734 = vpack.c.bf16 %v1718, %v1717
      %s1735 = scalar_lea.vmem %s1, 10
      %v1736 = vld [vmem:[%s1735] sm:$0x3]
      %v1738 = vsel %vm375, %v1719, 0
      %v1741 = vsel %vm375, %v1720, 0
      %v1744 = vsel %vm375, %v1721, 0
      %v1747 = vsel %vm375, %v1722, 0
      %v1750 = vsel %vm375, %v1723, 0
      %v1753 = vsel %vm375, %v1724, 0
      %v1756 = vsel %vm375, %v1725, 0
      %v1759 = vsel %vm375, %v1726, 0
      %v1762 = vsel %vm375, %v1727, 0
      %v1765 = vsel %vm375, %v1728, 0
      %v1768 = vsel %vm375, %v1729, 0
      %v1771 = vsel %vm375, %v1730, 0
      %v1774 = vsel %vm375, %v1731, 0
      %v1777 = vsel %vm375, %v1732, 0
      %v1780 = vsel %vm375, %v1733, 0
      %v1783 = vsel %vm375, %v1734, 0
      %v1786 = vand.u32 %v1736, %v427
      %1788 = vmatprep.subr.bf16.mxu0 0
      %1789 = vmatpush1.bf16.msra.mxu0 0
      %1790 = vmatprep.subr.bf16.mxu0 0
      %1791 = vmatpush1.bf16.msra.mxu0 0
      %1792 = vmatprep.subr.bf16.mxu0 0
      %1793 = vmatpush1.bf16.msra.mxu0 0
      %1794 = vmatprep.subr.bf16.mxu0 0
      %1795 = vmatpush1.bf16.msra.mxu0 0
      %1796 = vmatprep.subr.bf16.mxu0 0
      %1797 = vmatpush1.bf16.msra.mxu0 0
      %1798 = vmatprep.subr.bf16.mxu0 0
      %1799 = vmatpush1.bf16.msra.mxu0 0
      %1800 = vmatprep.subr.bf16.mxu0 0
      %1801 = vmatpush1.bf16.msra.mxu0 0
      %1802 = vmatprep.subr.bf16.mxu0 0
      %1803 = vmatpush1.bf16.msra.mxu0 %v1786
      %1804 = vmatprep.subr.bf16.mxu0 0
      %1805 = vmatpush2.bf16.msra.mxu0 0
      %1806 = vmatprep.subr.bf16.mxu0 0
      %1807 = vmatpush2.bf16.msra.mxu0 0
      %1808 = vmatprep.subr.bf16.mxu0 0
      %1809 = vmatpush2.bf16.msra.mxu0 0
      %1810 = vmatprep.subr.bf16.mxu0 0
      %1811 = vmatpush2.bf16.msra.mxu0 0
      %1812 = vmatprep.subr.bf16.mxu0 0
      %1813 = vmatpush2.bf16.msra.mxu0 0
      %1814 = vmatprep.subr.bf16.mxu0 0
      %1815 = vmatpush2.bf16.msra.mxu0 0
      %1816 = vmatprep.subr.bf16.mxu0 0
      %1817 = vmatpush2.bf16.msra.mxu0 0
      %1818 = vmatprep.subr.bf16.mxu0 0
      %1819 = vmatpush2.bf16.msra.mxu0 0
      %1820 = vmatprep.mubr.bf16.mxu0 0
      %1821 = vmatmul.mubr.bf16.gmra.mxu0 %v1738
      %v1822 = vpop.f32.mrf.mxu0
      %v1823 = vadd.f32 0.0, %v1822
      %v1824 = vpop.f32.mrf.mxu0
      %v1825 = vpop.f32.mrf.mxu0
      %v1826 = vadd.f32 0.0, %v1825
      %v1827 = vpop.f32.mrf.mxu0
      %1828 = vmatprep.mubr.bf16.mxu0 0
      %1829 = vmatmul.mubr.bf16.gmra.mxu0 %v1741
      %v1830 = vpop.f32.mrf.mxu0
      %v1831 = vadd.f32 0.0, %v1830
      %v1832 = vpop.f32.mrf.mxu0
      %v1833 = vpop.f32.mrf.mxu0
      %v1834 = vadd.f32 0.0, %v1833
      %v1835 = vpop.f32.mrf.mxu0
      %1836 = vmatprep.mubr.bf16.mxu0 0
      %1837 = vmatmul.mubr.bf16.gmra.mxu0 %v1744
      %v1838 = vpop.f32.mrf.mxu0
      %v1839 = vadd.f32 0.0, %v1838
      %v1840 = vpop.f32.mrf.mxu0
      %v1841 = vpop.f32.mrf.mxu0
      %v1842 = vadd.f32 0.0, %v1841
      %v1843 = vpop.f32.mrf.mxu0
      %1844 = vmatprep.mubr.bf16.mxu0 0
      %1845 = vmatmul.mubr.bf16.gmra.mxu0 %v1747
      %v1846 = vpop.f32.mrf.mxu0
      %v1847 = vadd.f32 0.0, %v1846
      %v1848 = vpop.f32.mrf.mxu0
      %v1849 = vpop.f32.mrf.mxu0
      %v1850 = vadd.f32 0.0, %v1849
      %v1851 = vpop.f32.mrf.mxu0
      %1852 = vmatprep.mubr.bf16.mxu0 0
      %1853 = vmatmul.mubr.bf16.gmra.mxu0 %v1750
      %v1854 = vpop.f32.mrf.mxu0
      %v1855 = vadd.f32 0.0, %v1854
      %v1856 = vpop.f32.mrf.mxu0
      %v1857 = vpop.f32.mrf.mxu0
      %v1858 = vadd.f32 0.0, %v1857
      %v1859 = vpop.f32.mrf.mxu0
      %1860 = vmatprep.mubr.bf16.mxu0 0
      %1861 = vmatmul.mubr.bf16.gmra.mxu0 %v1753
      %v1862 = vpop.f32.mrf.mxu0
      %v1863 = vadd.f32 0.0, %v1862
      %v1864 = vpop.f32.mrf.mxu0
      %v1865 = vpop.f32.mrf.mxu0
      %v1866 = vadd.f32 0.0, %v1865
      %v1867 = vpop.f32.mrf.mxu0
      %1868 = vmatprep.mubr.bf16.mxu0 0
      %1869 = vmatmul.mubr.bf16.gmra.mxu0 %v1756
      %v1870 = vpop.f32.mrf.mxu0
      %v1871 = vadd.f32 0.0, %v1870
      %v1872 = vpop.f32.mrf.mxu0
      %v1873 = vpop.f32.mrf.mxu0
      %v1874 = vadd.f32 0.0, %v1873
      %v1875 = vpop.f32.mrf.mxu0
      %1876 = vmatprep.mubr.bf16.mxu0 0
      %1877 = vmatmul.mubr.bf16.gmra.mxu0 %v1759
      %v1878 = vpop.f32.mrf.mxu0
      %v1879 = vadd.f32 0.0, %v1878
      %v1880 = vpop.f32.mrf.mxu0
      %v1881 = vpop.f32.mrf.mxu0
      %v1882 = vadd.f32 0.0, %v1881
      %v1883 = vpop.f32.mrf.mxu0
      %1884 = vmatprep.mubr.bf16.mxu0 0
      %1885 = vmatmul.mubr.bf16.gmra.mxu0 %v1762
      %v1886 = vpop.f32.mrf.mxu0
      %v1887 = vadd.f32 0.0, %v1886
      %v1888 = vpop.f32.mrf.mxu0
      %v1889 = vpop.f32.mrf.mxu0
      %v1890 = vadd.f32 0.0, %v1889
      %v1891 = vpop.f32.mrf.mxu0
      %1892 = vmatprep.mubr.bf16.mxu0 0
      %1893 = vmatmul.mubr.bf16.gmra.mxu0 %v1765
      %v1894 = vpop.f32.mrf.mxu0
      %v1895 = vadd.f32 0.0, %v1894
      %v1896 = vpop.f32.mrf.mxu0
      %v1897 = vpop.f32.mrf.mxu0
      %v1898 = vadd.f32 0.0, %v1897
      %v1899 = vpop.f32.mrf.mxu0
      %1900 = vmatprep.mubr.bf16.mxu0 0
      %1901 = vmatmul.mubr.bf16.gmra.mxu0 %v1768
      %v1902 = vpop.f32.mrf.mxu0
      %v1903 = vadd.f32 0.0, %v1902
      %v1904 = vpop.f32.mrf.mxu0
      %v1905 = vpop.f32.mrf.mxu0
      %v1906 = vadd.f32 0.0, %v1905
      %v1907 = vpop.f32.mrf.mxu0
      %1908 = vmatprep.mubr.bf16.mxu0 0
      %1909 = vmatmul.mubr.bf16.gmra.mxu0 %v1771
      %v1910 = vpop.f32.mrf.mxu0
      %v1911 = vadd.f32 0.0, %v1910
      %v1912 = vpop.f32.mrf.mxu0
      %v1913 = vpop.f32.mrf.mxu0
      %v1914 = vadd.f32 0.0, %v1913
      %v1915 = vpop.f32.mrf.mxu0
      %1916 = vmatprep.mubr.bf16.mxu0 0
      %1917 = vmatmul.mubr.bf16.gmra.mxu0 %v1774
      %v1918 = vpop.f32.mrf.mxu0
      %v1919 = vadd.f32 0.0, %v1918
      %v1920 = vpop.f32.mrf.mxu0
      %v1921 = vpop.f32.mrf.mxu0
      %v1922 = vadd.f32 0.0, %v1921
      %v1923 = vpop.f32.mrf.mxu0
      %1924 = vmatprep.mubr.bf16.mxu0 0
      %1925 = vmatmul.mubr.bf16.gmra.mxu0 %v1777
      %v1926 = vpop.f32.mrf.mxu0
      %v1927 = vadd.f32 0.0, %v1926
      %v1928 = vpop.f32.mrf.mxu0
      %v1929 = vpop.f32.mrf.mxu0
      %v1930 = vadd.f32 0.0, %v1929
      %v1931 = vpop.f32.mrf.mxu0
      %1932 = vmatprep.mubr.bf16.mxu0 0
      %1933 = vmatmul.mubr.bf16.gmra.mxu0 %v1780
      %v1934 = vpop.f32.mrf.mxu0
      %v1935 = vadd.f32 0.0, %v1934
      %v1936 = vpop.f32.mrf.mxu0
      %v1937 = vpop.f32.mrf.mxu0
      %v1938 = vadd.f32 0.0, %v1937
      %v1939 = vpop.f32.mrf.mxu0
      %1940 = vmatprep.mubr.bf16.mxu0 0
      %1941 = vmatmul.mubr.bf16.gmra.mxu0 %v1783
      %v1942 = vpop.f32.mrf.mxu0
      %v1943 = vadd.f32 0.0, %v1942
      %v1944 = vpop.f32.mrf.mxu0
      %v1945 = vpop.f32.mrf.mxu0
      %v1946 = vadd.f32 0.0, %v1945
      %v1947 = vpop.f32.mrf.mxu0
      %1948 = vdwg.mxu0
      %v1949 = vadd.f32 %v1655, %v1823
      %v1950 = vadd.f32 %v1656, %v1826
      %v1951 = vadd.f32 %v1657, %v1831
      %v1952 = vadd.f32 %v1658, %v1834
      %v1953 = vadd.f32 %v1659, %v1839
      %v1954 = vadd.f32 %v1660, %v1842
      %v1955 = vadd.f32 %v1661, %v1847
      %v1956 = vadd.f32 %v1662, %v1850
      %v1957 = vadd.f32 %v1663, %v1855
      %v1958 = vadd.f32 %v1664, %v1858
      %v1959 = vadd.f32 %v1665, %v1863
      %v1960 = vadd.f32 %v1666, %v1866
      %v1961 = vadd.f32 %v1667, %v1871
      %v1962 = vadd.f32 %v1668, %v1874
      %v1963 = vadd.f32 %v1669, %v1879
      %v1964 = vadd.f32 %v1670, %v1882
      %v1965 = vadd.f32 %v1671, %v1887
      %v1966 = vadd.f32 %v1672, %v1890
      %v1967 = vadd.f32 %v1673, %v1895
      %v1968 = vadd.f32 %v1674, %v1898
      %v1969 = vadd.f32 %v1675, %v1903
      %v1970 = vadd.f32 %v1676, %v1906
      %v1971 = vadd.f32 %v1677, %v1911
      %v1972 = vadd.f32 %v1678, %v1914
      %v1973 = vadd.f32 %v1679, %v1919
      %v1974 = vadd.f32 %v1680, %v1922
      %v1975 = vadd.f32 %v1681, %v1927
      %v1976 = vadd.f32 %v1682, %v1930
      %v1977 = vadd.f32 %v1683, %v1935
      %v1978 = vadd.f32 %v1684, %v1938
      %v1979 = vadd.f32 %v1685, %v1943
      %v1980 = vadd.f32 %v1686, %v1946
      %s1981 = scalar_lea.vmem %s271, 48
      %v1982 = vld [vmem:[%s1981] sm:$0xff]
      %v1983 = vld [vmem:[%s1981 + $0x8] sm:$0xff]
      %v1984 = vld [vmem:[%s1981 + $0x18] sm:$0xff]
      %v1985 = vld [vmem:[%s1981 + $0x20] sm:$0xff]
      %v1986 = vld [vmem:[%s1981 + $0x30] sm:$0xff]
      %v1987 = vld [vmem:[%s1981 + $0x38] sm:$0xff]
      %v1988 = vld [vmem:[%s1981 + $0x48] sm:$0xff]
      %v1989 = vld [vmem:[%s1981 + $0x50] sm:$0xff]
      %v1990 = vld [vmem:[%s1981 + $0x60] sm:$0xff]
      %v1991 = vld [vmem:[%s1981 + $0x68] sm:$0xff]
      %v1992 = vld [vmem:[%s1981 + $0x78] sm:$0xff]
      %v1993 = vld [vmem:[%s1981 + $0x80] sm:$0xff]
      %v1994 = vld [vmem:[%s1981 + $0x90] sm:$0xff]
      %v1995 = vld [vmem:[%s1981 + $0x98] sm:$0xff]
      %v1996 = vld [vmem:[%s1981 + $0xa8] sm:$0xff]
      %v1997 = vld [vmem:[%s1981 + $0xb0] sm:$0xff]
      %v1998 = vld [vmem:[%s1981 + $0xc0] sm:$0xff]
      %v1999 = vld [vmem:[%s1981 + $0xc8] sm:$0xff]
      %v2000 = vld [vmem:[%s1981 + $0xd8] sm:$0xff]
      %v2001 = vld [vmem:[%s1981 + $0xe0] sm:$0xff]
      %v2002 = vld [vmem:[%s1981 + $0xf0] sm:$0xff]
      %v2003 = vld [vmem:[%s1981 + $0xf8] sm:$0xff]
      %v2004 = vld [vmem:[%s1981 + $0x108] sm:$0xff]
      %v2005 = vld [vmem:[%s1981 + $0x110] sm:$0xff]
      %v2006 = vld [vmem:[%s1981 + $0x120] sm:$0xff]
      %v2007 = vld [vmem:[%s1981 + $0x128] sm:$0xff]
      %v2008 = vld [vmem:[%s1981 + $0x138] sm:$0xff]
      %v2009 = vld [vmem:[%s1981 + $0x140] sm:$0xff]
      %v2010 = vld [vmem:[%s1981 + $0x150] sm:$0xff]
      %v2011 = vld [vmem:[%s1981 + $0x158] sm:$0xff]
      %v2012 = vld [vmem:[%s1981 + $0x168] sm:$0xff]
      %v2013 = vld [vmem:[%s1981 + $0x170] sm:$0xff]
      %v2014 = vpack.c.bf16 %v1983, %v1982
      %v2015 = vpack.c.bf16 %v1985, %v1984
      %v2016 = vpack.c.bf16 %v1987, %v1986
      %v2017 = vpack.c.bf16 %v1989, %v1988
      %v2018 = vpack.c.bf16 %v1991, %v1990
      %v2019 = vpack.c.bf16 %v1993, %v1992
      %v2020 = vpack.c.bf16 %v1995, %v1994
      %v2021 = vpack.c.bf16 %v1997, %v1996
      %v2022 = vpack.c.bf16 %v1999, %v1998
      %v2023 = vpack.c.bf16 %v2001, %v2000
      %v2024 = vpack.c.bf16 %v2003, %v2002
      %v2025 = vpack.c.bf16 %v2005, %v2004
      %v2026 = vpack.c.bf16 %v2007, %v2006
      %v2027 = vpack.c.bf16 %v2009, %v2008
      %v2028 = vpack.c.bf16 %v2011, %v2010
      %v2029 = vpack.c.bf16 %v2013, %v2012
      %s2030 = scalar_lea.vmem %s1, 12
      %v2031 = vld [vmem:[%s2030] sm:$0x3]
      %v2033 = vsel %vm375, %v2014, 0
      %v2036 = vsel %vm375, %v2015, 0
      %v2039 = vsel %vm375, %v2016, 0
      %v2042 = vsel %vm375, %v2017, 0
      %v2045 = vsel %vm375, %v2018, 0
      %v2048 = vsel %vm375, %v2019, 0
      %v2051 = vsel %vm375, %v2020, 0
      %v2054 = vsel %vm375, %v2021, 0
      %v2057 = vsel %vm375, %v2022, 0
      %v2060 = vsel %vm375, %v2023, 0
      %v2063 = vsel %vm375, %v2024, 0
      %v2066 = vsel %vm375, %v2025, 0
      %v2069 = vsel %vm375, %v2026, 0
      %v2072 = vsel %vm375, %v2027, 0
      %v2075 = vsel %vm375, %v2028, 0
      %v2078 = vsel %vm375, %v2029, 0
      %v2081 = vand.u32 %v2031, %v427
      %2083 = vmatprep.subr.bf16.mxu0 0
      %2084 = vmatpush1.bf16.msra.mxu0 0
      %2085 = vmatprep.subr.bf16.mxu0 0
      %2086 = vmatpush1.bf16.msra.mxu0 0
      %2087 = vmatprep.subr.bf16.mxu0 0
      %2088 = vmatpush1.bf16.msra.mxu0 0
      %2089 = vmatprep.subr.bf16.mxu0 0
      %2090 = vmatpush1.bf16.msra.mxu0 0
      %2091 = vmatprep.subr.bf16.mxu0 0
      %2092 = vmatpush1.bf16.msra.mxu0 0
      %2093 = vmatprep.subr.bf16.mxu0 0
      %2094 = vmatpush1.bf16.msra.mxu0 0
      %2095 = vmatprep.subr.bf16.mxu0 0
      %2096 = vmatpush1.bf16.msra.mxu0 0
      %2097 = vmatprep.subr.bf16.mxu0 0
      %2098 = vmatpush1.bf16.msra.mxu0 %v2081
      %2099 = vmatprep.subr.bf16.mxu0 0
      %2100 = vmatpush2.bf16.msra.mxu0 0
      %2101 = vmatprep.subr.bf16.mxu0 0
      %2102 = vmatpush2.bf16.msra.mxu0 0
      %2103 = vmatprep.subr.bf16.mxu0 0
      %2104 = vmatpush2.bf16.msra.mxu0 0
      %2105 = vmatprep.subr.bf16.mxu0 0
      %2106 = vmatpush2.bf16.msra.mxu0 0
      %2107 = vmatprep.subr.bf16.mxu0 0
      %2108 = vmatpush2.bf16.msra.mxu0 0
      %2109 = vmatprep.subr.bf16.mxu0 0
      %2110 = vmatpush2.bf16.msra.mxu0 0
      %2111 = vmatprep.subr.bf16.mxu0 0
      %2112 = vmatpush2.bf16.msra.mxu0 0
      %2113 = vmatprep.subr.bf16.mxu0 0
      %2114 = vmatpush2.bf16.msra.mxu0 0
      %2115 = vmatprep.mubr.bf16.mxu0 0
      %2116 = vmatmul.mubr.bf16.gmra.mxu0 %v2033
      %v2117 = vpop.f32.mrf.mxu0
      %v2118 = vadd.f32 0.0, %v2117
      %v2119 = vpop.f32.mrf.mxu0
      %v2120 = vpop.f32.mrf.mxu0
      %v2121 = vadd.f32 0.0, %v2120
      %v2122 = vpop.f32.mrf.mxu0
      %2123 = vmatprep.mubr.bf16.mxu0 0
      %2124 = vmatmul.mubr.bf16.gmra.mxu0 %v2036
      %v2125 = vpop.f32.mrf.mxu0
      %v2126 = vadd.f32 0.0, %v2125
      %v2127 = vpop.f32.mrf.mxu0
      %v2128 = vpop.f32.mrf.mxu0
      %v2129 = vadd.f32 0.0, %v2128
      %v2130 = vpop.f32.mrf.mxu0
      %2131 = vmatprep.mubr.bf16.mxu0 0
      %2132 = vmatmul.mubr.bf16.gmra.mxu0 %v2039
      %v2133 = vpop.f32.mrf.mxu0
      %v2134 = vadd.f32 0.0, %v2133
      %v2135 = vpop.f32.mrf.mxu0
      %v2136 = vpop.f32.mrf.mxu0
      %v2137 = vadd.f32 0.0, %v2136
      %v2138 = vpop.f32.mrf.mxu0
      %2139 = vmatprep.mubr.bf16.mxu0 0
      %2140 = vmatmul.mubr.bf16.gmra.mxu0 %v2042
      %v2141 = vpop.f32.mrf.mxu0
      %v2142 = vadd.f32 0.0, %v2141
      %v2143 = vpop.f32.mrf.mxu0
      %v2144 = vpop.f32.mrf.mxu0
      %v2145 = vadd.f32 0.0, %v2144
      %v2146 = vpop.f32.mrf.mxu0
      %2147 = vmatprep.mubr.bf16.mxu0 0
      %2148 = vmatmul.mubr.bf16.gmra.mxu0 %v2045
      %v2149 = vpop.f32.mrf.mxu0
      %v2150 = vadd.f32 0.0, %v2149
      %v2151 = vpop.f32.mrf.mxu0
      %v2152 = vpop.f32.mrf.mxu0
      %v2153 = vadd.f32 0.0, %v2152
      %v2154 = vpop.f32.mrf.mxu0
      %2155 = vmatprep.mubr.bf16.mxu0 0
      %2156 = vmatmul.mubr.bf16.gmra.mxu0 %v2048
      %v2157 = vpop.f32.mrf.mxu0
      %v2158 = vadd.f32 0.0, %v2157
      %v2159 = vpop.f32.mrf.mxu0
      %v2160 = vpop.f32.mrf.mxu0
      %v2161 = vadd.f32 0.0, %v2160
      %v2162 = vpop.f32.mrf.mxu0
      %2163 = vmatprep.mubr.bf16.mxu0 0
      %2164 = vmatmul.mubr.bf16.gmra.mxu0 %v2051
      %v2165 = vpop.f32.mrf.mxu0
      %v2166 = vadd.f32 0.0, %v2165
      %v2167 = vpop.f32.mrf.mxu0
      %v2168 = vpop.f32.mrf.mxu0
      %v2169 = vadd.f32 0.0, %v2168
      %v2170 = vpop.f32.mrf.mxu0
      %2171 = vmatprep.mubr.bf16.mxu0 0
      %2172 = vmatmul.mubr.bf16.gmra.mxu0 %v2054
      %v2173 = vpop.f32.mrf.mxu0
      %v2174 = vadd.f32 0.0, %v2173
      %v2175 = vpop.f32.mrf.mxu0
      %v2176 = vpop.f32.mrf.mxu0
      %v2177 = vadd.f32 0.0, %v2176
      %v2178 = vpop.f32.mrf.mxu0
      %2179 = vmatprep.mubr.bf16.mxu0 0
      %2180 = vmatmul.mubr.bf16.gmra.mxu0 %v2057
      %v2181 = vpop.f32.mrf.mxu0
      %v2182 = vadd.f32 0.0, %v2181
      %v2183 = vpop.f32.mrf.mxu0
      %v2184 = vpop.f32.mrf.mxu0
      %v2185 = vadd.f32 0.0, %v2184
      %v2186 = vpop.f32.mrf.mxu0
      %2187 = vmatprep.mubr.bf16.mxu0 0
      %2188 = vmatmul.mubr.bf16.gmra.mxu0 %v2060
      %v2189 = vpop.f32.mrf.mxu0
      %v2190 = vadd.f32 0.0, %v2189
      %v2191 = vpop.f32.mrf.mxu0
      %v2192 = vpop.f32.mrf.mxu0
      %v2193 = vadd.f32 0.0, %v2192
      %v2194 = vpop.f32.mrf.mxu0
      %2195 = vmatprep.mubr.bf16.mxu0 0
      %2196 = vmatmul.mubr.bf16.gmra.mxu0 %v2063
      %v2197 = vpop.f32.mrf.mxu0
      %v2198 = vadd.f32 0.0, %v2197
      %v2199 = vpop.f32.mrf.mxu0
      %v2200 = vpop.f32.mrf.mxu0
      %v2201 = vadd.f32 0.0, %v2200
      %v2202 = vpop.f32.mrf.mxu0
      %2203 = vmatprep.mubr.bf16.mxu0 0
      %2204 = vmatmul.mubr.bf16.gmra.mxu0 %v2066
      %v2205 = vpop.f32.mrf.mxu0
      %v2206 = vadd.f32 0.0, %v2205
      %v2207 = vpop.f32.mrf.mxu0
      %v2208 = vpop.f32.mrf.mxu0
      %v2209 = vadd.f32 0.0, %v2208
      %v2210 = vpop.f32.mrf.mxu0
      %2211 = vmatprep.mubr.bf16.mxu0 0
      %2212 = vmatmul.mubr.bf16.gmra.mxu0 %v2069
      %v2213 = vpop.f32.mrf.mxu0
      %v2214 = vadd.f32 0.0, %v2213
      %v2215 = vpop.f32.mrf.mxu0
      %v2216 = vpop.f32.mrf.mxu0
      %v2217 = vadd.f32 0.0, %v2216
      %v2218 = vpop.f32.mrf.mxu0
      %2219 = vmatprep.mubr.bf16.mxu0 0
      %2220 = vmatmul.mubr.bf16.gmra.mxu0 %v2072
      %v2221 = vpop.f32.mrf.mxu0
      %v2222 = vadd.f32 0.0, %v2221
      %v2223 = vpop.f32.mrf.mxu0
      %v2224 = vpop.f32.mrf.mxu0
      %v2225 = vadd.f32 0.0, %v2224
      %v2226 = vpop.f32.mrf.mxu0
      %2227 = vmatprep.mubr.bf16.mxu0 0
      %2228 = vmatmul.mubr.bf16.gmra.mxu0 %v2075
      %v2229 = vpop.f32.mrf.mxu0
      %v2230 = vadd.f32 0.0, %v2229
      %v2231 = vpop.f32.mrf.mxu0
      %v2232 = vpop.f32.mrf.mxu0
      %v2233 = vadd.f32 0.0, %v2232
      %v2234 = vpop.f32.mrf.mxu0
      %2235 = vmatprep.mubr.bf16.mxu0 0
      %2236 = vmatmul.mubr.bf16.gmra.mxu0 %v2078
      %v2237 = vpop.f32.mrf.mxu0
      %v2238 = vadd.f32 0.0, %v2237
      %v2239 = vpop.f32.mrf.mxu0
      %v2240 = vpop.f32.mrf.mxu0
      %v2241 = vadd.f32 0.0, %v2240
      %v2242 = vpop.f32.mrf.mxu0
      %2243 = vdwg.mxu0
      %v2244 = vadd.f32 %v1949, %v2118
      %v2245 = vadd.f32 %v1950, %v2121
      %v2246 = vadd.f32 %v1951, %v2126
      %v2247 = vadd.f32 %v1952, %v2129
      %v2248 = vadd.f32 %v1953, %v2134
      %v2249 = vadd.f32 %v1954, %v2137
      %v2250 = vadd.f32 %v1955, %v2142
      %v2251 = vadd.f32 %v1956, %v2145
      %v2252 = vadd.f32 %v1957, %v2150
      %v2253 = vadd.f32 %v1958, %v2153
      %v2254 = vadd.f32 %v1959, %v2158
      %v2255 = vadd.f32 %v1960, %v2161
      %v2256 = vadd.f32 %v1961, %v2166
      %v2257 = vadd.f32 %v1962, %v2169
      %v2258 = vadd.f32 %v1963, %v2174
      %v2259 = vadd.f32 %v1964, %v2177
      %v2260 = vadd.f32 %v1965, %v2182
      %v2261 = vadd.f32 %v1966, %v2185
      %v2262 = vadd.f32 %v1967, %v2190
      %v2263 = vadd.f32 %v1968, %v2193
      %v2264 = vadd.f32 %v1969, %v2198
      %v2265 = vadd.f32 %v1970, %v2201
      %v2266 = vadd.f32 %v1971, %v2206
      %v2267 = vadd.f32 %v1972, %v2209
      %v2268 = vadd.f32 %v1973, %v2214
      %v2269 = vadd.f32 %v1974, %v2217
      %v2270 = vadd.f32 %v1975, %v2222
      %v2271 = vadd.f32 %v1976, %v2225
      %v2272 = vadd.f32 %v1977, %v2230
      %v2273 = vadd.f32 %v1978, %v2233
      %v2274 = vadd.f32 %v1979, %v2238
      %v2275 = vadd.f32 %v1980, %v2241
      %v2276 = vld [vmem:[%s1981 + $0x1] sm:$0xff]
      %v2277 = vld [vmem:[%s1981 + $0x9] sm:$0xff]
      %v2278 = vld [vmem:[%s1981 + $0x19] sm:$0xff]
      %v2279 = vld [vmem:[%s1981 + $0x21] sm:$0xff]
      %v2280 = vld [vmem:[%s1981 + $0x31] sm:$0xff]
      %v2281 = vld [vmem:[%s1981 + $0x39] sm:$0xff]
      %v2282 = vld [vmem:[%s1981 + $0x49] sm:$0xff]
      %v2283 = vld [vmem:[%s1981 + $0x51] sm:$0xff]
      %v2284 = vld [vmem:[%s1981 + $0x61] sm:$0xff]
      %v2285 = vld [vmem:[%s1981 + $0x69] sm:$0xff]
      %v2286 = vld [vmem:[%s1981 + $0x79] sm:$0xff]
      %v2287 = vld [vmem:[%s1981 + $0x81] sm:$0xff]
      %v2288 = vld [vmem:[%s1981 + $0x91] sm:$0xff]
      %v2289 = vld [vmem:[%s1981 + $0x99] sm:$0xff]
      %v2290 = vld [vmem:[%s1981 + $0xa9] sm:$0xff]
      %v2291 = vld [vmem:[%s1981 + $0xb1] sm:$0xff]
      %v2292 = vld [vmem:[%s1981 + $0xc1] sm:$0xff]
      %v2293 = vld [vmem:[%s1981 + $0xc9] sm:$0xff]
      %v2294 = vld [vmem:[%s1981 + $0xd9] sm:$0xff]
      %v2295 = vld [vmem:[%s1981 + $0xe1] sm:$0xff]
      %v2296 = vld [vmem:[%s1981 + $0xf1] sm:$0xff]
      %v2297 = vld [vmem:[%s1981 + $0xf9] sm:$0xff]
      %v2298 = vld [vmem:[%s1981 + $0x109] sm:$0xff]
      %v2299 = vld [vmem:[%s1981 + $0x111] sm:$0xff]
      %v2300 = vld [vmem:[%s1981 + $0x121] sm:$0xff]
      %v2301 = vld [vmem:[%s1981 + $0x129] sm:$0xff]
      %v2302 = vld [vmem:[%s1981 + $0x139] sm:$0xff]
      %v2303 = vld [vmem:[%s1981 + $0x141] sm:$0xff]
      %v2304 = vld [vmem:[%s1981 + $0x151] sm:$0xff]
      %v2305 = vld [vmem:[%s1981 + $0x159] sm:$0xff]
      %v2306 = vld [vmem:[%s1981 + $0x169] sm:$0xff]
      %v2307 = vld [vmem:[%s1981 + $0x171] sm:$0xff]
      %v2308 = vpack.c.bf16 %v2277, %v2276
      %v2309 = vpack.c.bf16 %v2279, %v2278
      %v2310 = vpack.c.bf16 %v2281, %v2280
      %v2311 = vpack.c.bf16 %v2283, %v2282
      %v2312 = vpack.c.bf16 %v2285, %v2284
      %v2313 = vpack.c.bf16 %v2287, %v2286
      %v2314 = vpack.c.bf16 %v2289, %v2288
      %v2315 = vpack.c.bf16 %v2291, %v2290
      %v2316 = vpack.c.bf16 %v2293, %v2292
      %v2317 = vpack.c.bf16 %v2295, %v2294
      %v2318 = vpack.c.bf16 %v2297, %v2296
      %v2319 = vpack.c.bf16 %v2299, %v2298
      %v2320 = vpack.c.bf16 %v2301, %v2300
      %v2321 = vpack.c.bf16 %v2303, %v2302
      %v2322 = vpack.c.bf16 %v2305, %v2304
      %v2323 = vpack.c.bf16 %v2307, %v2306
      %s2324 = scalar_lea.vmem %s1, 14
      %v2325 = vld [vmem:[%s2324] sm:$0x3]
      %v2327 = vsel %vm375, %v2308, 0
      %v2330 = vsel %vm375, %v2309, 0
      %v2333 = vsel %vm375, %v2310, 0
      %v2336 = vsel %vm375, %v2311, 0
      %v2339 = vsel %vm375, %v2312, 0
      %v2342 = vsel %vm375, %v2313, 0
      %v2345 = vsel %vm375, %v2314, 0
      %v2348 = vsel %vm375, %v2315, 0
      %v2351 = vsel %vm375, %v2316, 0
      %v2354 = vsel %vm375, %v2317, 0
      %v2357 = vsel %vm375, %v2318, 0
      %v2360 = vsel %vm375, %v2319, 0
      %v2363 = vsel %vm375, %v2320, 0
      %v2366 = vsel %vm375, %v2321, 0
      %v2369 = vsel %vm375, %v2322, 0
      %v2372 = vsel %vm375, %v2323, 0
      %v2375 = vand.u32 %v2325, %v427
      %2377 = vmatprep.subr.bf16.mxu0 0
      %2378 = vmatpush1.bf16.msra.mxu0 0
      %2379 = vmatprep.subr.bf16.mxu0 0
      %2380 = vmatpush1.bf16.msra.mxu0 0
      %2381 = vmatprep.subr.bf16.mxu0 0
      %2382 = vmatpush1.bf16.msra.mxu0 0
      %2383 = vmatprep.subr.bf16.mxu0 0
      %2384 = vmatpush1.bf16.msra.mxu0 0
      %2385 = vmatprep.subr.bf16.mxu0 0
      %2386 = vmatpush1.bf16.msra.mxu0 0
      %2387 = vmatprep.subr.bf16.mxu0 0
      %2388 = vmatpush1.bf16.msra.mxu0 0
      %2389 = vmatprep.subr.bf16.mxu0 0
      %2390 = vmatpush1.bf16.msra.mxu0 0
      %2391 = vmatprep.subr.bf16.mxu0 0
      %2392 = vmatpush1.bf16.msra.mxu0 %v2375
      %2393 = vmatprep.subr.bf16.mxu0 0
      %2394 = vmatpush2.bf16.msra.mxu0 0
      %2395 = vmatprep.subr.bf16.mxu0 0
      %2396 = vmatpush2.bf16.msra.mxu0 0
      %2397 = vmatprep.subr.bf16.mxu0 0
      %2398 = vmatpush2.bf16.msra.mxu0 0
      %2399 = vmatprep.subr.bf16.mxu0 0
      %2400 = vmatpush2.bf16.msra.mxu0 0
      %2401 = vmatprep.subr.bf16.mxu0 0
      %2402 = vmatpush2.bf16.msra.mxu0 0
      %2403 = vmatprep.subr.bf16.mxu0 0
      %2404 = vmatpush2.bf16.msra.mxu0 0
      %2405 = vmatprep.subr.bf16.mxu0 0
      %2406 = vmatpush2.bf16.msra.mxu0 0
      %2407 = vmatprep.subr.bf16.mxu0 0
      %2408 = vmatpush2.bf16.msra.mxu0 0
      %2409 = vmatprep.mubr.bf16.mxu0 0
      %2410 = vmatmul.mubr.bf16.gmra.mxu0 %v2327
      %v2411 = vpop.f32.mrf.mxu0
      %v2412 = vadd.f32 0.0, %v2411
      %v2413 = vpop.f32.mrf.mxu0
      %v2414 = vpop.f32.mrf.mxu0
      %v2415 = vadd.f32 0.0, %v2414
      %v2416 = vpop.f32.mrf.mxu0
      %2417 = vmatprep.mubr.bf16.mxu0 0
      %2418 = vmatmul.mubr.bf16.gmra.mxu0 %v2330
      %v2419 = vpop.f32.mrf.mxu0
      %v2420 = vadd.f32 0.0, %v2419
      %v2421 = vpop.f32.mrf.mxu0
      %v2422 = vpop.f32.mrf.mxu0
      %v2423 = vadd.f32 0.0, %v2422
      %v2424 = vpop.f32.mrf.mxu0
      %2425 = vmatprep.mubr.bf16.mxu0 0
      %2426 = vmatmul.mubr.bf16.gmra.mxu0 %v2333
      %v2427 = vpop.f32.mrf.mxu0
      %v2428 = vadd.f32 0.0, %v2427
      %v2429 = vpop.f32.mrf.mxu0
      %v2430 = vpop.f32.mrf.mxu0
      %v2431 = vadd.f32 0.0, %v2430
      %v2432 = vpop.f32.mrf.mxu0
      %2433 = vmatprep.mubr.bf16.mxu0 0
      %2434 = vmatmul.mubr.bf16.gmra.mxu0 %v2336
      %v2435 = vpop.f32.mrf.mxu0
      %v2436 = vadd.f32 0.0, %v2435
      %v2437 = vpop.f32.mrf.mxu0
      %v2438 = vpop.f32.mrf.mxu0
      %v2439 = vadd.f32 0.0, %v2438
      %v2440 = vpop.f32.mrf.mxu0
      %2441 = vmatprep.mubr.bf16.mxu0 0
      %2442 = vmatmul.mubr.bf16.gmra.mxu0 %v2339
      %v2443 = vpop.f32.mrf.mxu0
      %v2444 = vadd.f32 0.0, %v2443
      %v2445 = vpop.f32.mrf.mxu0
      %v2446 = vpop.f32.mrf.mxu0
      %v2447 = vadd.f32 0.0, %v2446
      %v2448 = vpop.f32.mrf.mxu0
      %2449 = vmatprep.mubr.bf16.mxu0 0
      %2450 = vmatmul.mubr.bf16.gmra.mxu0 %v2342
      %v2451 = vpop.f32.mrf.mxu0
      %v2452 = vadd.f32 0.0, %v2451
      %v2453 = vpop.f32.mrf.mxu0
      %v2454 = vpop.f32.mrf.mxu0
      %v2455 = vadd.f32 0.0, %v2454
      %v2456 = vpop.f32.mrf.mxu0
      %2457 = vmatprep.mubr.bf16.mxu0 0
      %2458 = vmatmul.mubr.bf16.gmra.mxu0 %v2345
      %v2459 = vpop.f32.mrf.mxu0
      %v2460 = vadd.f32 0.0, %v2459
      %v2461 = vpop.f32.mrf.mxu0
      %v2462 = vpop.f32.mrf.mxu0
      %v2463 = vadd.f32 0.0, %v2462
      %v2464 = vpop.f32.mrf.mxu0
      %2465 = vmatprep.mubr.bf16.mxu0 0
      %2466 = vmatmul.mubr.bf16.gmra.mxu0 %v2348
      %v2467 = vpop.f32.mrf.mxu0
      %v2468 = vadd.f32 0.0, %v2467
      %v2469 = vpop.f32.mrf.mxu0
      %v2470 = vpop.f32.mrf.mxu0
      %v2471 = vadd.f32 0.0, %v2470
      %v2472 = vpop.f32.mrf.mxu0
      %2473 = vmatprep.mubr.bf16.mxu0 0
      %2474 = vmatmul.mubr.bf16.gmra.mxu0 %v2351
      %v2475 = vpop.f32.mrf.mxu0
      %v2476 = vadd.f32 0.0, %v2475
      %v2477 = vpop.f32.mrf.mxu0
      %v2478 = vpop.f32.mrf.mxu0
      %v2479 = vadd.f32 0.0, %v2478
      %v2480 = vpop.f32.mrf.mxu0
      %2481 = vmatprep.mubr.bf16.mxu0 0
      %2482 = vmatmul.mubr.bf16.gmra.mxu0 %v2354
      %v2483 = vpop.f32.mrf.mxu0
      %v2484 = vadd.f32 0.0, %v2483
      %v2485 = vpop.f32.mrf.mxu0
      %v2486 = vpop.f32.mrf.mxu0
      %v2487 = vadd.f32 0.0, %v2486
      %v2488 = vpop.f32.mrf.mxu0
      %2489 = vmatprep.mubr.bf16.mxu0 0
      %2490 = vmatmul.mubr.bf16.gmra.mxu0 %v2357
      %v2491 = vpop.f32.mrf.mxu0
      %v2492 = vadd.f32 0.0, %v2491
      %v2493 = vpop.f32.mrf.mxu0
      %v2494 = vpop.f32.mrf.mxu0
      %v2495 = vadd.f32 0.0, %v2494
      %v2496 = vpop.f32.mrf.mxu0
      %2497 = vmatprep.mubr.bf16.mxu0 0
      %2498 = vmatmul.mubr.bf16.gmra.mxu0 %v2360
      %v2499 = vpop.f32.mrf.mxu0
      %v2500 = vadd.f32 0.0, %v2499
      %v2501 = vpop.f32.mrf.mxu0
      %v2502 = vpop.f32.mrf.mxu0
      %v2503 = vadd.f32 0.0, %v2502
      %v2504 = vpop.f32.mrf.mxu0
      %2505 = vmatprep.mubr.bf16.mxu0 0
      %2506 = vmatmul.mubr.bf16.gmra.mxu0 %v2363
      %v2507 = vpop.f32.mrf.mxu0
      %v2508 = vadd.f32 0.0, %v2507
      %v2509 = vpop.f32.mrf.mxu0
      %v2510 = vpop.f32.mrf.mxu0
      %v2511 = vadd.f32 0.0, %v2510
      %v2512 = vpop.f32.mrf.mxu0
      %2513 = vmatprep.mubr.bf16.mxu0 0
      %2514 = vmatmul.mubr.bf16.gmra.mxu0 %v2366
      %v2515 = vpop.f32.mrf.mxu0
      %v2516 = vadd.f32 0.0, %v2515
      %v2517 = vpop.f32.mrf.mxu0
      %v2518 = vpop.f32.mrf.mxu0
      %v2519 = vadd.f32 0.0, %v2518
      %v2520 = vpop.f32.mrf.mxu0
      %2521 = vmatprep.mubr.bf16.mxu0 0
      %2522 = vmatmul.mubr.bf16.gmra.mxu0 %v2369
      %v2523 = vpop.f32.mrf.mxu0
      %v2524 = vadd.f32 0.0, %v2523
      %v2525 = vpop.f32.mrf.mxu0
      %v2526 = vpop.f32.mrf.mxu0
      %v2527 = vadd.f32 0.0, %v2526
      %v2528 = vpop.f32.mrf.mxu0
      %2529 = vmatprep.mubr.bf16.mxu0 0
      %2530 = vmatmul.mubr.bf16.gmra.mxu0 %v2372
      %v2531 = vpop.f32.mrf.mxu0
      %v2532 = vadd.f32 0.0, %v2531
      %v2533 = vpop.f32.mrf.mxu0
      %v2534 = vpop.f32.mrf.mxu0
      %v2535 = vadd.f32 0.0, %v2534
      %v2536 = vpop.f32.mrf.mxu0
      %2537 = vdwg.mxu0
      %v2538 = vadd.f32 %v2244, %v2412
      %v2539 = vadd.f32 %v2245, %v2415
      %v2540 = vadd.f32 %v2246, %v2420
      %v2541 = vadd.f32 %v2247, %v2423
      %v2542 = vadd.f32 %v2248, %v2428
      %v2543 = vadd.f32 %v2249, %v2431
      %v2544 = vadd.f32 %v2250, %v2436
      %v2545 = vadd.f32 %v2251, %v2439
      %v2546 = vadd.f32 %v2252, %v2444
      %v2547 = vadd.f32 %v2253, %v2447
      %v2548 = vadd.f32 %v2254, %v2452
      %v2549 = vadd.f32 %v2255, %v2455
      %v2550 = vadd.f32 %v2256, %v2460
      %v2551 = vadd.f32 %v2257, %v2463
      %v2552 = vadd.f32 %v2258, %v2468
      %v2553 = vadd.f32 %v2259, %v2471
      %v2554 = vadd.f32 %v2260, %v2476
      %v2555 = vadd.f32 %v2261, %v2479
      %v2556 = vadd.f32 %v2262, %v2484
      %v2557 = vadd.f32 %v2263, %v2487
      %v2558 = vadd.f32 %v2264, %v2492
      %v2559 = vadd.f32 %v2265, %v2495
      %v2560 = vadd.f32 %v2266, %v2500
      %v2561 = vadd.f32 %v2267, %v2503
      %v2562 = vadd.f32 %v2268, %v2508
      %v2563 = vadd.f32 %v2269, %v2511
      %v2564 = vadd.f32 %v2270, %v2516
      %v2565 = vadd.f32 %v2271, %v2519
      %v2566 = vadd.f32 %v2272, %v2524
      %v2567 = vadd.f32 %v2273, %v2527
      %v2568 = vadd.f32 %v2274, %v2532
      %v2569 = vadd.f32 %v2275, %v2535
      %v2570 = vld [vmem:[%s1981 + $0x2] sm:$0xff]
      %v2571 = vld [vmem:[%s1981 + $0xa] sm:$0xff]
      %v2572 = vld [vmem:[%s1981 + $0x1a] sm:$0xff]
      %v2573 = vld [vmem:[%s1981 + $0x22] sm:$0xff]
      %v2574 = vld [vmem:[%s1981 + $0x32] sm:$0xff]
      %v2575 = vld [vmem:[%s1981 + $0x3a] sm:$0xff]
      %v2576 = vld [vmem:[%s1981 + $0x4a] sm:$0xff]
      %v2577 = vld [vmem:[%s1981 + $0x52] sm:$0xff]
      %v2578 = vld [vmem:[%s1981 + $0x62] sm:$0xff]
      %v2579 = vld [vmem:[%s1981 + $0x6a] sm:$0xff]
      %v2580 = vld [vmem:[%s1981 + $0x7a] sm:$0xff]
      %v2581 = vld [vmem:[%s1981 + $0x82] sm:$0xff]
      %v2582 = vld [vmem:[%s1981 + $0x92] sm:$0xff]
      %v2583 = vld [vmem:[%s1981 + $0x9a] sm:$0xff]
      %v2584 = vld [vmem:[%s1981 + $0xaa] sm:$0xff]
      %v2585 = vld [vmem:[%s1981 + $0xb2] sm:$0xff]
      %v2586 = vld [vmem:[%s1981 + $0xc2] sm:$0xff]
      %v2587 = vld [vmem:[%s1981 + $0xca] sm:$0xff]
      %v2588 = vld [vmem:[%s1981 + $0xda] sm:$0xff]
      %v2589 = vld [vmem:[%s1981 + $0xe2] sm:$0xff]
      %v2590 = vld [vmem:[%s1981 + $0xf2] sm:$0xff]
      %v2591 = vld [vmem:[%s1981 + $0xfa] sm:$0xff]
      %v2592 = vld [vmem:[%s1981 + $0x10a] sm:$0xff]
      %v2593 = vld [vmem:[%s1981 + $0x112] sm:$0xff]
      %v2594 = vld [vmem:[%s1981 + $0x122] sm:$0xff]
      %v2595 = vld [vmem:[%s1981 + $0x12a] sm:$0xff]
      %v2596 = vld [vmem:[%s1981 + $0x13a] sm:$0xff]
      %v2597 = vld [vmem:[%s1981 + $0x142] sm:$0xff]
      %v2598 = vld [vmem:[%s1981 + $0x152] sm:$0xff]
      %v2599 = vld [vmem:[%s1981 + $0x15a] sm:$0xff]
      %v2600 = vld [vmem:[%s1981 + $0x16a] sm:$0xff]
      %v2601 = vld [vmem:[%s1981 + $0x172] sm:$0xff]
      %v2602 = vpack.c.bf16 %v2571, %v2570
      %v2603 = vpack.c.bf16 %v2573, %v2572
      %v2604 = vpack.c.bf16 %v2575, %v2574
      %v2605 = vpack.c.bf16 %v2577, %v2576
      %v2606 = vpack.c.bf16 %v2579, %v2578
      %v2607 = vpack.c.bf16 %v2581, %v2580
      %v2608 = vpack.c.bf16 %v2583, %v2582
      %v2609 = vpack.c.bf16 %v2585, %v2584
      %v2610 = vpack.c.bf16 %v2587, %v2586
      %v2611 = vpack.c.bf16 %v2589, %v2588
      %v2612 = vpack.c.bf16 %v2591, %v2590
      %v2613 = vpack.c.bf16 %v2593, %v2592
      %v2614 = vpack.c.bf16 %v2595, %v2594
      %v2615 = vpack.c.bf16 %v2597, %v2596
      %v2616 = vpack.c.bf16 %v2599, %v2598
      %v2617 = vpack.c.bf16 %v2601, %v2600
      %s2618 = scalar_lea.vmem %s1, 16
      %v2619 = vld [vmem:[%s2618] sm:$0x3]
      %v2621 = vsel %vm375, %v2602, 0
      %v2624 = vsel %vm375, %v2603, 0
      %v2627 = vsel %vm375, %v2604, 0
      %v2630 = vsel %vm375, %v2605, 0
      %v2633 = vsel %vm375, %v2606, 0
      %v2636 = vsel %vm375, %v2607, 0
      %v2639 = vsel %vm375, %v2608, 0
      %v2642 = vsel %vm375, %v2609, 0
      %v2645 = vsel %vm375, %v2610, 0
      %v2648 = vsel %vm375, %v2611, 0
      %v2651 = vsel %vm375, %v2612, 0
      %v2654 = vsel %vm375, %v2613, 0
      %v2657 = vsel %vm375, %v2614, 0
      %v2660 = vsel %vm375, %v2615, 0
      %v2663 = vsel %vm375, %v2616, 0
      %v2666 = vsel %vm375, %v2617, 0
      %v2669 = vand.u32 %v2619, %v427
      %2671 = vmatprep.subr.bf16.mxu0 0
      %2672 = vmatpush1.bf16.msra.mxu0 0
      %2673 = vmatprep.subr.bf16.mxu0 0
      %2674 = vmatpush1.bf16.msra.mxu0 0
      %2675 = vmatprep.subr.bf16.mxu0 0
      %2676 = vmatpush1.bf16.msra.mxu0 0
      %2677 = vmatprep.subr.bf16.mxu0 0
      %2678 = vmatpush1.bf16.msra.mxu0 0
      %2679 = vmatprep.subr.bf16.mxu0 0
      %2680 = vmatpush1.bf16.msra.mxu0 0
      %2681 = vmatprep.subr.bf16.mxu0 0
      %2682 = vmatpush1.bf16.msra.mxu0 0
      %2683 = vmatprep.subr.bf16.mxu0 0
      %2684 = vmatpush1.bf16.msra.mxu0 0
      %2685 = vmatprep.subr.bf16.mxu0 0
      %2686 = vmatpush1.bf16.msra.mxu0 %v2669
      %2687 = vmatprep.subr.bf16.mxu0 0
      %2688 = vmatpush2.bf16.msra.mxu0 0
      %2689 = vmatprep.subr.bf16.mxu0 0
      %2690 = vmatpush2.bf16.msra.mxu0 0
      %2691 = vmatprep.subr.bf16.mxu0 0
      %2692 = vmatpush2.bf16.msra.mxu0 0
      %2693 = vmatprep.subr.bf16.mxu0 0
      %2694 = vmatpush2.bf16.msra.mxu0 0
      %2695 = vmatprep.subr.bf16.mxu0 0
      %2696 = vmatpush2.bf16.msra.mxu0 0
      %2697 = vmatprep.subr.bf16.mxu0 0
      %2698 = vmatpush2.bf16.msra.mxu0 0
      %2699 = vmatprep.subr.bf16.mxu0 0
      %2700 = vmatpush2.bf16.msra.mxu0 0
      %2701 = vmatprep.subr.bf16.mxu0 0
      %2702 = vmatpush2.bf16.msra.mxu0 0
      %2703 = vmatprep.mubr.bf16.mxu0 0
      %2704 = vmatmul.mubr.bf16.gmra.mxu0 %v2621
      %v2705 = vpop.f32.mrf.mxu0
      %v2706 = vadd.f32 0.0, %v2705
      %v2707 = vpop.f32.mrf.mxu0
      %v2708 = vpop.f32.mrf.mxu0
      %v2709 = vadd.f32 0.0, %v2708
      %v2710 = vpop.f32.mrf.mxu0
      %2711 = vmatprep.mubr.bf16.mxu0 0
      %2712 = vmatmul.mubr.bf16.gmra.mxu0 %v2624
      %v2713 = vpop.f32.mrf.mxu0
      %v2714 = vadd.f32 0.0, %v2713
      %v2715 = vpop.f32.mrf.mxu0
      %v2716 = vpop.f32.mrf.mxu0
      %v2717 = vadd.f32 0.0, %v2716
      %v2718 = vpop.f32.mrf.mxu0
      %2719 = vmatprep.mubr.bf16.mxu0 0
      %2720 = vmatmul.mubr.bf16.gmra.mxu0 %v2627
      %v2721 = vpop.f32.mrf.mxu0
      %v2722 = vadd.f32 0.0, %v2721
      %v2723 = vpop.f32.mrf.mxu0
      %v2724 = vpop.f32.mrf.mxu0
      %v2725 = vadd.f32 0.0, %v2724
      %v2726 = vpop.f32.mrf.mxu0
      %2727 = vmatprep.mubr.bf16.mxu0 0
      %2728 = vmatmul.mubr.bf16.gmra.mxu0 %v2630
      %v2729 = vpop.f32.mrf.mxu0
      %v2730 = vadd.f32 0.0, %v2729
      %v2731 = vpop.f32.mrf.mxu0
      %v2732 = vpop.f32.mrf.mxu0
      %v2733 = vadd.f32 0.0, %v2732
      %v2734 = vpop.f32.mrf.mxu0
      %2735 = vmatprep.mubr.bf16.mxu0 0
      %2736 = vmatmul.mubr.bf16.gmra.mxu0 %v2633
      %v2737 = vpop.f32.mrf.mxu0
      %v2738 = vadd.f32 0.0, %v2737
      %v2739 = vpop.f32.mrf.mxu0
      %v2740 = vpop.f32.mrf.mxu0
      %v2741 = vadd.f32 0.0, %v2740
      %v2742 = vpop.f32.mrf.mxu0
      %2743 = vmatprep.mubr.bf16.mxu0 0
      %2744 = vmatmul.mubr.bf16.gmra.mxu0 %v2636
      %v2745 = vpop.f32.mrf.mxu0
      %v2746 = vadd.f32 0.0, %v2745
      %v2747 = vpop.f32.mrf.mxu0
      %v2748 = vpop.f32.mrf.mxu0
      %v2749 = vadd.f32 0.0, %v2748
      %v2750 = vpop.f32.mrf.mxu0
      %2751 = vmatprep.mubr.bf16.mxu0 0
      %2752 = vmatmul.mubr.bf16.gmra.mxu0 %v2639
      %v2753 = vpop.f32.mrf.mxu0
      %v2754 = vadd.f32 0.0, %v2753
      %v2755 = vpop.f32.mrf.mxu0
      %v2756 = vpop.f32.mrf.mxu0
      %v2757 = vadd.f32 0.0, %v2756
      %v2758 = vpop.f32.mrf.mxu0
      %2759 = vmatprep.mubr.bf16.mxu0 0
      %2760 = vmatmul.mubr.bf16.gmra.mxu0 %v2642
      %v2761 = vpop.f32.mrf.mxu0
      %v2762 = vadd.f32 0.0, %v2761
      %v2763 = vpop.f32.mrf.mxu0
      %v2764 = vpop.f32.mrf.mxu0
      %v2765 = vadd.f32 0.0, %v2764
      %v2766 = vpop.f32.mrf.mxu0
      %2767 = vmatprep.mubr.bf16.mxu0 0
      %2768 = vmatmul.mubr.bf16.gmra.mxu0 %v2645
      %v2769 = vpop.f32.mrf.mxu0
      %v2770 = vadd.f32 0.0, %v2769
      %v2771 = vpop.f32.mrf.mxu0
      %v2772 = vpop.f32.mrf.mxu0
      %v2773 = vadd.f32 0.0, %v2772
      %v2774 = vpop.f32.mrf.mxu0
      %2775 = vmatprep.mubr.bf16.mxu0 0
      %2776 = vmatmul.mubr.bf16.gmra.mxu0 %v2648
      %v2777 = vpop.f32.mrf.mxu0
      %v2778 = vadd.f32 0.0, %v2777
      %v2779 = vpop.f32.mrf.mxu0
      %v2780 = vpop.f32.mrf.mxu0
      %v2781 = vadd.f32 0.0, %v2780
      %v2782 = vpop.f32.mrf.mxu0
      %2783 = vmatprep.mubr.bf16.mxu0 0
      %2784 = vmatmul.mubr.bf16.gmra.mxu0 %v2651
      %v2785 = vpop.f32.mrf.mxu0
      %v2786 = vadd.f32 0.0, %v2785
      %v2787 = vpop.f32.mrf.mxu0
      %v2788 = vpop.f32.mrf.mxu0
      %v2789 = vadd.f32 0.0, %v2788
      %v2790 = vpop.f32.mrf.mxu0
      %2791 = vmatprep.mubr.bf16.mxu0 0
      %2792 = vmatmul.mubr.bf16.gmra.mxu0 %v2654
      %v2793 = vpop.f32.mrf.mxu0
      %v2794 = vadd.f32 0.0, %v2793
      %v2795 = vpop.f32.mrf.mxu0
      %v2796 = vpop.f32.mrf.mxu0
      %v2797 = vadd.f32 0.0, %v2796
      %v2798 = vpop.f32.mrf.mxu0
      %2799 = vmatprep.mubr.bf16.mxu0 0
      %2800 = vmatmul.mubr.bf16.gmra.mxu0 %v2657
      %v2801 = vpop.f32.mrf.mxu0
      %v2802 = vadd.f32 0.0, %v2801
      %v2803 = vpop.f32.mrf.mxu0
      %v2804 = vpop.f32.mrf.mxu0
      %v2805 = vadd.f32 0.0, %v2804
      %v2806 = vpop.f32.mrf.mxu0
      %2807 = vmatprep.mubr.bf16.mxu0 0
      %2808 = vmatmul.mubr.bf16.gmra.mxu0 %v2660
      %v2809 = vpop.f32.mrf.mxu0
      %v2810 = vadd.f32 0.0, %v2809
      %v2811 = vpop.f32.mrf.mxu0
      %v2812 = vpop.f32.mrf.mxu0
      %v2813 = vadd.f32 0.0, %v2812
      %v2814 = vpop.f32.mrf.mxu0
      %2815 = vmatprep.mubr.bf16.mxu0 0
      %2816 = vmatmul.mubr.bf16.gmra.mxu0 %v2663
      %v2817 = vpop.f32.mrf.mxu0
      %v2818 = vadd.f32 0.0, %v2817
      %v2819 = vpop.f32.mrf.mxu0
      %v2820 = vpop.f32.mrf.mxu0
      %v2821 = vadd.f32 0.0, %v2820
      %v2822 = vpop.f32.mrf.mxu0
      %2823 = vmatprep.mubr.bf16.mxu0 0
      %2824 = vmatmul.mubr.bf16.gmra.mxu0 %v2666
      %v2825 = vpop.f32.mrf.mxu0
      %v2826 = vadd.f32 0.0, %v2825
      %v2827 = vpop.f32.mrf.mxu0
      %v2828 = vpop.f32.mrf.mxu0
      %v2829 = vadd.f32 0.0, %v2828
      %v2830 = vpop.f32.mrf.mxu0
      %2831 = vdwg.mxu0
      %v2832 = vadd.f32 %v2538, %v2706
      %v2833 = vadd.f32 %v2539, %v2709
      %v2834 = vadd.f32 %v2540, %v2714
      %v2835 = vadd.f32 %v2541, %v2717
      %v2836 = vadd.f32 %v2542, %v2722
      %v2837 = vadd.f32 %v2543, %v2725
      %v2838 = vadd.f32 %v2544, %v2730
      %v2839 = vadd.f32 %v2545, %v2733
      %v2840 = vadd.f32 %v2546, %v2738
      %v2841 = vadd.f32 %v2547, %v2741
      %v2842 = vadd.f32 %v2548, %v2746
      %v2843 = vadd.f32 %v2549, %v2749
      %v2844 = vadd.f32 %v2550, %v2754
      %v2845 = vadd.f32 %v2551, %v2757
      %v2846 = vadd.f32 %v2552, %v2762
      %v2847 = vadd.f32 %v2553, %v2765
      %v2848 = vadd.f32 %v2554, %v2770
      %v2849 = vadd.f32 %v2555, %v2773
      %v2850 = vadd.f32 %v2556, %v2778
      %v2851 = vadd.f32 %v2557, %v2781
      %v2852 = vadd.f32 %v2558, %v2786
      %v2853 = vadd.f32 %v2559, %v2789
      %v2854 = vadd.f32 %v2560, %v2794
      %v2855 = vadd.f32 %v2561, %v2797
      %v2856 = vadd.f32 %v2562, %v2802
      %v2857 = vadd.f32 %v2563, %v2805
      %v2858 = vadd.f32 %v2564, %v2810
      %v2859 = vadd.f32 %v2565, %v2813
      %v2860 = vadd.f32 %v2566, %v2818
      %v2861 = vadd.f32 %v2567, %v2821
      %v2862 = vadd.f32 %v2568, %v2826
      %v2863 = vadd.f32 %v2569, %v2829
      %v2864 = vld [vmem:[%s2] sm:$0x1]
      %v2866 = vlaneseq
      %v2867 = vshrl.u32 %v2866, 7
      %v2868 = vsub.s32 0, %v2867
      %v2869 = vrot.slane %v2864, %v2868
      %v2871 = vadd.f32 %v2832, %v2869
      %v2872 = vadd.f32 %v2833, %v2869
      %v2873 = vadd.f32 %v2834, %v2869
      %v2874 = vadd.f32 %v2835, %v2869
      %v2875 = vadd.f32 %v2836, %v2869
      %v2876 = vadd.f32 %v2837, %v2869
      %v2877 = vadd.f32 %v2838, %v2869
      %v2878 = vadd.f32 %v2839, %v2869
      %v2879 = vadd.f32 %v2840, %v2869
      %v2880 = vadd.f32 %v2841, %v2869
      %v2881 = vadd.f32 %v2842, %v2869
      %v2882 = vadd.f32 %v2843, %v2869
      %v2883 = vadd.f32 %v2844, %v2869
      %v2884 = vadd.f32 %v2845, %v2869
      %v2885 = vadd.f32 %v2846, %v2869
      %v2886 = vadd.f32 %v2847, %v2869
      %v2887 = vadd.f32 %v2848, %v2869
      %v2888 = vadd.f32 %v2849, %v2869
      %v2889 = vadd.f32 %v2850, %v2869
      %v2890 = vadd.f32 %v2851, %v2869
      %v2891 = vadd.f32 %v2852, %v2869
      %v2892 = vadd.f32 %v2853, %v2869
      %v2893 = vadd.f32 %v2854, %v2869
      %v2894 = vadd.f32 %v2855, %v2869
      %v2895 = vadd.f32 %v2856, %v2869
      %v2896 = vadd.f32 %v2857, %v2869
      %v2897 = vadd.f32 %v2858, %v2869
      %v2898 = vadd.f32 %v2859, %v2869
      %v2899 = vadd.f32 %v2860, %v2869
      %v2900 = vadd.f32 %v2861, %v2869
      %v2901 = vadd.f32 %v2862, %v2869
      %v2902 = vadd.f32 %v2863, %v2869
      %v2903 = vmax.f32 %v2871, 0.0
      %v2904 = vmax.f32 %v2872, 0.0
      %v2905 = vmax.f32 %v2873, 0.0
      %v2906 = vmax.f32 %v2874, 0.0
      %v2907 = vmax.f32 %v2875, 0.0
      %v2908 = vmax.f32 %v2876, 0.0
      %v2909 = vmax.f32 %v2877, 0.0
      %v2910 = vmax.f32 %v2878, 0.0
      %v2911 = vmax.f32 %v2879, 0.0
      %v2912 = vmax.f32 %v2880, 0.0
      %v2913 = vmax.f32 %v2881, 0.0
      %v2914 = vmax.f32 %v2882, 0.0
      %v2915 = vmax.f32 %v2883, 0.0
      %v2916 = vmax.f32 %v2884, 0.0
      %v2917 = vmax.f32 %v2885, 0.0
      %v2918 = vmax.f32 %v2886, 0.0
      %v2919 = vmax.f32 %v2887, 0.0
      %v2920 = vmax.f32 %v2888, 0.0
      %v2921 = vmax.f32 %v2889, 0.0
      %v2922 = vmax.f32 %v2890, 0.0
      %v2923 = vmax.f32 %v2891, 0.0
      %v2924 = vmax.f32 %v2892, 0.0
      %v2925 = vmax.f32 %v2893, 0.0
      %v2926 = vmax.f32 %v2894, 0.0
      %v2927 = vmax.f32 %v2895, 0.0
      %v2928 = vmax.f32 %v2896, 0.0
      %v2929 = vmax.f32 %v2897, 0.0
      %v2930 = vmax.f32 %v2898, 0.0
      %v2931 = vmax.f32 %v2899, 0.0
      %v2932 = vmax.f32 %v2900, 0.0
      %v2933 = vmax.f32 %v2901, 0.0
      %v2934 = vmax.f32 %v2902, 0.0
      %vm2935 = vcmask 523264
      %v2936 = vsel %vm2935, %v2903, 0.0
      %v2937 = vsel %vm2935, %v2904, 0.0
      %v2938 = vadd.f32 %v2936, %v2937
      %v2939 = vsel %vm2935, %v2905, 0.0
      %v2940 = vadd.f32 %v2938, %v2939
      %v2941 = vsel %vm2935, %v2906, 0.0
      %v2942 = vadd.f32 %v2940, %v2941
      %v2943 = vsel %vm2935, %v2907, 0.0
      %v2944 = vadd.f32 %v2942, %v2943
      %v2945 = vsel %vm2935, %v2908, 0.0
      %v2946 = vadd.f32 %v2944, %v2945
      %v2947 = vsel %vm2935, %v2909, 0.0
      %v2948 = vadd.f32 %v2946, %v2947
      %v2949 = vsel %vm2935, %v2910, 0.0
      %v2950 = vadd.f32 %v2948, %v2949
      %v2951 = vsel %vm2935, %v2911, 0.0
      %v2952 = vadd.f32 %v2950, %v2951
      %v2953 = vsel %vm2935, %v2912, 0.0
      %v2954 = vadd.f32 %v2952, %v2953
      %v2955 = vsel %vm2935, %v2913, 0.0
      %v2956 = vadd.f32 %v2954, %v2955
      %v2957 = vsel %vm2935, %v2914, 0.0
      %v2958 = vadd.f32 %v2956, %v2957
      %v2959 = vsel %vm2935, %v2915, 0.0
      %v2960 = vadd.f32 %v2958, %v2959
      %v2961 = vsel %vm2935, %v2916, 0.0
      %v2962 = vadd.f32 %v2960, %v2961
      %v2963 = vsel %vm2935, %v2917, 0.0
      %v2964 = vadd.f32 %v2962, %v2963
      %v2965 = vsel %vm2935, %v2918, 0.0
      %v2966 = vadd.f32 %v2964, %v2965
      %v2967 = vsel %vm2935, %v2919, 0.0
      %v2968 = vadd.f32 %v2966, %v2967
      %v2969 = vsel %vm2935, %v2920, 0.0
      %v2970 = vadd.f32 %v2968, %v2969
      %v2971 = vsel %vm2935, %v2921, 0.0
      %v2972 = vadd.f32 %v2970, %v2971
      %v2973 = vsel %vm2935, %v2922, 0.0
      %v2974 = vadd.f32 %v2972, %v2973
      %v2975 = vsel %vm2935, %v2923, 0.0
      %v2976 = vadd.f32 %v2974, %v2975
      %v2977 = vsel %vm2935, %v2924, 0.0
      %v2978 = vadd.f32 %v2976, %v2977
      %v2979 = vsel %vm2935, %v2925, 0.0
      %v2980 = vadd.f32 %v2978, %v2979
      %v2981 = vsel %vm2935, %v2926, 0.0
      %v2982 = vadd.f32 %v2980, %v2981
      %v2983 = vsel %vm2935, %v2927, 0.0
      %v2984 = vadd.f32 %v2982, %v2983
      %v2985 = vsel %vm2935, %v2928, 0.0
      %v2986 = vadd.f32 %v2984, %v2985
      %v2987 = vsel %vm2935, %v2929, 0.0
      %v2988 = vadd.f32 %v2986, %v2987
      %v2989 = vsel %vm2935, %v2930, 0.0
      %v2990 = vadd.f32 %v2988, %v2989
      %v2991 = vsel %vm2935, %v2931, 0.0
      %v2992 = vadd.f32 %v2990, %v2991
      %v2993 = vsel %vm2935, %v2932, 0.0
      %v2994 = vadd.f32 %v2992, %v2993
      %v2995 = vsel %vm2935, %v2933, 0.0
      %v2996 = vadd.f32 %v2994, %v2995
      %v2997 = vsel %vm2935, %v2934, 0.0
      %v2998 = vadd.f32 %v2996, %v2997
      %v2999 = vrot.slane %v2998, 4
      %v3000 = vadd.f32 %v2998, %v2999
      %v3001 = vrot.slane %v3000, 2
      %v3002 = vadd.f32 %v3000, %v3001
      %v3003 = vrot.slane %v3002, 1
      %v3004 = vadd.f32 %v3002, %v3003
      %v3005 = vrcp.pop 256.0
      %v3006 = vmul.f32 %v3004, %v3005
      %v3007 = vpack.c.bf16 %v3006, %v3006
      %v3008 = vld [vmem:[%s3] sm:$0xf]
      %v3009 = vld [vmem:[%s3 + $0x4] sm:$0xf]
      %v3010 = vld [vmem:[%s3 + $0x8] sm:$0xf]
      %v3011 = vld [vmem:[%s3 + $0xc] sm:$0xf]
      %v3012 = vld [vmem:[%s3 + $0x10] sm:$0xf]
      %v3013 = vld [vmem:[%s3 + $0x14] sm:$0xf]
      %v3014 = vld [vmem:[%s3 + $0x18] sm:$0xf]
      %v3015 = vld [vmem:[%s3 + $0x1c] sm:$0xf]
      %v3016 = vld [vmem:[%s4] sm:$0x1]
      %v3025 = vunpack.c.l.b16 %v3008
      %v3026 = vunpack.c.l.b16 %v3009
      %v3027 = vunpack.c.l.b16 %v3010
      %v3028 = vunpack.c.l.b16 %v3011
      %v3029 = vunpack.c.l.b16 %v3012
      %v3030 = vunpack.c.l.b16 %v3013
      %v3031 = vunpack.c.l.b16 %v3014
      %v3032 = vunpack.c.l.b16 %v3015
      %v3033 = vpack.c.b16 %v3026, %v3025
      %v3034 = vpack.c.b16 %v3028, %v3027
      %v3035 = vpack.c.b16 %v3030, %v3029
      %v3036 = vpack.c.b16 %v3032, %v3031
      %v3042 = vsel %vm2935, %v3007, 0
      %3044 = vmatprep.subr.bf16.mxu0 0
      %3045 = vmatpush1.bf16.msra.mxu0 0
      %3046 = vmatprep.subr.bf16.mxu0 0
      %3047 = vmatpush1.bf16.msra.mxu0 0
      %3048 = vmatprep.subr.bf16.mxu0 0
      %3049 = vmatpush1.bf16.msra.mxu0 0
      %3050 = vmatprep.subr.bf16.mxu0 0
      %3051 = vmatpush1.bf16.msra.mxu0 0
      %3052 = vmatprep.subr.bf16.mxu0 0
      %3053 = vmatpush1.bf16.msra.mxu0 %v3036
      %3054 = vmatprep.subr.bf16.mxu0 0
      %3055 = vmatpush1.bf16.msra.mxu0 %v3035
      %3056 = vmatprep.subr.bf16.mxu0 0
      %3057 = vmatpush1.bf16.msra.mxu0 %v3034
      %3058 = vmatprep.subr.bf16.mxu0 0
      %3059 = vmatpush1.bf16.msra.mxu0 %v3033
      %3060 = vmatprep.subr.bf16.mxu0 0
      %3061 = vmatpush2.bf16.msra.mxu0 0
      %3062 = vmatprep.subr.bf16.mxu0 0
      %3063 = vmatpush2.bf16.msra.mxu0 0
      %3064 = vmatprep.subr.bf16.mxu0 0
      %3065 = vmatpush2.bf16.msra.mxu0 0
      %3066 = vmatprep.subr.bf16.mxu0 0
      %3067 = vmatpush2.bf16.msra.mxu0 0
      %3068 = vmatprep.subr.bf16.mxu0 0
      %3069 = vmatpush2.bf16.msra.mxu0 0
      %3070 = vmatprep.subr.bf16.mxu0 0
      %3071 = vmatpush2.bf16.msra.mxu0 0
      %3072 = vmatprep.subr.bf16.mxu0 0
      %3073 = vmatpush2.bf16.msra.mxu0 0
      %3074 = vmatprep.subr.bf16.mxu0 0
      %3075 = vmatpush2.bf16.msra.mxu0 0
      %3076 = vmatprep.mubr.bf16.mxu0 0
      %3077 = vmatmul.mubr.bf16.gmra.mxu0 %v3042
      %v3078 = vpop.f32.mrf.mxu0
      %v3079 = vadd.f32 %v3016, %v3078
      %v3080 = vpop.f32.mrf.mxu0
      %v3081 = vpop.f32.mrf.mxu0
      %v3082 = vpop.f32.mrf.mxu0
      %3083 = vdwg.mxu0
      %v3084 = vmax.f32 %v3079, 0.0
      %v3085 = vpack.c.bf16 %v3084, %v3084
      %v3086 = vld [vmem:[%s5] sm:$0xf]
      %v3087 = vld [vmem:[%s5 + $0x4] sm:$0xf]
      %v3088 = vld [vmem:[%s5 + $0x8] sm:$0xf]
      %v3089 = vld [vmem:[%s5 + $0xc] sm:$0xf]
      %v3090 = vld [vmem:[%s5 + $0x10] sm:$0xf]
      %v3091 = vld [vmem:[%s5 + $0x14] sm:$0xf]
      %v3092 = vld [vmem:[%s5 + $0x18] sm:$0xf]
      %v3093 = vld [vmem:[%s5 + $0x1c] sm:$0xf]
      %v3094 = vld [vmem:[%s5 + $0x20] sm:$0xf]
      %v3095 = vld [vmem:[%s5 + $0x24] sm:$0xf]
      %v3096 = vld [vmem:[%s5 + $0x28] sm:$0xf]
      %v3097 = vld [vmem:[%s5 + $0x2c] sm:$0xf]
      %v3098 = vld [vmem:[%s5 + $0x30] sm:$0xf]
      %v3099 = vld [vmem:[%s5 + $0x34] sm:$0xf]
      %v3100 = vld [vmem:[%s5 + $0x38] sm:$0xf]
      %v3101 = vld [vmem:[%s5 + $0x3c] sm:$0xf]
      %v3102 = vld [vmem:[%s6] sm:$0x1]
      %v3119 = vunpack.c.l.b16 %v3086
      %v3120 = vunpack.c.l.b16 %v3087
      %v3121 = vunpack.c.l.b16 %v3088
      %v3122 = vunpack.c.l.b16 %v3089
      %v3123 = vunpack.c.l.b16 %v3090
      %v3124 = vunpack.c.l.b16 %v3091
      %v3125 = vunpack.c.l.b16 %v3092
      %v3126 = vunpack.c.l.b16 %v3093
      %v3127 = vunpack.c.l.b16 %v3094
      %v3128 = vunpack.c.l.b16 %v3095
      %v3129 = vunpack.c.l.b16 %v3096
      %v3130 = vunpack.c.l.b16 %v3097
      %v3131 = vunpack.c.l.b16 %v3098
      %v3132 = vunpack.c.l.b16 %v3099
      %v3133 = vunpack.c.l.b16 %v3100
      %v3134 = vunpack.c.l.b16 %v3101
      %v3135 = vpack.c.b16 %v3120, %v3119
      %v3136 = vpack.c.b16 %v3122, %v3121
      %v3137 = vpack.c.b16 %v3124, %v3123
      %v3138 = vpack.c.b16 %v3126, %v3125
      %v3139 = vpack.c.b16 %v3128, %v3127
      %v3140 = vpack.c.b16 %v3130, %v3129
      %v3141 = vpack.c.b16 %v3132, %v3131
      %v3142 = vpack.c.b16 %v3134, %v3133
      %3151 = vmatprep.subr.bf16.mxu0 0
      %3152 = vmatpush1.bf16.msra.mxu0 %v3142
      %3153 = vmatprep.subr.bf16.mxu0 0
      %3154 = vmatpush1.bf16.msra.mxu0 %v3141
      %3155 = vmatprep.subr.bf16.mxu0 0
      %3156 = vmatpush1.bf16.msra.mxu0 %v3140
      %3157 = vmatprep.subr.bf16.mxu0 0
      %3158 = vmatpush1.bf16.msra.mxu0 %v3139
      %3159 = vmatprep.subr.bf16.mxu0 0
      %3160 = vmatpush1.bf16.msra.mxu0 %v3138
      %3161 = vmatprep.subr.bf16.mxu0 0
      %3162 = vmatpush1.bf16.msra.mxu0 %v3137
      %3163 = vmatprep.subr.bf16.mxu0 0
      %3164 = vmatpush1.bf16.msra.mxu0 %v3136
      %3165 = vmatprep.subr.bf16.mxu0 0
      %3166 = vmatpush1.bf16.msra.mxu0 %v3135
      %3167 = vmatprep.subr.bf16.mxu0 0
      %3168 = vmatpush2.bf16.msra.mxu0 0
      %3169 = vmatprep.subr.bf16.mxu0 0
      %3170 = vmatpush2.bf16.msra.mxu0 0
      %3171 = vmatprep.subr.bf16.mxu0 0
      %3172 = vmatpush2.bf16.msra.mxu0 0
      %3173 = vmatprep.subr.bf16.mxu0 0
      %3174 = vmatpush2.bf16.msra.mxu0 0
      %3175 = vmatprep.subr.bf16.mxu0 0
      %3176 = vmatpush2.bf16.msra.mxu0 0
      %3177 = vmatprep.subr.bf16.mxu0 0
      %3178 = vmatpush2.bf16.msra.mxu0 0
      %3179 = vmatprep.subr.bf16.mxu0 0
      %3180 = vmatpush2.bf16.msra.mxu0 0
      %3181 = vmatprep.subr.bf16.mxu0 0
      %3182 = vmatpush2.bf16.msra.mxu0 0
      %3183 = vmatprep.mubr.bf16.mxu0 0
      %3184 = vmatmul.mubr.bf16.gmra.mxu0 %v3085
      %v3185 = vpop.f32.mrf.mxu0
      %v3186 = vadd.f32 %v3102, %v3185
      %v3187 = vpop.f32.mrf.mxu0
      %v3188 = vpop.f32.mrf.mxu0
      %v3189 = vpop.f32.mrf.mxu0
      %3190 = vdwg.mxu0
      %v3191 = vmul.f32 %v3186, %v3186
      %v3192 = vsel %vm424, %v3191, 0.0
      %3193 = vadd.xlane.f32.xlu0 %v3192
      %v3194 = vpop.xlane.xlu0 %3193
      %v3195 = vadd.f32 %v3194, 1e-12
      %v3196 = vrsqrt.pop %v3195
      %v3197 = vmul.f32 %v3186, %v3196
      %3198 = vst [vmem:[%s274] sm:$0x1] %v3197
      %p3199 = scmp.lt.s32.totalorder %s18, 1
      %s3200 = scalar_select %p3199, %s18, 1
      %s3201 = scalar_lea.vmem %s7, %s3200
      // Predicated region
      $region49: #{attack_model_forward.3} parent=47 // pred_check
        %p3202 = pneg %p188
      $region50: #{attack_model_forward.3} parent=47 // pred_check_branch
        %3204 = sbr.rel (%p3202) target = $region52
      $region51: #{attack_model_forward.3} parent=47 // pred_region
        _
      $region52: #{attack_model_forward.3} parent=47 // pred_fallthru
        _
    $region48: #{attack_model_forward.3} parent=5 // pred_fallthru
      _
    %p3205 = scmp.le.s32.totalorder 2, %s13
    // Predicated region
    $region53: #{attack_model_forward.3} parent=5 // pred_check
      %p3206 = pneg %p3205
    $region54: #{attack_model_forward.3} parent=5 // pred_check_branch
      %3208 = sbr.rel (%p3206) target = $region56
    $region55: #{attack_model_forward.3} parent=5 // pred_region
      %s3209 = ssub.s32 %s13, 2
      // Predicated region
      $region57: #{attack_model_forward.3} parent=55 // pred_check
        %p3210 = pneg %p194
      $region58: #{attack_model_forward.3} parent=55 // pred_check_branch
        %3212 = sbr.rel (%p3210) target = $region60
      $region59: #{attack_model_forward.3} parent=55 // pred_region
        %p3213 = scmp.lt.s32.totalorder %s19, 1
        %s3214 = scalar_select %p3213, %s19, 1
        %s3215 = scalar_lea.vmem %s7, %s3214
      $region60: #{attack_model_forward.3} parent=55 // pred_fallthru
        _
    $region56: #{attack_model_forward.3} parent=5 // pred_fallthru
      _
  $region6: #{attack_model_forward.3} parent=0 // loop_footer
    %s17 = sadd.s32 1, %s13
  $region7: #{attack_model_forward.3} parent=0 // loop_footer_branch
    %12 = sbr.rel target = $region3
  $region8: #{attack_model_forward.3} parent=0 // loop_exit
    _

</llo_original>
